<compile_context>
chip_gen: v6e
topology: v6e:2x2x1
jax: 0.10.0
libtpu: 0.0.40
codegen_flags: <defaults>
</compile_context>

<pallas_src>
import functools
import math

import jax
import jax.numpy as jnp
from jax.experimental import pallas as pl
from jax.experimental.pallas import tpu as pltpu

_MIN_NORM = 1e-15          # PoincareBall.min_norm
_EPS_F32 = 4e-3            # PoincareBall.eps[torch.float32]


# --------------------------------------------------------------------------------------
# Pure-JAX reference (faithful port of the PoincareBall manifold + HNNLayer.forward).
# --------------------------------------------------------------------------------------
def _artanh(x):
    x = jnp.clip(x, -1.0 + 1e-15, 1.0 - 1e-15)
    return 0.5 * jnp.log((1.0 + x) / (1.0 - x))


def _norm_last(x):
    return jnp.maximum(jnp.sqrt(jnp.sum(x * x, axis=-1, keepdims=True)), _MIN_NORM)


def _proj(x, c):
    norm = _norm_last(x)
    maxnorm = (1.0 - _EPS_F32) / math.sqrt(c)
    return jnp.where(norm > maxnorm, x / norm * maxnorm, x)


def _expmap0(u, c):
    sqrt_c = math.sqrt(c)
    u_norm = _norm_last(u)
    return jnp.tanh(sqrt_c * u_norm) * u / (sqrt_c * u_norm)


def _logmap0(p, c):
    sqrt_c = math.sqrt(c)
    p_norm = _norm_last(p)
    return (1.0 / sqrt_c) * _artanh(sqrt_c * p_norm) / p_norm * p


def _mobius_add(x, y, c):
    x2 = jnp.sum(x * x, axis=-1, keepdims=True)
    y2 = jnp.sum(y * y, axis=-1, keepdims=True)
    xy = jnp.sum(x * y, axis=-1, keepdims=True)
    num = (1.0 + 2.0 * c * xy + c * y2) * x + (1.0 - c * x2) * y
    denom = 1.0 + 2.0 * c * xy + c * c * x2 * y2
    return num / jnp.maximum(denom, _MIN_NORM)


def _mobius_matvec(m, x, c):
    sqrt_c = math.sqrt(c)
    x_norm = _norm_last(x)
    mx = jnp.dot(x, m.T, precision=jax.lax.Precision.HIGHEST)
    mx_norm = _norm_last(mx)
    res_c = jnp.tanh(mx_norm / x_norm * _artanh(sqrt_c * x_norm)) * mx / (mx_norm * sqrt_c)
    cond = jnp.all(mx == 0.0, axis=-1, keepdims=True)
    return jnp.where(cond, 0.0, res_c)


def hnn_layer_ref(x, weight, bias, *, c, act=jax.nn.relu, use_bias=True):
    """Pure-JAX HNNLayer.forward (eval mode)."""
    res = _proj(_mobius_matvec(weight, x, c), c)
    if use_bias:
        hyp_bias = _proj(_expmap0(bias.reshape(1, -1), c), c)   # proj_tan0 == identity
        res = _proj(_mobius_add(res, hyp_bias, c), c)
    xt = act(_logmap0(res, c))                                  # proj_tan0 == identity
    return _proj(_expmap0(xt, c), c)


# --------------------------------------------------------------------------------------
# Fused Pallas kernel: one row tile of x -> one row tile of the output.
# --------------------------------------------------------------------------------------
def _hnn_layer_kernel(x_ref, wt_ref, hb_ref, out_ref, *, c, use_bias, act):
    # Scalar manifold constants folded at trace time (no per-element divides by t-like scalars).
    sqrt_c = math.sqrt(c)
    inv_sqrt_c = 1.0 / sqrt_c
    max_norm = (1.0 - _EPS_F32) * inv_sqrt_c

    def norm(v):
        return jnp.maximum(jnp.sqrt(jnp.sum(v * v, axis=-1, keepdims=True)), _MIN_NORM)

    def artanh(v):
        v = jnp.clip(v, -1.0 + 1e-15, 1.0 - 1e-15)
        return 0.5 * jnp.log((1.0 + v) / (1.0 - v))

    def proj(v):
        n = norm(v)
        return jnp.where(n > max_norm, v * (max_norm / n), v)

    x = x_ref[...].astype(jnp.float32)            # [bm, d_in]
    wt = wt_ref[...].astype(jnp.float32)          # [d_in, d_out] (pre-transposed W)

    # ---- HypLinear: mobius_matvec(W, x, c) then proj ----
    x_norm = norm(x)
    mx = jnp.dot(x, wt, preferred_element_type=jnp.float32)     # MXU, [bm, d_out]
    mx_norm = norm(mx)
    res = jnp.tanh(mx_norm / x_norm * artanh(sqrt_c * x_norm)) * mx / (mx_norm * sqrt_c)
    all_zero = jnp.sum(jnp.abs(mx), axis=-1, keepdims=True) == 0.0
    res = jnp.where(all_zero, 0.0, res)
    res = proj(res)

    # ---- bias: mobius_add with precomputed hyperbolic bias, then proj ----
    if use_bias:
        y = hb_ref[...].astype(jnp.float32)                     # [1, d_out]
        x2 = jnp.sum(res * res, axis=-1, keepdims=True)
        y2 = jnp.sum(y * y, axis=-1, keepdims=True)
        xy = jnp.sum(res * y, axis=-1, keepdims=True)
        num = (1.0 + 2.0 * c * xy + c * y2) * res + (1.0 - c * x2) * y
        denom = jnp.maximum(1.0 + 2.0 * c * xy + c * c * x2 * y2, _MIN_NORM)
        res = proj(num / denom)

    # ---- HypAct (c_in == c_out == c): act(logmap0) -> expmap0 -> proj ----
    p_norm = norm(res)
    xt = (inv_sqrt_c * artanh(sqrt_c * p_norm) / p_norm) * res
    xt = act(xt)                                                # proj_tan0 == identity
    u_norm = norm(xt)
    out = jnp.tanh(sqrt_c * u_norm) * xt / (sqrt_c * u_norm)
    out_ref[...] = proj(out).astype(out_ref.dtype)


def _pick_block_rows(rows, feat_cols):
    """Row tile ~2 MiB of f32 (comfortably inside v7x's 32 MiB scoped VMEM with
    double-buffered in+out), multiple of 8 sublanes, and at least 2 grid steps."""
    if rows <= 16:
        return rows
    target = max(8, (2 << 20) // max(1, feat_cols * 4))
    half = (rows + 1) // 2
    br = min(target, half, 1024)
    return max(8, ((br + 7) // 8) * 8)


def hnn_layer_forward(x, weight, bias, *, c=1.0, act=jax.nn.relu, use_bias=True,
                      block_rows=None):
    """Pallas TPU forward of HNNLayer (HypLinear + HypAct, PoincareBall manifold)."""
    x = jnp.asarray(x, jnp.float32)
    weight = jnp.asarray(weight, jnp.float32)
    n, d_in = x.shape
    d_out = weight.shape[0]

    # Wrapper-side layout plumbing: lane-dense RHS for x @ W^T on the MXU.
    w_t = weight.T                                              # [d_in, d_out]
    # Hyperbolic bias is input independent: compute it once here, not per grid step.
    if use_bias:
        hyp_bias = _proj(_expmap0(jnp.asarray(bias, jnp.float32).reshape(1, -1), c), c)
    else:
        hyp_bias = jnp.zeros((1, d_out), jnp.float32)

    if block_rows is None:
        block_rows = _pick_block_rows(n, max(d_in, d_out))
    n_blocks = pl.cdiv(n, block_rows)
    padded = n_blocks * block_rows
    if padded != n:
        # Zero rows are numerically safe through every manifold op (norms are clamped).
        x = jnp.pad(x, ((0, padded - n), (0, 0)))

    kernel = functools.partial(_hnn_layer_kernel, c=float(c),
                               use_bias=bool(use_bias), act=act)

    out = pl.pallas_call(
        kernel,
        out_shape=jax.ShapeDtypeStruct((padded, d_out), jnp.float32),
        grid_spec=pltpu.PrefetchScalarGridSpec(
            num_scalar_prefetch=0,
            grid=(n_blocks,),
            in_specs=[
                pl.BlockSpec((block_rows, d_in), lambda i: (i, 0)),   # x row tile
                pl.BlockSpec((d_in, d_out), lambda i: (0, 0)),        # W^T, resident
                pl.BlockSpec((1, d_out), lambda i: (0, 0)),           # hyperbolic bias
            ],
            out_specs=pl.BlockSpec((block_rows, d_out), lambda i: (i, 0)),
        ),
        compiler_params=pltpu.CompilerParams(
            dimension_semantics=("parallel",)),
    )(x, w_t, hyp_bias)
    return out[:n]


if __name__ == "__main__":
    key = jax.random.PRNGKey(0)
    k_x, k_w, k_b = jax.random.split(key, 3)

    # Small shapes consistent with the module: N nodes with in/out feature dim 32.
    N, d_in, d_out = 256, 32, 32
    c = 1.0
    use_bias = True

    # Euclidean features -> points on the Poincare ball (how HNN layers are fed).
    x_eucl = 0.1 * jax.random.normal(k_x, (N, d_in), dtype=jnp.float32)
    x_hyp = _proj(_expmap0(x_eucl, c), c)                       # proj_tan0 == identity

    # HypLinear parameters: xavier_uniform(gain=sqrt(2)) weight; small random bias so the
    # mobius-add bias path is actually exercised (the PyTorch zero-init would make it a no-op).
    bound = math.sqrt(2.0) * math.sqrt(6.0 / (d_in + d_out))
    weight = jax.random.uniform(k_w, (d_out, d_in), jnp.float32, -bound, bound)
    bias = 0.1 * jax.random.uniform(k_b, (d_out,), jnp.float32, -1.0, 1.0)

    # TODO(synk): F.dropout on the weight is training-mode only; eval-mode forward == identity.
    out = hnn_layer_forward(x_hyp, weight, bias, c=c, act=jax.nn.relu, use_bias=use_bias)
    out = jax.block_until_ready(out)

    ref = hnn_layer_ref(x_hyp, weight, bias, c=c, act=jax.nn.relu, use_bias=use_bias)
    assert out.shape == (N, d_out)
    assert bool(jnp.all(jnp.isfinite(out)))
    assert jnp.allclose(out, ref, atol=5e-5, rtol=5e-5), float(jnp.max(jnp.abs(out - ref)))

    print("KERNEL_OK")
</pallas_src>

<mosaic_0001>
module attributes {stable_mosaic.version = 11 : i64} {
  func.func @_hnn_layer_kernel(%arg0: i32, %arg1: memref<128x32xf32, #tpu.memory_space<vmem>>, %arg2: memref<32x32xf32, #tpu.memory_space<vmem>>, %arg3: memref<1x32xf32, #tpu.memory_space<vmem>>, %arg4: memref<128x32xf32, #tpu.memory_space<vmem>>) attributes {dimension_semantics = [#tpu.dimension_semantics<parallel>], iteration_bounds = array<i64: 2>, scalar_prefetch = 0 : i64, scratch_operands = 0 : i64, tpu.core_type = #tpu.core_type<tc>, window_params = [{transform_indices = @transform_0, window_bounds = array<i64: 128, 32>}, {pipeline_mode = #tpu.pipeline_mode<synchronous>, transform_indices = @transform_1, window_bounds = array<i64: 32, 32>}, {pipeline_mode = #tpu.pipeline_mode<synchronous>, transform_indices = @transform_2, window_bounds = array<i64: 1, 32>}, {transform_indices = @transform_3, window_bounds = array<i64: 128, 32>}]} {
    %c0 = arith.constant 0 : index
    %c0_0 = arith.constant 0 : index
    %0 = vector.load %arg1[%c0, %c0_0] : memref<128x32xf32, #tpu.memory_space<vmem>>, vector<128x32xf32>
    %c0_1 = arith.constant 0 : index
    %c0_2 = arith.constant 0 : index
    %1 = vector.load %arg2[%c0_1, %c0_2] : memref<32x32xf32, #tpu.memory_space<vmem>>, vector<32x32xf32>
    %2 = arith.mulf %0, %0 : vector<128x32xf32>
    %cst = arith.constant dense<0.000000e+00> : vector<128xf32>
    %3 = vector.multi_reduction <add>, %2, %cst [1] : vector<128x32xf32> to vector<128xf32>
    %4 = vector.shape_cast %3 : vector<128xf32> to vector<128x1xf32>
    %5 = math.sqrt %4 : vector<128x1xf32>
    %cst_3 = arith.constant 1.000000e-15 : f32
    %6 = vector.broadcast %cst_3 : f32 to vector<128x1xf32>
    %7 = arith.maximumf %5, %6 : vector<128x1xf32>
    %cst_4 = arith.constant dense<0.000000e+00> : vector<128x32xf32>
    %8 = tpu.matmul %0, %1, %cst_4 {dimension_numbers = #tpu.dot_dimension_numbers<[1], [0], [0], [1], [0, 0, 1, 1], [], []>} : vector<128x32xf32>, vector<32x32xf32>, vector<128x32xf32> -> vector<128x32xf32>
    %9 = arith.mulf %8, %8 : vector<128x32xf32>
    %cst_5 = arith.constant dense<0.000000e+00> : vector<128xf32>
    %10 = vector.multi_reduction <add>, %9, %cst_5 [1] : vector<128x32xf32> to vector<128xf32>
    %11 = vector.shape_cast %10 : vector<128xf32> to vector<128x1xf32>
    %12 = math.sqrt %11 : vector<128x1xf32>
    %cst_6 = arith.constant 1.000000e-15 : f32
    %13 = vector.broadcast %cst_6 : f32 to vector<128x1xf32>
    %14 = arith.maximumf %12, %13 : vector<128x1xf32>
    %15 = arith.divf %14, %7 : vector<128x1xf32>
    %cst_7 = arith.constant 1.000000e+00 : f32
    %16 = vector.broadcast %cst_7 : f32 to vector<128x1xf32>
    %17 = arith.mulf %16, %7 : vector<128x1xf32>
    %cst_8 = arith.constant -1.000000e+00 : f32
    %cst_9 = arith.constant 1.000000e+00 : f32
    %18 = vector.broadcast %cst_8 : f32 to vector<128x1xf32>
    %19 = arith.maximumf %18, %17 : vector<128x1xf32>
    %20 = vector.broadcast %cst_9 : f32 to vector<128x1xf32>
    %21 = arith.minimumf %20, %19 : vector<128x1xf32>
    %cst_10 = arith.constant 1.000000e+00 : f32
    %22 = vector.broadcast %cst_10 : f32 to vector<128x1xf32>
    %23 = arith.addf %22, %21 : vector<128x1xf32>
    %cst_11 = arith.constant 1.000000e+00 : f32
    %24 = vector.broadcast %cst_11 : f32 to vector<128x1xf32>
    %25 = arith.subf %24, %21 : vector<128x1xf32>
    %26 = arith.divf %23, %25 : vector<128x1xf32>
    %27 = math.log %26 : vector<128x1xf32>
    %cst_12 = arith.constant 5.000000e-01 : f32
    %28 = vector.broadcast %cst_12 : f32 to vector<128x1xf32>
    %29 = arith.mulf %28, %27 : vector<128x1xf32>
    %30 = arith.mulf %15, %29 : vector<128x1xf32>
    %31 = math.tanh %30 : vector<128x1xf32>
    %32 = vector.broadcast %31 : vector<128x1xf32> to vector<128x32xf32>
    %33 = arith.mulf %32, %8 : vector<128x32xf32>
    %cst_13 = arith.constant 1.000000e+00 : f32
    %34 = vector.broadcast %cst_13 : f32 to vector<128x1xf32>
    %35 = arith.mulf %14, %34 : vector<128x1xf32>
    %36 = vector.broadcast %35 : vector<128x1xf32> to vector<128x32xf32>
    %37 = arith.divf %33, %36 : vector<128x32xf32>
    %38 = math.absf %8 : vector<128x32xf32>
    %cst_14 = arith.constant dense<0.000000e+00> : vector<128xf32>
    %39 = vector.multi_reduction <add>, %38, %cst_14 [1] : vector<128x32xf32> to vector<128xf32>
    %40 = vector.shape_cast %39 : vector<128xf32> to vector<128x1xf32>
    %cst_15 = arith.constant 0.000000e+00 : f32
    %41 = vector.broadcast %cst_15 : f32 to vector<128x1xf32>
    %42 = arith.cmpf oeq, %40, %41 : vector<128x1xf32>
    %cst_16 = arith.constant 0.000000e+00 : f32
    %43 = vector.shape_cast %42 : vector<128x1xi1> to vector<128x1xi1>
    %44 = vector.broadcast %43 : vector<128x1xi1> to vector<128x32xi1>
    %45 = vector.broadcast %cst_16 : f32 to vector<128x32xf32>
    %46 = arith.select %44, %45, %37 : vector<128x32xi1>, vector<128x32xf32>
    %47 = arith.mulf %46, %46 : vector<128x32xf32>
    %cst_17 = arith.constant dense<0.000000e+00> : vector<128xf32>
    %48 = vector.multi_reduction <add>, %47, %cst_17 [1] : vector<128x32xf32> to vector<128xf32>
    %49 = vector.shape_cast %48 : vector<128xf32> to vector<128x1xf32>
    %50 = math.sqrt %49 : vector<128x1xf32>
    %cst_18 = arith.constant 1.000000e-15 : f32
    %51 = vector.broadcast %cst_18 : f32 to vector<128x1xf32>
    %52 = arith.maximumf %50, %51 : vector<128x1xf32>
    %cst_19 = arith.constant 0.995999991 : f32
    %53 = vector.broadcast %cst_19 : f32 to vector<128x1xf32>
    %54 = arith.cmpf ogt, %52, %53 : vector<128x1xf32>
    %cst_20 = arith.constant 0.995999991 : f32
    %55 = vector.broadcast %cst_20 : f32 to vector<128x1xf32>
    %56 = arith.divf %55, %52 : vector<128x1xf32>
    %57 = vector.broadcast %56 : vector<128x1xf32> to vector<128x32xf32>
    %58 = arith.mulf %46, %57 : vector<128x32xf32>
    %59 = vector.shape_cast %54 : vector<128x1xi1> to vector<128x1xi1>
    %60 = vector.broadcast %59 : vector<128x1xi1> to vector<128x32xi1>
    %61 = arith.select %60, %58, %46 : vector<128x32xi1>, vector<128x32xf32>
    %c0_21 = arith.constant 0 : index
    %c0_22 = arith.constant 0 : index
    %62 = vector.load %arg3[%c0_21, %c0_22] : memref<1x32xf32, #tpu.memory_space<vmem>>, vector<1x32xf32>
    %63 = arith.mulf %61, %61 : vector<128x32xf32>
    %cst_23 = arith.constant dense<0.000000e+00> : vector<128xf32>
    %64 = vector.multi_reduction <add>, %63, %cst_23 [1] : vector<128x32xf32> to vector<128xf32>
    %65 = vector.shape_cast %64 : vector<128xf32> to vector<128x1xf32>
    %66 = arith.mulf %62, %62 : vector<1x32xf32>
    %cst_24 = arith.constant dense<0.000000e+00> : vector<1xf32>
    %67 = vector.multi_reduction <add>, %66, %cst_24 [1] : vector<1x32xf32> to vector<1xf32>
    %68 = vector.shape_cast %67 : vector<1xf32> to vector<1x1xf32>
    %69 = vector.broadcast %62 : vector<1x32xf32> to vector<128x32xf32>
    %70 = arith.mulf %61, %69 : vector<128x32xf32>
    %cst_25 = arith.constant dense<0.000000e+00> : vector<128xf32>
    %71 = vector.multi_reduction <add>, %70, %cst_25 [1] : vector<128x32xf32> to vector<128xf32>
    %72 = vector.shape_cast %71 : vector<128xf32> to vector<128x1xf32>
    %cst_26 = arith.constant 2.000000e+00 : f32
    %73 = vector.broadcast %cst_26 : f32 to vector<128x1xf32>
    %74 = arith.mulf %73, %72 : vector<128x1xf32>
    %cst_27 = arith.constant 1.000000e+00 : f32
    %75 = vector.broadcast %cst_27 : f32 to vector<128x1xf32>
    %76 = arith.addf %75, %74 : vector<128x1xf32>
    %cst_28 = arith.constant 1.000000e+00 : f32
    %77 = vector.broadcast %cst_28 : f32 to vector<1x1xf32>
    %78 = arith.mulf %77, %68 : vector<1x1xf32>
    %79 = vector.broadcast %78 : vector<1x1xf32> to vector<128x1xf32>
    %80 = arith.addf %76, %79 : vector<128x1xf32>
    %81 = vector.broadcast %80 : vector<128x1xf32> to vector<128x32xf32>
    %82 = arith.mulf %81, %61 : vector<128x32xf32>
    %cst_29 = arith.constant 1.000000e+00 : f32
    %83 = vector.broadcast %cst_29 : f32 to vector<128x1xf32>
    %84 = arith.mulf %83, %65 : vector<128x1xf32>
    %cst_30 = arith.constant 1.000000e+00 : f32
    %85 = vector.broadcast %cst_30 : f32 to vector<128x1xf32>
    %86 = arith.subf %85, %84 : vector<128x1xf32>
    %87 = vector.broadcast %86 : vector<128x1xf32> to vector<128x32xf32>
    %88 = vector.broadcast %62 : vector<1x32xf32> to vector<128x32xf32>
    %89 = arith.mulf %87, %88 : vector<128x32xf32>
    %90 = arith.addf %82, %89 : vector<128x32xf32>
    %cst_31 = arith.constant 2.000000e+00 : f32
    %91 = vector.broadcast %cst_31 : f32 to vector<128x1xf32>
    %92 = arith.mulf %91, %72 : vector<128x1xf32>
    %cst_32 = arith.constant 1.000000e+00 : f32
    %93 = vector.broadcast %cst_32 : f32 to vector<128x1xf32>
    %94 = arith.addf %93, %92 : vector<128x1xf32>
    %cst_33 = arith.constant 1.000000e+00 : f32
    %95 = vector.broadcast %cst_33 : f32 to vector<128x1xf32>
    %96 = arith.mulf %95, %65 : vector<128x1xf32>
    %97 = vector.broadcast %68 : vector<1x1xf32> to vector<128x1xf32>
    %98 = arith.mulf %96, %97 : vector<128x1xf32>
    %99 = arith.addf %94, %98 : vector<128x1xf32>
    %cst_34 = arith.constant 1.000000e-15 : f32
    %100 = vector.broadcast %cst_34 : f32 to vector<128x1xf32>
    %101 = arith.maximumf %99, %100 : vector<128x1xf32>
    %102 = vector.broadcast %101 : vector<128x1xf32> to vector<128x32xf32>
    %103 = arith.divf %90, %102 : vector<128x32xf32>
    %104 = arith.mulf %103, %103 : vector<128x32xf32>
    %cst_35 = arith.constant dense<0.000000e+00> : vector<128xf32>
    %105 = vector.multi_reduction <add>, %104, %cst_35 [1] : vector<128x32xf32> to vector<128xf32>
    %106 = vector.shape_cast %105 : vector<128xf32> to vector<128x1xf32>
    %107 = math.sqrt %106 : vector<128x1xf32>
    %cst_36 = arith.constant 1.000000e-15 : f32
    %108 = vector.broadcast %cst_36 : f32 to vector<128x1xf32>
    %109 = arith.maximumf %107, %108 : vector<128x1xf32>
    %cst_37 = arith.constant 0.995999991 : f32
    %110 = vector.broadcast %cst_37 : f32 to vector<128x1xf32>
    %111 = arith.cmpf ogt, %109, %110 : vector<128x1xf32>
    %cst_38 = arith.constant 0.995999991 : f32
    %112 = vector.broadcast %cst_38 : f32 to vector<128x1xf32>
    %113 = arith.divf %112, %109 : vector<128x1xf32>
    %114 = vector.broadcast %113 : vector<128x1xf32> to vector<128x32xf32>
    %115 = arith.mulf %103, %114 : vector<128x32xf32>
    %116 = vector.shape_cast %111 : vector<128x1xi1> to vector<128x1xi1>
    %117 = vector.broadcast %116 : vector<128x1xi1> to vector<128x32xi1>
    %118 = arith.select %117, %115, %103 : vector<128x32xi1>, vector<128x32xf32>
    %119 = arith.mulf %118, %118 : vector<128x32xf32>
    %cst_39 = arith.constant dense<0.000000e+00> : vector<128xf32>
    %120 = vector.multi_reduction <add>, %119, %cst_39 [1] : vector<128x32xf32> to vector<128xf32>
    %121 = vector.shape_cast %120 : vector<128xf32> to vector<128x1xf32>
    %122 = math.sqrt %121 : vector<128x1xf32>
    %cst_40 = arith.constant 1.000000e-15 : f32
    %123 = vector.broadcast %cst_40 : f32 to vector<128x1xf32>
    %124 = arith.maximumf %122, %123 : vector<128x1xf32>
    %cst_41 = arith.constant 1.000000e+00 : f32
    %125 = vector.broadcast %cst_41 : f32 to vector<128x1xf32>
    %126 = arith.mulf %125, %124 : vector<128x1xf32>
    %cst_42 = arith.constant -1.000000e+00 : f32
    %cst_43 = arith.constant 1.000000e+00 : f32
    %127 = vector.broadcast %cst_42 : f32 to vector<128x1xf32>
    %128 = arith.maximumf %127, %126 : vector<128x1xf32>
    %129 = vector.broadcast %cst_43 : f32 to vector<128x1xf32>
    %130 = arith.minimumf %129, %128 : vector<128x1xf32>
    %cst_44 = arith.constant 1.000000e+00 : f32
    %131 = vector.broadcast %cst_44 : f32 to vector<128x1xf32>
    %132 = arith.addf %131, %130 : vector<128x1xf32>
    %cst_45 = arith.constant 1.000000e+00 : f32
    %133 = vector.broadcast %cst_45 : f32 to vector<128x1xf32>
    %134 = arith.subf %133, %130 : vector<128x1xf32>
    %135 = arith.divf %132, %134 : vector<128x1xf32>
    %136 = math.log %135 : vector<128x1xf32>
    %cst_46 = arith.constant 5.000000e-01 : f32
    %137 = vector.broadcast %cst_46 : f32 to vector<128x1xf32>
    %138 = arith.mulf %137, %136 : vector<128x1xf32>
    %cst_47 = arith.constant 1.000000e+00 : f32
    %139 = vector.broadcast %cst_47 : f32 to vector<128x1xf32>
    %140 = arith.mulf %139, %138 : vector<128x1xf32>
    %141 = arith.divf %140, %124 : vector<128x1xf32>
    %142 = vector.broadcast %141 : vector<128x1xf32> to vector<128x32xf32>
    %143 = arith.mulf %142, %118 : vector<128x32xf32>
    %cst_48 = arith.constant 0.000000e+00 : f32
    %144 = vector.broadcast %cst_48 : f32 to vector<128x32xf32>
    %145 = arith.maximumf %143, %144 : vector<128x32xf32>
    %146 = arith.mulf %145, %145 : vector<128x32xf32>
    %cst_49 = arith.constant dense<0.000000e+00> : vector<128xf32>
    %147 = vector.multi_reduction <add>, %146, %cst_49 [1] : vector<128x32xf32> to vector<128xf32>
    %148 = vector.shape_cast %147 : vector<128xf32> to vector<128x1xf32>
    %149 = math.sqrt %148 : vector<128x1xf32>
    %cst_50 = arith.constant 1.000000e-15 : f32
    %150 = vector.broadcast %cst_50 : f32 to vector<128x1xf32>
    %151 = arith.maximumf %149, %150 : vector<128x1xf32>
    %cst_51 = arith.constant 1.000000e+00 : f32
    %152 = vector.broadcast %cst_51 : f32 to vector<128x1xf32>
    %153 = arith.mulf %152, %151 : vector<128x1xf32>
    %154 = math.tanh %153 : vector<128x1xf32>
    %155 = vector.broadcast %154 : vector<128x1xf32> to vector<128x32xf32>
    %156 = arith.mulf %155, %145 : vector<128x32xf32>
    %cst_52 = arith.constant 1.000000e+00 : f32
    %157 = vector.broadcast %cst_52 : f32 to vector<128x1xf32>
    %158 = arith.mulf %157, %151 : vector<128x1xf32>
    %159 = vector.broadcast %158 : vector<128x1xf32> to vector<128x32xf32>
    %160 = arith.divf %156, %159 : vector<128x32xf32>
    %161 = arith.mulf %160, %160 : vector<128x32xf32>
    %cst_53 = arith.constant dense<0.000000e+00> : vector<128xf32>
    %162 = vector.multi_reduction <add>, %161, %cst_53 [1] : vector<128x32xf32> to vector<128xf32>
    %163 = vector.shape_cast %162 : vector<128xf32> to vector<128x1xf32>
    %164 = math.sqrt %163 : vector<128x1xf32>
    %cst_54 = arith.constant 1.000000e-15 : f32
    %165 = vector.broadcast %cst_54 : f32 to vector<128x1xf32>
    %166 = arith.maximumf %164, %165 : vector<128x1xf32>
    %cst_55 = arith.constant 0.995999991 : f32
    %167 = vector.broadcast %cst_55 : f32 to vector<128x1xf32>
    %168 = arith.cmpf ogt, %166, %167 : vector<128x1xf32>
    %cst_56 = arith.constant 0.995999991 : f32
    %169 = vector.broadcast %cst_56 : f32 to vector<128x1xf32>
    %170 = arith.divf %169, %166 : vector<128x1xf32>
    %171 = vector.broadcast %170 : vector<128x1xf32> to vector<128x32xf32>
    %172 = arith.mulf %160, %171 : vector<128x32xf32>
    %173 = vector.shape_cast %168 : vector<128x1xi1> to vector<128x1xi1>
    %174 = vector.broadcast %173 : vector<128x1xi1> to vector<128x32xi1>
    %175 = arith.select %174, %172, %160 : vector<128x32xi1>, vector<128x32xf32>
    %c0_57 = arith.constant 0 : index
    %c0_58 = arith.constant 0 : index
    %176 = vector.load %arg4[%c0_57, %c0_58] : memref<128x32xf32, #tpu.memory_space<vmem>>, vector<128x32xf32>
    tpu.vector_store %arg4[%c0_57, %c0_58], %175 {strides = array<i32>} : memref<128x32xf32, #tpu.memory_space<vmem>>, vector<128x32xf32>,
    return
  }
  func.func @transform_0(%arg0: i32) -> (i32, i32) {
    %c0_i32 = arith.constant 0 : i32
    %c0_i32_0 = arith.constant 0 : i32
    return %arg0, %c0_i32 : i32, i32
  }
  func.func @transform_1(%arg0: i32) -> (i32, i32) {
    %c0_i32 = arith.constant 0 : i32
    %c0_i32_0 = arith.constant 0 : i32
    %c0_i32_1 = arith.constant 0 : i32
    return %c0_i32, %c0_i32_0 : i32, i32
  }
  func.func @transform_2(%arg0: i32) -> (i32, i32) {
    %c0_i32 = arith.constant 0 : i32
    %c0_i32_0 = arith.constant 0 : i32
    %c0_i32_1 = arith.constant 0 : i32
    return %c0_i32, %c0_i32_0 : i32, i32
  }
  func.func @transform_3(%arg0: i32) -> (i32, i32) {
    %c0_i32 = arith.constant 0 : i32
    %c0_i32_0 = arith.constant 0 : i32
    return %arg0, %c0_i32 : i32, i32
  }
}

</mosaic_0001>

<llo_original>
// kernel: tpu_custom_call.1
$region0: #{tpu_custom_call.1}
  #allocation0 [shape = 'u32[]', space=smem, size = 0x4, offset = 0x4, fixed_abs, tag = 'smem constant byte address 0x4 - core index']
  #allocation1 [shape = 'u32[144,128]{1,0:T(1,128)}', space=vmem, size = 0x12000, scoped, tag = 'internal scratch']
  %s0 = inlined_call_operand.vmem [shape: f32[256,32], index: 0, kind: input, shape index: {}]
  %s1 = inlined_call_operand.vmem [shape: f32[32,32], index: 1, kind: input, shape index: {}]
  %s2 = inlined_call_operand.vmem [shape: f32[1,32], index: 2, kind: input, shape index: {}]
  %s3 = inlined_call_operand.vmem [shape: f32[256,32], index: 3, kind: output, shape index: {}]
  %s4 = sld [smem:[#allocation0]]
  $region45: #{tpu_custom_call.1} parent=0
    _
  %s6 = ssub.s32 1, %s4
  %s7 = scalar_select 0, %s6, %s4
  loop: start=0, step=1, limit=4
  $region2: #{tpu_custom_call.1} parent=0 // loop_pre_header
    _
  $region3: #{tpu_custom_call.1} parent=0 // loop_header
    %s9 = sphi 0, %s13
    %p10 = scmp.ge.s32.totalorder %s9, 4
    %s19 = sphi 0, %s21
    %s22 = sphi 0, %s19
    %s23 = sphi 0, %s22
    %s39 = sphi 0, %s23
    %s43 = sphi 0, %s43
    %s45 = sphi 0, %s43
    %s46 = sphi 0, %s45
    %s60 = sphi 0, %s46
    %s64 = sphi 0, %s64
    %s66 = sphi 0, %s64
    %s67 = sphi 0, %s66
    %s81 = sphi 0, %s67
    %s87 = sphi 0, %s89
    %s90 = sphi 0, %s87
    %s91 = sphi 0, %s90
    %s107 = sphi 0, %s91
  $region4: #{tpu_custom_call.1} parent=0 // loop_header_branch
    %12 = sbr.rel (%p10) target = $region8
  $region5: #{tpu_custom_call.1} parent=0 // loop_body
    %s14 = ssub.s32 %s9, 1
    %s15 = ssub.s32 %s9, 2
    %s16 = sadd.s32 %s9, 1
    %s17 = ssub.s32 %s9, %s16
    %p18 = scmp.eq.s32.totalorder %s17, 0
    %s20 = sadd.s32 %s19, 1
    %s21 = scalar_select %p18, %s19, %s20
    %p24 = pneg %p18
    %p25 = scmp.eq.s32.totalorder %s9, 1
    %p26 = por %p24, %p25
    %p27 = scmp.ne.s32.totalorder %s19, %s22
    %p28 = scmp.eq.s32.totalorder %s9, 0
    %p29 = por %p27, %p28
    %p30 = scmp.ne.s32.totalorder %s19, %s22
    %p31 = scmp.eq.s32.totalorder %s14, 1
    %p32 = por %p30, %p31
    %p33 = scmp.ne.s32.totalorder %s22, %s23
    %p34 = scmp.eq.s32.totalorder %s14, 0
    %p35 = por %p33, %p34
    %p36 = scmp.ne.s32.totalorder %s22, %s23
    %p37 = scmp.eq.s32.totalorder %s15, 1
    %p38 = por %p36, %p37
    %p40 = scmp.ne.s32.totalorder %s23, %s39
    %p41 = scmp.eq.s32.totalorder %s15, 0
    %p42 = por %p40, %p41
    %s44 = sadd.s32 %s43, 1
    %p47 = scmp.eq.s32.totalorder %s9, 1
    %p48 = scmp.ne.s32.totalorder %s43, %s45
    %p49 = scmp.eq.s32.totalorder %s9, 0
    %p50 = por %p48, %p49
    %p51 = scmp.ne.s32.totalorder %s43, %s45
    %p52 = scmp.eq.s32.totalorder %s14, 1
    %p53 = por %p51, %p52
    %p54 = scmp.ne.s32.totalorder %s45, %s46
    %p55 = scmp.eq.s32.totalorder %s14, 0
    %p56 = por %p54, %p55
    %p57 = scmp.ne.s32.totalorder %s45, %s46
    %p58 = scmp.eq.s32.totalorder %s15, 1
    %p59 = por %p57, %p58
    %p61 = scmp.ne.s32.totalorder %s46, %s60
    %p62 = scmp.eq.s32.totalorder %s15, 0
    %p63 = por %p61, %p62
    %s65 = sadd.s32 %s64, 1
    %p68 = scmp.eq.s32.totalorder %s9, 1
    %p69 = scmp.ne.s32.totalorder %s64, %s66
    %p70 = scmp.eq.s32.totalorder %s9, 0
    %p71 = por %p69, %p70
    %p72 = scmp.ne.s32.totalorder %s64, %s66
    %p73 = scmp.eq.s32.totalorder %s14, 1
    %p74 = por %p72, %p73
    %p75 = scmp.ne.s32.totalorder %s66, %s67
    %p76 = scmp.eq.s32.totalorder %s14, 0
    %p77 = por %p75, %p76
    %p78 = scmp.ne.s32.totalorder %s66, %s67
    %p79 = scmp.eq.s32.totalorder %s15, 1
    %p80 = por %p78, %p79
    %p82 = scmp.ne.s32.totalorder %s67, %s81
    %p83 = scmp.eq.s32.totalorder %s15, 0
    %p84 = por %p82, %p83
    %s85 = ssub.s32 %s9, %s16
    %p86 = scmp.eq.s32.totalorder %s85, 0
    %s88 = sadd.s32 %s87, 1
    %s89 = scalar_select %p86, %s87, %s88
    %p92 = pneg %p86
    %p93 = scmp.eq.s32.totalorder %s9, 1
    %p94 = por %p92, %p93
    %p95 = scmp.ne.s32.totalorder %s87, %s90
    %p96 = scmp.eq.s32.totalorder %s9, 0
    %p97 = por %p95, %p96
    %p98 = scmp.ne.s32.totalorder %s87, %s90
    %p99 = scmp.eq.s32.totalorder %s14, 1
    %p100 = por %p98, %p99
    %p101 = scmp.ne.s32.totalorder %s90, %s91
    %p102 = scmp.eq.s32.totalorder %s14, 0
    %p103 = por %p101, %p102
    %p104 = scmp.ne.s32.totalorder %s90, %s91
    %p105 = scmp.eq.s32.totalorder %s15, 1
    %p106 = por %p104, %p105
    %p108 = scmp.ne.s32.totalorder %s91, %s107
    %p109 = scmp.eq.s32.totalorder %s15, 0
    %p110 = por %p108, %p109
    %p111 = scmp.le.s32.totalorder 1, %s9
    %p112 = scmp.lt.s32.totalorder %s9, 3
    %p113 = pnand %p111, %p112
    %p114 = pneg %p113
    // Predicated region
    $region9: #{tpu_custom_call.1} parent=5 // pred_check
      _
    $region10: #{tpu_custom_call.1} parent=5 // pred_check_branch
      %116 = sbr.rel (%p113) target = $region12
    $region11: #{tpu_custom_call.1} parent=5 // pred_region
      %s117 = ssub.s32 %s9, 1
      // Predicated region
      $region13: #{tpu_custom_call.1} parent=11 // pred_check
        %p118 = pneg %p56
      $region14: #{tpu_custom_call.1} parent=11 // pred_check_branch
        %120 = sbr.rel (%p118) target = $region16
      $region15: #{tpu_custom_call.1} parent=11 // pred_region
        _
      $region16: #{tpu_custom_call.1} parent=11 // pred_fallthru
        _
      // Predicated region
      $region17: #{tpu_custom_call.1} parent=11 // pred_check
        %p121 = pneg %p77
      $region18: #{tpu_custom_call.1} parent=11 // pred_check_branch
        %123 = sbr.rel (%p121) target = $region20
      $region19: #{tpu_custom_call.1} parent=11 // pred_region
        _
      $region20: #{tpu_custom_call.1} parent=11 // pred_fallthru
        _
    $region12: #{tpu_custom_call.1} parent=5 // pred_fallthru
      _
    %p124 = scmp.lt.s32.totalorder %s9, 2
    // Predicated region
    $region21: #{tpu_custom_call.1} parent=5 // pred_check
      %p125 = pneg %p124
    $region22: #{tpu_custom_call.1} parent=5 // pred_check_branch
      %127 = sbr.rel (%p125) target = $region24
    $region23: #{tpu_custom_call.1} parent=5 // pred_region
      // Predicated region
      $region25: #{tpu_custom_call.1} parent=23 // pred_check
        %p128 = pneg %p29
      $region26: #{tpu_custom_call.1} parent=23 // pred_check_branch
        %130 = sbr.rel (%p128) target = $region28
      $region27: #{tpu_custom_call.1} parent=23 // pred_region
        %s131 = smul.u32 16, %s9
        %p132 = scmp.lt.s32.totalorder %s131, 31
        %s133 = scalar_select %p132, %s131, 31
        %s134 = smul.addr %s133, 8
        %s135 = scalar_lea.vmem %s0, %s134
        %s136 = smul.u32 16, %s9
      $region28: #{tpu_custom_call.1} parent=23 // pred_fallthru
        _
    $region24: #{tpu_custom_call.1} parent=5 // pred_fallthru
      _
    %p137 = scmp.le.s32.totalorder 1, %s9
    %p138 = scmp.lt.s32.totalorder %s9, 3
    %p139 = pnand %p137, %p138
    %p140 = pneg %p139
    // Predicated region
    $region29: #{tpu_custom_call.1} parent=5 // pred_check
      _
    $region30: #{tpu_custom_call.1} parent=5 // pred_check_branch
      %142 = sbr.rel (%p139) target = $region32
    $region31: #{tpu_custom_call.1} parent=5 // pred_region
      %s143 = ssub.s32 %s9, 1
      %s144 = smul.u32 16, %s14
      %p145 = scmp.lt.s32.totalorder %s144, 31
      %s146 = scalar_select %p145, %s144, 31
      %s147 = smul.addr %s146, 8
      %s148 = scalar_lea.vmem %s0, %s147
      %p149 = pneg %p35
      %p150 = pneg %p32
      %p151 = pneg %p56
      %p152 = pneg %p53
      %p153 = pneg %p77
      %p154 = pneg %p74
      %p155 = pneg %p103
      %p156 = pneg %p100
      %s157 = smul.u32 16, %s14
      %p158 = scmp.lt.s32.totalorder %s157, 31
      %s159 = scalar_select %p158, %s157, 31
      %s160 = smul.addr %s159, 8
      %s161 = scalar_lea.vmem %s3, %s160
      %s162 = smul.u32 16, %s14
      %p163 = scmp.lt.s32.totalorder %s162, 31
      %s164 = scalar_select %p163, %s162, 31
      %s165 = smul.addr %s164, 8
      %s166 = scalar_lea.vmem %s0, %s165
      %s167 = smul.u32 16, %s14
      %s168 = smul.u32 16, %s14
      %p169 = scmp.lt.s32.totalorder %s168, 31
      %s170 = scalar_select %p169, %s168, 31
      %s171 = smul.addr %s170, 8
      %s172 = scalar_lea.vmem %s3, %s171
      %s173 = smul.u32 16, %s14
      %v174 = vld [vmem:[%s166] sm:$0xff]
      %v175 = vld [vmem:[%s166 + $0x8] sm:$0xff]
      %v176 = vld [vmem:[%s166 + $0x10] sm:$0xff]
      %v177 = vld [vmem:[%s166 + $0x18] sm:$0xff]
      %v178 = vld [vmem:[%s166 + $0x20] sm:$0xff]
      %v179 = vld [vmem:[%s166 + $0x28] sm:$0xff]
      %v180 = vld [vmem:[%s166 + $0x30] sm:$0xff]
      %v181 = vld [vmem:[%s166 + $0x38] sm:$0xff]
      %v182 = vld [vmem:[%s166 + $0x40] sm:$0xff]
      %v183 = vld [vmem:[%s166 + $0x48] sm:$0xff]
      %v184 = vld [vmem:[%s166 + $0x50] sm:$0xff]
      %v185 = vld [vmem:[%s166 + $0x58] sm:$0xff]
      %v186 = vld [vmem:[%s166 + $0x60] sm:$0xff]
      %v187 = vld [vmem:[%s166 + $0x68] sm:$0xff]
      %v188 = vld [vmem:[%s166 + $0x70] sm:$0xff]
      %v189 = vld [vmem:[%s166 + $0x78] sm:$0xff]
      %v190 = vld [vmem:[%s1] sm:$0xff]
      %v191 = vld [vmem:[%s1 + $0x8] sm:$0xff]
      %v192 = vld [vmem:[%s1 + $0x10] sm:$0xff]
      %v193 = vld [vmem:[%s1 + $0x18] sm:$0xff]
      %v194 = vmul.f32 %v174, %v174
      %v195 = vmul.f32 %v175, %v175
      %v196 = vmul.f32 %v176, %v176
      %v197 = vmul.f32 %v177, %v177
      %v198 = vmul.f32 %v178, %v178
      %v199 = vmul.f32 %v179, %v179
      %v200 = vmul.f32 %v180, %v180
      %v201 = vmul.f32 %v181, %v181
      %v202 = vmul.f32 %v182, %v182
      %v203 = vmul.f32 %v183, %v183
      %v204 = vmul.f32 %v184, %v184
      %v205 = vmul.f32 %v185, %v185
      %v206 = vmul.f32 %v186, %v186
      %v207 = vmul.f32 %v187, %v187
      %v208 = vmul.f32 %v188, %v188
      %v209 = vmul.f32 %v189, %v189
      %vm210 = vcmask 261120
      %v211 = vsel %vm210, %v194, 0.0
      %212 = vadd.xlane.f32.xlu0 %v211
      %v213 = vpop.xlane.xlu0 %212
      %v214 = vsel %vm210, %v195, 0.0
      %215 = vadd.xlane.f32.xlu0 %v214
      %v216 = vpop.xlane.xlu0 %215
      %v217 = vsel %vm210, %v196, 0.0
      %218 = vadd.xlane.f32.xlu0 %v217
      %v219 = vpop.xlane.xlu0 %218
      %v220 = vsel %vm210, %v197, 0.0
      %221 = vadd.xlane.f32.xlu0 %v220
      %v222 = vpop.xlane.xlu0 %221
      %v223 = vsel %vm210, %v198, 0.0
      %224 = vadd.xlane.f32.xlu0 %v223
      %v225 = vpop.xlane.xlu0 %224
      %v226 = vsel %vm210, %v199, 0.0
      %227 = vadd.xlane.f32.xlu0 %v226
      %v228 = vpop.xlane.xlu0 %227
      %v229 = vsel %vm210, %v200, 0.0
      %230 = vadd.xlane.f32.xlu0 %v229
      %v231 = vpop.xlane.xlu0 %230
      %v232 = vsel %vm210, %v201, 0.0
      %233 = vadd.xlane.f32.xlu0 %v232
      %v234 = vpop.xlane.xlu0 %233
      %v235 = vsel %vm210, %v202, 0.0
      %236 = vadd.xlane.f32.xlu0 %v235
      %v237 = vpop.xlane.xlu0 %236
      %v238 = vsel %vm210, %v203, 0.0
      %239 = vadd.xlane.f32.xlu0 %v238
      %v240 = vpop.xlane.xlu0 %239
      %v241 = vsel %vm210, %v204, 0.0
      %242 = vadd.xlane.f32.xlu0 %v241
      %v243 = vpop.xlane.xlu0 %242
      %v244 = vsel %vm210, %v205, 0.0
      %245 = vadd.xlane.f32.xlu0 %v244
      %v246 = vpop.xlane.xlu0 %245
      %v247 = vsel %vm210, %v206, 0.0
      %248 = vadd.xlane.f32.xlu0 %v247
      %v249 = vpop.xlane.xlu0 %248
      %v250 = vsel %vm210, %v207, 0.0
      %251 = vadd.xlane.f32.xlu0 %v250
      %v252 = vpop.xlane.xlu0 %251
      %v253 = vsel %vm210, %v208, 0.0
      %254 = vadd.xlane.f32.xlu0 %v253
      %v255 = vpop.xlane.xlu0 %254
      %v256 = vsel %vm210, %v209, 0.0
      %257 = vadd.xlane.f32.xlu0 %v256
      %v258 = vpop.xlane.xlu0 %257
      %v259 = vrsqrt.pop %v213
      %v260 = vmul.f32 %v213, %v259
      %vm261 = vcmp.eq.f32.partialorder %v213, inf
      %v262 = vsel %vm261, %v213, %v260
      %vm263 = vcmp.eq.f32.partialorder %v213, 0.0
      %v264 = vand.u32 %v213, 2147483648
      %v265 = vsel %vm263, %v264, %v262
      %v266 = vrsqrt.pop %v216
      %v267 = vmul.f32 %v216, %v266
      %vm268 = vcmp.eq.f32.partialorder %v216, inf
      %v269 = vsel %vm268, %v216, %v267
      %vm270 = vcmp.eq.f32.partialorder %v216, 0.0
      %v271 = vand.u32 %v216, 2147483648
      %v272 = vsel %vm270, %v271, %v269
      %v273 = vrsqrt.pop %v219
      %v274 = vmul.f32 %v219, %v273
      %vm275 = vcmp.eq.f32.partialorder %v219, inf
      %v276 = vsel %vm275, %v219, %v274
      %vm277 = vcmp.eq.f32.partialorder %v219, 0.0
      %v278 = vand.u32 %v219, 2147483648
      %v279 = vsel %vm277, %v278, %v276
      %v280 = vrsqrt.pop %v222
      %v281 = vmul.f32 %v222, %v280
      %vm282 = vcmp.eq.f32.partialorder %v222, inf
      %v283 = vsel %vm282, %v222, %v281
      %vm284 = vcmp.eq.f32.partialorder %v222, 0.0
      %v285 = vand.u32 %v222, 2147483648
      %v286 = vsel %vm284, %v285, %v283
      %v287 = vrsqrt.pop %v225
      %v288 = vmul.f32 %v225, %v287
      %vm289 = vcmp.eq.f32.partialorder %v225, inf
      %v290 = vsel %vm289, %v225, %v288
      %vm291 = vcmp.eq.f32.partialorder %v225, 0.0
      %v292 = vand.u32 %v225, 2147483648
      %v293 = vsel %vm291, %v292, %v290
      %v294 = vrsqrt.pop %v228
      %v295 = vmul.f32 %v228, %v294
      %vm296 = vcmp.eq.f32.partialorder %v228, inf
      %v297 = vsel %vm296, %v228, %v295
      %vm298 = vcmp.eq.f32.partialorder %v228, 0.0
      %v299 = vand.u32 %v228, 2147483648
      %v300 = vsel %vm298, %v299, %v297
      %v301 = vrsqrt.pop %v231
      %v302 = vmul.f32 %v231, %v301
      %vm303 = vcmp.eq.f32.partialorder %v231, inf
      %v304 = vsel %vm303, %v231, %v302
      %vm305 = vcmp.eq.f32.partialorder %v231, 0.0
      %v306 = vand.u32 %v231, 2147483648
      %v307 = vsel %vm305, %v306, %v304
      %v308 = vrsqrt.pop %v234
      %v309 = vmul.f32 %v234, %v308
      %vm310 = vcmp.eq.f32.partialorder %v234, inf
      %v311 = vsel %vm310, %v234, %v309
      %vm312 = vcmp.eq.f32.partialorder %v234, 0.0
      %v313 = vand.u32 %v234, 2147483648
      %v314 = vsel %vm312, %v313, %v311
      %v315 = vrsqrt.pop %v237
      %v316 = vmul.f32 %v237, %v315
      %vm317 = vcmp.eq.f32.partialorder %v237, inf
      %v318 = vsel %vm317, %v237, %v316
      %vm319 = vcmp.eq.f32.partialorder %v237, 0.0
      %v320 = vand.u32 %v237, 2147483648
      %v321 = vsel %vm319, %v320, %v318
      %v322 = vrsqrt.pop %v240
      %v323 = vmul.f32 %v240, %v322
      %vm324 = vcmp.eq.f32.partialorder %v240, inf
      %v325 = vsel %vm324, %v240, %v323
      %vm326 = vcmp.eq.f32.partialorder %v240, 0.0
      %v327 = vand.u32 %v240, 2147483648
      %v328 = vsel %vm326, %v327, %v325
      %v329 = vrsqrt.pop %v243
      %v330 = vmul.f32 %v243, %v329
      %vm331 = vcmp.eq.f32.partialorder %v243, inf
      %v332 = vsel %vm331, %v243, %v330
      %vm333 = vcmp.eq.f32.partialorder %v243, 0.0
      %v334 = vand.u32 %v243, 2147483648
      %v335 = vsel %vm333, %v334, %v332
      %v336 = vrsqrt.pop %v246
      %v337 = vmul.f32 %v246, %v336
      %vm338 = vcmp.eq.f32.partialorder %v246, inf
      %v339 = vsel %vm338, %v246, %v337
      %vm340 = vcmp.eq.f32.partialorder %v246, 0.0
      %v341 = vand.u32 %v246, 2147483648
      %v342 = vsel %vm340, %v341, %v339
      %v343 = vrsqrt.pop %v249
      %v344 = vmul.f32 %v249, %v343
      %vm345 = vcmp.eq.f32.partialorder %v249, inf
      %v346 = vsel %vm345, %v249, %v344
      %vm347 = vcmp.eq.f32.partialorder %v249, 0.0
      %v348 = vand.u32 %v249, 2147483648
      %v349 = vsel %vm347, %v348, %v346
      %v350 = vrsqrt.pop %v252
      %v351 = vmul.f32 %v252, %v350
      %vm352 = vcmp.eq.f32.partialorder %v252, inf
      %v353 = vsel %vm352, %v252, %v351
      %vm354 = vcmp.eq.f32.partialorder %v252, 0.0
      %v355 = vand.u32 %v252, 2147483648
      %v356 = vsel %vm354, %v355, %v353
      %v357 = vrsqrt.pop %v255
      %v358 = vmul.f32 %v255, %v357
      %vm359 = vcmp.eq.f32.partialorder %v255, inf
      %v360 = vsel %vm359, %v255, %v358
      %vm361 = vcmp.eq.f32.partialorder %v255, 0.0
      %v362 = vand.u32 %v255, 2147483648
      %v363 = vsel %vm361, %v362, %v360
      %v364 = vrsqrt.pop %v258
      %v365 = vmul.f32 %v258, %v364
      %vm366 = vcmp.eq.f32.partialorder %v258, inf
      %v367 = vsel %vm366, %v258, %v365
      %vm368 = vcmp.eq.f32.partialorder %v258, 0.0
      %v369 = vand.u32 %v258, 2147483648
      %v370 = vsel %vm368, %v369, %v367
      %v371 = vmax.f32 %v265, 1e-15
      %v372 = vmax.f32 %v272, 1e-15
      %v373 = vmax.f32 %v279, 1e-15
      %v374 = vmax.f32 %v286, 1e-15
      %v375 = vmax.f32 %v293, 1e-15
      %v376 = vmax.f32 %v300, 1e-15
      %v377 = vmax.f32 %v307, 1e-15
      %v378 = vmax.f32 %v314, 1e-15
      %v379 = vmax.f32 %v321, 1e-15
      %v380 = vmax.f32 %v328, 1e-15
      %v381 = vmax.f32 %v335, 1e-15
      %v382 = vmax.f32 %v342, 1e-15
      %v383 = vmax.f32 %v349, 1e-15
      %v384 = vmax.f32 %v356, 1e-15
      %v385 = vmax.f32 %v363, 1e-15
      %v386 = vmax.f32 %v370, 1e-15
      %v388 = vsel %vm210, %v174, 0
      %v391 = vsel %vm210, %v175, 0
      %v394 = vsel %vm210, %v176, 0
      %v397 = vsel %vm210, %v177, 0
      %v400 = vsel %vm210, %v178, 0
      %v403 = vsel %vm210, %v179, 0
      %v406 = vsel %vm210, %v180, 0
      %v409 = vsel %vm210, %v181, 0
      %v412 = vsel %vm210, %v182, 0
      %v415 = vsel %vm210, %v183, 0
      %v418 = vsel %vm210, %v184, 0
      %v421 = vsel %vm210, %v185, 0
      %v424 = vsel %vm210, %v186, 0
      %v427 = vsel %vm210, %v187, 0
      %v430 = vsel %vm210, %v188, 0
      %v433 = vsel %vm210, %v189, 0
      %435 = vmatprep.subr.mxu0 0.0
      %436 = vmatpush1.msra.mxu0 0.0
      %437 = vmatprep.subr.mxu0 0.0
      %438 = vmatpush1.msra.mxu0 0.0
      %439 = vmatprep.subr.mxu0 0.0
      %440 = vmatpush1.msra.mxu0 0.0
      %441 = vmatprep.subr.mxu0 0.0
      %442 = vmatpush1.msra.mxu0 0.0
      %443 = vmatprep.subr.mxu0 0.0
      %444 = vmatpush1.msra.mxu0 0.0
      %445 = vmatprep.subr.mxu0 0.0
      %446 = vmatpush1.msra.mxu0 0.0
      %447 = vmatprep.subr.mxu0 0.0
      %448 = vmatpush1.msra.mxu0 0.0
      %449 = vmatprep.subr.mxu0 0.0
      %450 = vmatpush1.msra.mxu0 0.0
      %451 = vmatprep.subr.mxu0 0.0
      %452 = vmatpush1.msra.mxu0 0.0
      %453 = vmatprep.subr.mxu0 0.0
      %454 = vmatpush1.msra.mxu0 0.0
      %455 = vmatprep.subr.mxu0 0.0
      %456 = vmatpush1.msra.mxu0 0.0
      %457 = vmatprep.subr.mxu0 0.0
      %458 = vmatpush1.msra.mxu0 0.0
      %459 = vmatprep.subr.mxu0 0.0
      %460 = vmatpush1.msra.mxu0 %v193
      %461 = vmatprep.subr.mxu0 0.0
      %462 = vmatpush1.msra.mxu0 %v192
      %463 = vmatprep.subr.mxu0 0.0
      %464 = vmatpush1.msra.mxu0 %v191
      %465 = vmatprep.subr.mxu0 0.0
      %466 = vmatpush1.msra.mxu0 %v190
      %467 = vmatprep.subr.mxu0 0.0
      %468 = vmatpush2.msra.mxu0 0.0
      %469 = vmatprep.subr.mxu0 0.0
      %470 = vmatpush2.msra.mxu0 0.0
      %471 = vmatprep.subr.mxu0 0.0
      %472 = vmatpush2.msra.mxu0 0.0
      %473 = vmatprep.subr.mxu0 0.0
      %474 = vmatpush2.msra.mxu0 0.0
      %475 = vmatprep.subr.mxu0 0.0
      %476 = vmatpush2.msra.mxu0 0.0
      %477 = vmatprep.subr.mxu0 0.0
      %478 = vmatpush2.msra.mxu0 0.0
      %479 = vmatprep.subr.mxu0 0.0
      %480 = vmatpush2.msra.mxu0 0.0
      %481 = vmatprep.subr.mxu0 0.0
      %482 = vmatpush2.msra.mxu0 0.0
      %483 = vmatprep.subr.mxu0 0.0
      %484 = vmatpush2.msra.mxu0 0.0
      %485 = vmatprep.subr.mxu0 0.0
      %486 = vmatpush2.msra.mxu0 0.0
      %487 = vmatprep.subr.mxu0 0.0
      %488 = vmatpush2.msra.mxu0 0.0
      %489 = vmatprep.subr.mxu0 0.0
      %490 = vmatpush2.msra.mxu0 0.0
      %491 = vmatprep.subr.mxu0 0.0
      %492 = vmatpush2.msra.mxu0 0.0
      %493 = vmatprep.subr.mxu0 0.0
      %494 = vmatpush2.msra.mxu0 0.0
      %495 = vmatprep.subr.mxu0 0.0
      %496 = vmatpush2.msra.mxu0 0.0
      %497 = vmatprep.subr.mxu0 0.0
      %498 = vmatpush2.msra.mxu0 0.0
      %499 = vmatprep.mubr.f32.mxu0 0.0
      %500 = vmatmul.mubr.f32.gmra.mxu0 %v388
      %v501 = vpop.f32.mrf.mxu0
      %v502 = vadd.f32 0.0, %v501
      %v503 = vpop.f32.mrf.mxu0
      %504 = vmatprep.mubr.f32.mxu0 0.0
      %505 = vmatmul.mubr.f32.gmra.mxu0 %v391
      %v506 = vpop.f32.mrf.mxu0
      %v507 = vadd.f32 0.0, %v506
      %v508 = vpop.f32.mrf.mxu0
      %509 = vmatprep.mubr.f32.mxu0 0.0
      %510 = vmatmul.mubr.f32.gmra.mxu0 %v394
      %v511 = vpop.f32.mrf.mxu0
      %v512 = vadd.f32 0.0, %v511
      %v513 = vpop.f32.mrf.mxu0
      %514 = vmatprep.mubr.f32.mxu0 0.0
      %515 = vmatmul.mubr.f32.gmra.mxu0 %v397
      %v516 = vpop.f32.mrf.mxu0
      %v517 = vadd.f32 0.0, %v516
      %v518 = vpop.f32.mrf.mxu0
      %519 = vmatprep.mubr.f32.mxu0 0.0
      %520 = vmatmul.mubr.f32.gmra.mxu0 %v400
      %v521 = vpop.f32.mrf.mxu0
      %v522 = vadd.f32 0.0, %v521
      %v523 = vpop.f32.mrf.mxu0
      %524 = vmatprep.mubr.f32.mxu0 0.0
      %525 = vmatmul.mubr.f32.gmra.mxu0 %v403
      %v526 = vpop.f32.mrf.mxu0
      %v527 = vadd.f32 0.0, %v526
      %v528 = vpop.f32.mrf.mxu0
      %529 = vmatprep.mubr.f32.mxu0 0.0
      %530 = vmatmul.mubr.f32.gmra.mxu0 %v406
      %v531 = vpop.f32.mrf.mxu0
      %v532 = vadd.f32 0.0, %v531
      %v533 = vpop.f32.mrf.mxu0
      %534 = vmatprep.mubr.f32.mxu0 0.0
      %535 = vmatmul.mubr.f32.gmra.mxu0 %v409
      %v536 = vpop.f32.mrf.mxu0
      %v537 = vadd.f32 0.0, %v536
      %v538 = vpop.f32.mrf.mxu0
      %539 = vmatprep.mubr.f32.mxu0 0.0
      %540 = vmatmul.mubr.f32.gmra.mxu0 %v412
      %v541 = vpop.f32.mrf.mxu0
      %v542 = vadd.f32 0.0, %v541
      %v543 = vpop.f32.mrf.mxu0
      %544 = vmatprep.mubr.f32.mxu0 0.0
      %545 = vmatmul.mubr.f32.gmra.mxu0 %v415
      %v546 = vpop.f32.mrf.mxu0
      %v547 = vadd.f32 0.0, %v546
      %v548 = vpop.f32.mrf.mxu0
      %549 = vmatprep.mubr.f32.mxu0 0.0
      %550 = vmatmul.mubr.f32.gmra.mxu0 %v418
      %v551 = vpop.f32.mrf.mxu0
      %v552 = vadd.f32 0.0, %v551
      %v553 = vpop.f32.mrf.mxu0
      %554 = vmatprep.mubr.f32.mxu0 0.0
      %555 = vmatmul.mubr.f32.gmra.mxu0 %v421
      %v556 = vpop.f32.mrf.mxu0
      %v557 = vadd.f32 0.0, %v556
      %v558 = vpop.f32.mrf.mxu0
      %559 = vmatprep.mubr.f32.mxu0 0.0
      %560 = vmatmul.mubr.f32.gmra.mxu0 %v424
      %v561 = vpop.f32.mrf.mxu0
      %v562 = vadd.f32 0.0, %v561
      %v563 = vpop.f32.mrf.mxu0
      %564 = vmatprep.mubr.f32.mxu0 0.0
      %565 = vmatmul.mubr.f32.gmra.mxu0 %v427
      %v566 = vpop.f32.mrf.mxu0
      %v567 = vadd.f32 0.0, %v566
      %v568 = vpop.f32.mrf.mxu0
      %569 = vmatprep.mubr.f32.mxu0 0.0
      %570 = vmatmul.mubr.f32.gmra.mxu0 %v430
      %v571 = vpop.f32.mrf.mxu0
      %v572 = vadd.f32 0.0, %v571
      %v573 = vpop.f32.mrf.mxu0
      %574 = vmatprep.mubr.f32.mxu0 0.0
      %575 = vmatmul.mubr.f32.gmra.mxu0 %v433
      %v576 = vpop.f32.mrf.mxu0
      %v577 = vadd.f32 0.0, %v576
      %v578 = vpop.f32.mrf.mxu0
      %579 = vdwg.mxu0
      %v580 = vmul.f32 %v502, %v502
      %v581 = vmul.f32 %v507, %v507
      %v582 = vmul.f32 %v512, %v512
      %v583 = vmul.f32 %v517, %v517
      %v584 = vmul.f32 %v522, %v522
      %v585 = vmul.f32 %v527, %v527
      %v586 = vmul.f32 %v532, %v532
      %v587 = vmul.f32 %v537, %v537
      %v588 = vmul.f32 %v542, %v542
      %v589 = vmul.f32 %v547, %v547
      %v590 = vmul.f32 %v552, %v552
      %v591 = vmul.f32 %v557, %v557
      %v592 = vmul.f32 %v562, %v562
      %v593 = vmul.f32 %v567, %v567
      %v594 = vmul.f32 %v572, %v572
      %v595 = vmul.f32 %v577, %v577
      %v596 = vsel %vm210, %v580, 0.0
      %597 = vadd.xlane.f32.xlu0 %v596
      %v598 = vpop.xlane.xlu0 %597
      %v599 = vsel %vm210, %v581, 0.0
      %600 = vadd.xlane.f32.xlu0 %v599
      %v601 = vpop.xlane.xlu0 %600
      %v602 = vsel %vm210, %v582, 0.0
      %603 = vadd.xlane.f32.xlu0 %v602
      %v604 = vpop.xlane.xlu0 %603
      %v605 = vsel %vm210, %v583, 0.0
      %606 = vadd.xlane.f32.xlu0 %v605
      %v607 = vpop.xlane.xlu0 %606
      %v608 = vsel %vm210, %v584, 0.0
      %609 = vadd.xlane.f32.xlu0 %v608
      %v610 = vpop.xlane.xlu0 %609
      %v611 = vsel %vm210, %v585, 0.0
      %612 = vadd.xlane.f32.xlu0 %v611
      %v613 = vpop.xlane.xlu0 %612
      %v614 = vsel %vm210, %v586, 0.0
      %615 = vadd.xlane.f32.xlu0 %v614
      %v616 = vpop.xlane.xlu0 %615
      %v617 = vsel %vm210, %v587, 0.0
      %618 = vadd.xlane.f32.xlu0 %v617
      %v619 = vpop.xlane.xlu0 %618
      %v620 = vsel %vm210, %v588, 0.0
      %621 = vadd.xlane.f32.xlu0 %v620
      %v622 = vpop.xlane.xlu0 %621
      %v623 = vsel %vm210, %v589, 0.0
      %624 = vadd.xlane.f32.xlu0 %v623
      %v625 = vpop.xlane.xlu0 %624
      %v626 = vsel %vm210, %v590, 0.0
      %627 = vadd.xlane.f32.xlu0 %v626
      %v628 = vpop.xlane.xlu0 %627
      %v629 = vsel %vm210, %v591, 0.0
      %630 = vadd.xlane.f32.xlu0 %v629
      %v631 = vpop.xlane.xlu0 %630
      %v632 = vsel %vm210, %v592, 0.0
      %633 = vadd.xlane.f32.xlu0 %v632
      %v634 = vpop.xlane.xlu0 %633
      %v635 = vsel %vm210, %v593, 0.0
      %636 = vadd.xlane.f32.xlu0 %v635
      %v637 = vpop.xlane.xlu0 %636
      %v638 = vsel %vm210, %v594, 0.0
      %639 = vadd.xlane.f32.xlu0 %v638
      %v640 = vpop.xlane.xlu0 %639
      %v641 = vsel %vm210, %v595, 0.0
      %642 = vadd.xlane.f32.xlu0 %v641
      %v643 = vpop.xlane.xlu0 %642
      %v644 = vrsqrt.pop %v598
      %v645 = vmul.f32 %v598, %v644
      %vm646 = vcmp.eq.f32.partialorder %v598, inf
      %v647 = vsel %vm646, %v598, %v645
      %vm648 = vcmp.eq.f32.partialorder %v598, 0.0
      %v649 = vand.u32 %v598, 2147483648
      %v650 = vsel %vm648, %v649, %v647
      %v651 = vrsqrt.pop %v601
      %v652 = vmul.f32 %v601, %v651
      %vm653 = vcmp.eq.f32.partialorder %v601, inf
      %v654 = vsel %vm653, %v601, %v652
      %vm655 = vcmp.eq.f32.partialorder %v601, 0.0
      %v656 = vand.u32 %v601, 2147483648
      %v657 = vsel %vm655, %v656, %v654
      %v658 = vrsqrt.pop %v604
      %v659 = vmul.f32 %v604, %v658
      %vm660 = vcmp.eq.f32.partialorder %v604, inf
      %v661 = vsel %vm660, %v604, %v659
      %vm662 = vcmp.eq.f32.partialorder %v604, 0.0
      %v663 = vand.u32 %v604, 2147483648
      %v664 = vsel %vm662, %v663, %v661
      %v665 = vrsqrt.pop %v607
      %v666 = vmul.f32 %v607, %v665
      %vm667 = vcmp.eq.f32.partialorder %v607, inf
      %v668 = vsel %vm667, %v607, %v666
      %vm669 = vcmp.eq.f32.partialorder %v607, 0.0
      %v670 = vand.u32 %v607, 2147483648
      %v671 = vsel %vm669, %v670, %v668
      %v672 = vrsqrt.pop %v610
      %v673 = vmul.f32 %v610, %v672
      %vm674 = vcmp.eq.f32.partialorder %v610, inf
      %v675 = vsel %vm674, %v610, %v673
      %vm676 = vcmp.eq.f32.partialorder %v610, 0.0
      %v677 = vand.u32 %v610, 2147483648
      %v678 = vsel %vm676, %v677, %v675
      %v679 = vrsqrt.pop %v613
      %v680 = vmul.f32 %v613, %v679
      %vm681 = vcmp.eq.f32.partialorder %v613, inf
      %v682 = vsel %vm681, %v613, %v680
      %vm683 = vcmp.eq.f32.partialorder %v613, 0.0
      %v684 = vand.u32 %v613, 2147483648
      %v685 = vsel %vm683, %v684, %v682
      %v686 = vrsqrt.pop %v616
      %v687 = vmul.f32 %v616, %v686
      %vm688 = vcmp.eq.f32.partialorder %v616, inf
      %v689 = vsel %vm688, %v616, %v687
      %vm690 = vcmp.eq.f32.partialorder %v616, 0.0
      %v691 = vand.u32 %v616, 2147483648
      %v692 = vsel %vm690, %v691, %v689
      %v693 = vrsqrt.pop %v619
      %v694 = vmul.f32 %v619, %v693
      %vm695 = vcmp.eq.f32.partialorder %v619, inf
      %v696 = vsel %vm695, %v619, %v694
      %vm697 = vcmp.eq.f32.partialorder %v619, 0.0
      %v698 = vand.u32 %v619, 2147483648
      %v699 = vsel %vm697, %v698, %v696
      %v700 = vrsqrt.pop %v622
      %v701 = vmul.f32 %v622, %v700
      %vm702 = vcmp.eq.f32.partialorder %v622, inf
      %v703 = vsel %vm702, %v622, %v701
      %vm704 = vcmp.eq.f32.partialorder %v622, 0.0
      %v705 = vand.u32 %v622, 2147483648
      %v706 = vsel %vm704, %v705, %v703
      %v707 = vrsqrt.pop %v625
      %v708 = vmul.f32 %v625, %v707
      %vm709 = vcmp.eq.f32.partialorder %v625, inf
      %v710 = vsel %vm709, %v625, %v708
      %vm711 = vcmp.eq.f32.partialorder %v625, 0.0
      %v712 = vand.u32 %v625, 2147483648
      %v713 = vsel %vm711, %v712, %v710
      %v714 = vrsqrt.pop %v628
      %v715 = vmul.f32 %v628, %v714
      %vm716 = vcmp.eq.f32.partialorder %v628, inf
      %v717 = vsel %vm716, %v628, %v715
      %vm718 = vcmp.eq.f32.partialorder %v628, 0.0
      %v719 = vand.u32 %v628, 2147483648
      %v720 = vsel %vm718, %v719, %v717
      %v721 = vrsqrt.pop %v631
      %v722 = vmul.f32 %v631, %v721
      %vm723 = vcmp.eq.f32.partialorder %v631, inf
      %v724 = vsel %vm723, %v631, %v722
      %vm725 = vcmp.eq.f32.partialorder %v631, 0.0
      %v726 = vand.u32 %v631, 2147483648
      %v727 = vsel %vm725, %v726, %v724
      %v728 = vrsqrt.pop %v634
      %v729 = vmul.f32 %v634, %v728
      %vm730 = vcmp.eq.f32.partialorder %v634, inf
      %v731 = vsel %vm730, %v634, %v729
      %vm732 = vcmp.eq.f32.partialorder %v634, 0.0
      %v733 = vand.u32 %v634, 2147483648
      %v734 = vsel %vm732, %v733, %v731
      %v735 = vrsqrt.pop %v637
      %v736 = vmul.f32 %v637, %v735
      %vm737 = vcmp.eq.f32.partialorder %v637, inf
      %v738 = vsel %vm737, %v637, %v736
      %vm739 = vcmp.eq.f32.partialorder %v637, 0.0
      %v740 = vand.u32 %v637, 2147483648
      %v741 = vsel %vm739, %v740, %v738
      %v742 = vrsqrt.pop %v640
      %v743 = vmul.f32 %v640, %v742
      %vm744 = vcmp.eq.f32.partialorder %v640, inf
      %v745 = vsel %vm744, %v640, %v743
      %vm746 = vcmp.eq.f32.partialorder %v640, 0.0
      %v747 = vand.u32 %v640, 2147483648
      %v748 = vsel %vm746, %v747, %v745
      %v749 = vrsqrt.pop %v643
      %v750 = vmul.f32 %v643, %v749
      %vm751 = vcmp.eq.f32.partialorder %v643, inf
      %v752 = vsel %vm751, %v643, %v750
      %vm753 = vcmp.eq.f32.partialorder %v643, 0.0
      %v754 = vand.u32 %v643, 2147483648
      %v755 = vsel %vm753, %v754, %v752
      %v756 = vmax.f32 %v650, 1e-15
      %v757 = vmax.f32 %v657, 1e-15
      %v758 = vmax.f32 %v664, 1e-15
      %v759 = vmax.f32 %v671, 1e-15
      %v760 = vmax.f32 %v678, 1e-15
      %v761 = vmax.f32 %v685, 1e-15
      %v762 = vmax.f32 %v692, 1e-15
      %v763 = vmax.f32 %v699, 1e-15
      %v764 = vmax.f32 %v706, 1e-15
      %v765 = vmax.f32 %v713, 1e-15
      %v766 = vmax.f32 %v720, 1e-15
      %v767 = vmax.f32 %v727, 1e-15
      %v768 = vmax.f32 %v734, 1e-15
      %v769 = vmax.f32 %v741, 1e-15
      %v770 = vmax.f32 %v748, 1e-15
      %v771 = vmax.f32 %v755, 1e-15
      %v772 = vrcp.pop %v371
      %v773 = vmul.f32 %v756, %v772
      %v774 = vrcp.pop %v372
      %v775 = vmul.f32 %v757, %v774
      %v776 = vrcp.pop %v373
      %v777 = vmul.f32 %v758, %v776
      %v778 = vrcp.pop %v374
      %v779 = vmul.f32 %v759, %v778
      %v780 = vrcp.pop %v375
      %v781 = vmul.f32 %v760, %v780
      %v782 = vrcp.pop %v376
      %v783 = vmul.f32 %v761, %v782
      %v784 = vrcp.pop %v377
      %v785 = vmul.f32 %v762, %v784
      %v786 = vrcp.pop %v378
      %v787 = vmul.f32 %v763, %v786
      %v788 = vrcp.pop %v379
      %v789 = vmul.f32 %v764, %v788
      %v790 = vrcp.pop %v380
      %v791 = vmul.f32 %v765, %v790
      %v792 = vrcp.pop %v381
      %v793 = vmul.f32 %v766, %v792
      %v794 = vrcp.pop %v382
      %v795 = vmul.f32 %v767, %v794
      %v796 = vrcp.pop %v383
      %v797 = vmul.f32 %v768, %v796
      %v798 = vrcp.pop %v384
      %v799 = vmul.f32 %v769, %v798
      %v800 = vrcp.pop %v385
      %v801 = vmul.f32 %v770, %v800
      %v802 = vrcp.pop %v386
      %v803 = vmul.f32 %v771, %v802
      %v804 = vmax.f32 %v371, -1.0
      %v805 = vmax.f32 %v372, -1.0
      %v806 = vmax.f32 %v373, -1.0
      %v807 = vmax.f32 %v374, -1.0
      %v808 = vmax.f32 %v375, -1.0
      %v809 = vmax.f32 %v376, -1.0
      %v810 = vmax.f32 %v377, -1.0
      %v811 = vmax.f32 %v378, -1.0
      %v812 = vmax.f32 %v379, -1.0
      %v813 = vmax.f32 %v380, -1.0
      %v814 = vmax.f32 %v381, -1.0
      %v815 = vmax.f32 %v382, -1.0
      %v816 = vmax.f32 %v383, -1.0
      %v817 = vmax.f32 %v384, -1.0
      %v818 = vmax.f32 %v385, -1.0
      %v819 = vmax.f32 %v386, -1.0
      %v820 = vmin.f32 %v804, 1.0
      %v821 = vmin.f32 %v805, 1.0
      %v822 = vmin.f32 %v806, 1.0
      %v823 = vmin.f32 %v807, 1.0
      %v824 = vmin.f32 %v808, 1.0
      %v825 = vmin.f32 %v809, 1.0
      %v826 = vmin.f32 %v810, 1.0
      %v827 = vmin.f32 %v811, 1.0
      %v828 = vmin.f32 %v812, 1.0
      %v829 = vmin.f32 %v813, 1.0
      %v830 = vmin.f32 %v814, 1.0
      %v831 = vmin.f32 %v815, 1.0
      %v832 = vmin.f32 %v816, 1.0
      %v833 = vmin.f32 %v817, 1.0
      %v834 = vmin.f32 %v818, 1.0
      %v835 = vmin.f32 %v819, 1.0
      %v836 = vadd.f32 %v820, 1.0
      %v837 = vadd.f32 %v821, 1.0
      %v838 = vadd.f32 %v822, 1.0
      %v839 = vadd.f32 %v823, 1.0
      %v840 = vadd.f32 %v824, 1.0
      %v841 = vadd.f32 %v825, 1.0
      %v842 = vadd.f32 %v826, 1.0
      %v843 = vadd.f32 %v827, 1.0
      %v844 = vadd.f32 %v828, 1.0
      %v845 = vadd.f32 %v829, 1.0
      %v846 = vadd.f32 %v830, 1.0
      %v847 = vadd.f32 %v831, 1.0
      %v848 = vadd.f32 %v832, 1.0
      %v849 = vadd.f32 %v833, 1.0
      %v850 = vadd.f32 %v834, 1.0
      %v851 = vadd.f32 %v835, 1.0
      %v852 = vsub.f32 1.0, %v820
      %v853 = vsub.f32 1.0, %v821
      %v854 = vsub.f32 1.0, %v822
      %v855 = vsub.f32 1.0, %v823
      %v856 = vsub.f32 1.0, %v824
      %v857 = vsub.f32 1.0, %v825
      %v858 = vsub.f32 1.0, %v826
      %v859 = vsub.f32 1.0, %v827
      %v860 = vsub.f32 1.0, %v828
      %v861 = vsub.f32 1.0, %v829
      %v862 = vsub.f32 1.0, %v830
      %v863 = vsub.f32 1.0, %v831
      %v864 = vsub.f32 1.0, %v832
      %v865 = vsub.f32 1.0, %v833
      %v866 = vsub.f32 1.0, %v834
      %v867 = vsub.f32 1.0, %v835
      %v868 = vrcp.pop %v852
      %v869 = vmul.f32 %v836, %v868
      %v870 = vrcp.pop %v853
      %v871 = vmul.f32 %v837, %v870
      %v872 = vrcp.pop %v854
      %v873 = vmul.f32 %v838, %v872
      %v874 = vrcp.pop %v855
      %v875 = vmul.f32 %v839, %v874
      %v876 = vrcp.pop %v856
      %v877 = vmul.f32 %v840, %v876
      %v878 = vrcp.pop %v857
      %v879 = vmul.f32 %v841, %v878
      %v880 = vrcp.pop %v858
      %v881 = vmul.f32 %v842, %v880
      %v882 = vrcp.pop %v859
      %v883 = vmul.f32 %v843, %v882
      %v884 = vrcp.pop %v860
      %v885 = vmul.f32 %v844, %v884
      %v886 = vrcp.pop %v861
      %v887 = vmul.f32 %v845, %v886
      %v888 = vrcp.pop %v862
      %v889 = vmul.f32 %v846, %v888
      %v890 = vrcp.pop %v863
      %v891 = vmul.f32 %v847, %v890
      %v892 = vrcp.pop %v864
      %v893 = vmul.f32 %v848, %v892
      %v894 = vrcp.pop %v865
      %v895 = vmul.f32 %v849, %v894
      %v896 = vrcp.pop %v866
      %v897 = vmul.f32 %v850, %v896
      %v898 = vrcp.pop %v867
      %v899 = vmul.f32 %v851, %v898
      %v900 = vlog2.pop %v869
      %v901 = vmul.f32 %v900, 0.6931472
      %v902 = vlog2.pop %v871
      %v903 = vmul.f32 %v902, 0.6931472
      %v904 = vlog2.pop %v873
      %v905 = vmul.f32 %v904, 0.6931472
      %v906 = vlog2.pop %v875
      %v907 = vmul.f32 %v906, 0.6931472
      %v908 = vlog2.pop %v877
      %v909 = vmul.f32 %v908, 0.6931472
      %v910 = vlog2.pop %v879
      %v911 = vmul.f32 %v910, 0.6931472
      %v912 = vlog2.pop %v881
      %v913 = vmul.f32 %v912, 0.6931472
      %v914 = vlog2.pop %v883
      %v915 = vmul.f32 %v914, 0.6931472
      %v916 = vlog2.pop %v885
      %v917 = vmul.f32 %v916, 0.6931472
      %v918 = vlog2.pop %v887
      %v919 = vmul.f32 %v918, 0.6931472
      %v920 = vlog2.pop %v889
      %v921 = vmul.f32 %v920, 0.6931472
      %v922 = vlog2.pop %v891
      %v923 = vmul.f32 %v922, 0.6931472
      %v924 = vlog2.pop %v893
      %v925 = vmul.f32 %v924, 0.6931472
      %v926 = vlog2.pop %v895
      %v927 = vmul.f32 %v926, 0.6931472
      %v928 = vlog2.pop %v897
      %v929 = vmul.f32 %v928, 0.6931472
      %v930 = vlog2.pop %v899
      %v931 = vmul.f32 %v930, 0.6931472
      %v932 = vmul.f32 %v901, 0.5
      %v933 = vmul.f32 %v903, 0.5
      %v934 = vmul.f32 %v905, 0.5
      %v935 = vmul.f32 %v907, 0.5
      %v936 = vmul.f32 %v909, 0.5
      %v937 = vmul.f32 %v911, 0.5
      %v938 = vmul.f32 %v913, 0.5
      %v939 = vmul.f32 %v915, 0.5
      %v940 = vmul.f32 %v917, 0.5
      %v941 = vmul.f32 %v919, 0.5
      %v942 = vmul.f32 %v921, 0.5
      %v943 = vmul.f32 %v923, 0.5
      %v944 = vmul.f32 %v925, 0.5
      %v945 = vmul.f32 %v927, 0.5
      %v946 = vmul.f32 %v929, 0.5
      %v947 = vmul.f32 %v931, 0.5
      %v948 = vmul.f32 %v773, %v932
      %v949 = vmul.f32 %v775, %v933
      %v950 = vmul.f32 %v777, %v934
      %v951 = vmul.f32 %v779, %v935
      %v952 = vmul.f32 %v781, %v936
      %v953 = vmul.f32 %v783, %v937
      %v954 = vmul.f32 %v785, %v938
      %v955 = vmul.f32 %v787, %v939
      %v956 = vmul.f32 %v789, %v940
      %v957 = vmul.f32 %v791, %v941
      %v958 = vmul.f32 %v793, %v942
      %v959 = vmul.f32 %v795, %v943
      %v960 = vmul.f32 %v797, %v944
      %v961 = vmul.f32 %v799, %v945
      %v962 = vmul.f32 %v801, %v946
      %v963 = vmul.f32 %v803, %v947
      %v964 = vtanh.pop %v948
      %v965 = vtanh.pop %v949
      %v966 = vtanh.pop %v950
      %v967 = vtanh.pop %v951
      %v968 = vtanh.pop %v952
      %v969 = vtanh.pop %v953
      %v970 = vtanh.pop %v954
      %v971 = vtanh.pop %v955
      %v972 = vtanh.pop %v956
      %v973 = vtanh.pop %v957
      %v974 = vtanh.pop %v958
      %v975 = vtanh.pop %v959
      %v976 = vtanh.pop %v960
      %v977 = vtanh.pop %v961
      %v978 = vtanh.pop %v962
      %v979 = vtanh.pop %v963
      %v980 = vmul.f32 %v964, %v502
      %v981 = vmul.f32 %v965, %v507
      %v982 = vmul.f32 %v966, %v512
      %v983 = vmul.f32 %v967, %v517
      %v984 = vmul.f32 %v968, %v522
      %v985 = vmul.f32 %v969, %v527
      %v986 = vmul.f32 %v970, %v532
      %v987 = vmul.f32 %v971, %v537
      %v988 = vmul.f32 %v972, %v542
      %v989 = vmul.f32 %v973, %v547
      %v990 = vmul.f32 %v974, %v552
      %v991 = vmul.f32 %v975, %v557
      %v992 = vmul.f32 %v976, %v562
      %v993 = vmul.f32 %v977, %v567
      %v994 = vmul.f32 %v978, %v572
      %v995 = vmul.f32 %v979, %v577
      %v996 = vrcp.pop %v756
      %v997 = vmul.f32 %v980, %v996
      %v998 = vrcp.pop %v757
      %v999 = vmul.f32 %v981, %v998
      %v1000 = vrcp.pop %v758
      %v1001 = vmul.f32 %v982, %v1000
      %v1002 = vrcp.pop %v759
      %v1003 = vmul.f32 %v983, %v1002
      %v1004 = vrcp.pop %v760
      %v1005 = vmul.f32 %v984, %v1004
      %v1006 = vrcp.pop %v761
      %v1007 = vmul.f32 %v985, %v1006
      %v1008 = vrcp.pop %v762
      %v1009 = vmul.f32 %v986, %v1008
      %v1010 = vrcp.pop %v763
      %v1011 = vmul.f32 %v987, %v1010
      %v1012 = vrcp.pop %v764
      %v1013 = vmul.f32 %v988, %v1012
      %v1014 = vrcp.pop %v765
      %v1015 = vmul.f32 %v989, %v1014
      %v1016 = vrcp.pop %v766
      %v1017 = vmul.f32 %v990, %v1016
      %v1018 = vrcp.pop %v767
      %v1019 = vmul.f32 %v991, %v1018
      %v1020 = vrcp.pop %v768
      %v1021 = vmul.f32 %v992, %v1020
      %v1022 = vrcp.pop %v769
      %v1023 = vmul.f32 %v993, %v1022
      %v1024 = vrcp.pop %v770
      %v1025 = vmul.f32 %v994, %v1024
      %v1026 = vrcp.pop %v771
      %v1027 = vmul.f32 %v995, %v1026
      %v1028 = vand.u32 2147483647, %v502
      %v1029 = vand.u32 2147483647, %v507
      %v1030 = vand.u32 2147483647, %v512
      %v1031 = vand.u32 2147483647, %v517
      %v1032 = vand.u32 2147483647, %v522
      %v1033 = vand.u32 2147483647, %v527
      %v1034 = vand.u32 2147483647, %v532
      %v1035 = vand.u32 2147483647, %v537
      %v1036 = vand.u32 2147483647, %v542
      %v1037 = vand.u32 2147483647, %v547
      %v1038 = vand.u32 2147483647, %v552
      %v1039 = vand.u32 2147483647, %v557
      %v1040 = vand.u32 2147483647, %v562
      %v1041 = vand.u32 2147483647, %v567
      %v1042 = vand.u32 2147483647, %v572
      %v1043 = vand.u32 2147483647, %v577
      %v1044 = vsel %vm210, %v1028, 0.0
      %1045 = vadd.xlane.f32.xlu0 %v1044
      %v1046 = vpop.xlane.xlu0 %1045
      %v1047 = vsel %vm210, %v1029, 0.0
      %1048 = vadd.xlane.f32.xlu0 %v1047
      %v1049 = vpop.xlane.xlu0 %1048
      %v1050 = vsel %vm210, %v1030, 0.0
      %1051 = vadd.xlane.f32.xlu0 %v1050
      %v1052 = vpop.xlane.xlu0 %1051
      %v1053 = vsel %vm210, %v1031, 0.0
      %1054 = vadd.xlane.f32.xlu0 %v1053
      %v1055 = vpop.xlane.xlu0 %1054
      %v1056 = vsel %vm210, %v1032, 0.0
      %1057 = vadd.xlane.f32.xlu0 %v1056
      %v1058 = vpop.xlane.xlu0 %1057
      %v1059 = vsel %vm210, %v1033, 0.0
      %1060 = vadd.xlane.f32.xlu0 %v1059
      %v1061 = vpop.xlane.xlu0 %1060
      %v1062 = vsel %vm210, %v1034, 0.0
      %1063 = vadd.xlane.f32.xlu0 %v1062
      %v1064 = vpop.xlane.xlu0 %1063
      %v1065 = vsel %vm210, %v1035, 0.0
      %1066 = vadd.xlane.f32.xlu0 %v1065
      %v1067 = vpop.xlane.xlu0 %1066
      %v1068 = vsel %vm210, %v1036, 0.0
      %1069 = vadd.xlane.f32.xlu0 %v1068
      %v1070 = vpop.xlane.xlu0 %1069
      %v1071 = vsel %vm210, %v1037, 0.0
      %1072 = vadd.xlane.f32.xlu0 %v1071
      %v1073 = vpop.xlane.xlu0 %1072
      %v1074 = vsel %vm210, %v1038, 0.0
      %1075 = vadd.xlane.f32.xlu0 %v1074
      %v1076 = vpop.xlane.xlu0 %1075
      %v1077 = vsel %vm210, %v1039, 0.0
      %1078 = vadd.xlane.f32.xlu0 %v1077
      %v1079 = vpop.xlane.xlu0 %1078
      %v1080 = vsel %vm210, %v1040, 0.0
      %1081 = vadd.xlane.f32.xlu0 %v1080
      %v1082 = vpop.xlane.xlu0 %1081
      %v1083 = vsel %vm210, %v1041, 0.0
      %1084 = vadd.xlane.f32.xlu0 %v1083
      %v1085 = vpop.xlane.xlu0 %1084
      %v1086 = vsel %vm210, %v1042, 0.0
      %1087 = vadd.xlane.f32.xlu0 %v1086
      %v1088 = vpop.xlane.xlu0 %1087
      %v1089 = vsel %vm210, %v1043, 0.0
      %1090 = vadd.xlane.f32.xlu0 %v1089
      %v1091 = vpop.xlane.xlu0 %1090
      %vm1092 = vcmp.eq.f32.partialorder %v1046, 0.0
      %vm1093 = vcmp.eq.f32.partialorder %v1049, 0.0
      %vm1094 = vcmp.eq.f32.partialorder %v1052, 0.0
      %vm1095 = vcmp.eq.f32.partialorder %v1055, 0.0
      %vm1096 = vcmp.eq.f32.partialorder %v1058, 0.0
      %vm1097 = vcmp.eq.f32.partialorder %v1061, 0.0
      %vm1098 = vcmp.eq.f32.partialorder %v1064, 0.0
      %vm1099 = vcmp.eq.f32.partialorder %v1067, 0.0
      %vm1100 = vcmp.eq.f32.partialorder %v1070, 0.0
      %vm1101 = vcmp.eq.f32.partialorder %v1073, 0.0
      %vm1102 = vcmp.eq.f32.partialorder %v1076, 0.0
      %vm1103 = vcmp.eq.f32.partialorder %v1079, 0.0
      %vm1104 = vcmp.eq.f32.partialorder %v1082, 0.0
      %vm1105 = vcmp.eq.f32.partialorder %v1085, 0.0
      %vm1106 = vcmp.eq.f32.partialorder %v1088, 0.0
      %vm1107 = vcmp.eq.f32.partialorder %v1091, 0.0
      %v1108 = vsel %vm1092, 1, 0
      %v1109 = vsel %vm1093, 1, 0
      %v1110 = vsel %vm1094, 1, 0
      %v1111 = vsel %vm1095, 1, 0
      %v1112 = vsel %vm1096, 1, 0
      %v1113 = vsel %vm1097, 1, 0
      %v1114 = vsel %vm1098, 1, 0
      %v1115 = vsel %vm1099, 1, 0
      %v1116 = vsel %vm1100, 1, 0
      %v1117 = vsel %vm1101, 1, 0
      %v1118 = vsel %vm1102, 1, 0
      %v1119 = vsel %vm1103, 1, 0
      %v1120 = vsel %vm1104, 1, 0
      %v1121 = vsel %vm1105, 1, 0
      %v1122 = vsel %vm1106, 1, 0
      %v1123 = vsel %vm1107, 1, 0
      %vm1124 = vcmp.eq.s32.totalorder %v1108, 1
      %vm1125 = vcmp.eq.s32.totalorder %v1109, 1
      %vm1126 = vcmp.eq.s32.totalorder %v1110, 1
      %vm1127 = vcmp.eq.s32.totalorder %v1111, 1
      %vm1128 = vcmp.eq.s32.totalorder %v1112, 1
      %vm1129 = vcmp.eq.s32.totalorder %v1113, 1
      %vm1130 = vcmp.eq.s32.totalorder %v1114, 1
      %vm1131 = vcmp.eq.s32.totalorder %v1115, 1
      %vm1132 = vcmp.eq.s32.totalorder %v1116, 1
      %vm1133 = vcmp.eq.s32.totalorder %v1117, 1
      %vm1134 = vcmp.eq.s32.totalorder %v1118, 1
      %vm1135 = vcmp.eq.s32.totalorder %v1119, 1
      %vm1136 = vcmp.eq.s32.totalorder %v1120, 1
      %vm1137 = vcmp.eq.s32.totalorder %v1121, 1
      %vm1138 = vcmp.eq.s32.totalorder %v1122, 1
      %vm1139 = vcmp.eq.s32.totalorder %v1123, 1
      %v1140 = vsel %vm1124, 0.0, %v997
      %v1141 = vsel %vm1125, 0.0, %v999
      %v1142 = vsel %vm1126, 0.0, %v1001
      %v1143 = vsel %vm1127, 0.0, %v1003
      %v1144 = vsel %vm1128, 0.0, %v1005
      %v1145 = vsel %vm1129, 0.0, %v1007
      %v1146 = vsel %vm1130, 0.0, %v1009
      %v1147 = vsel %vm1131, 0.0, %v1011
      %v1148 = vsel %vm1132, 0.0, %v1013
      %v1149 = vsel %vm1133, 0.0, %v1015
      %v1150 = vsel %vm1134, 0.0, %v1017
      %v1151 = vsel %vm1135, 0.0, %v1019
      %v1152 = vsel %vm1136, 0.0, %v1021
      %v1153 = vsel %vm1137, 0.0, %v1023
      %v1154 = vsel %vm1138, 0.0, %v1025
      %v1155 = vsel %vm1139, 0.0, %v1027
      %v1156 = vmul.f32 %v1140, %v1140
      %v1157 = vmul.f32 %v1141, %v1141
      %v1158 = vmul.f32 %v1142, %v1142
      %v1159 = vmul.f32 %v1143, %v1143
      %v1160 = vmul.f32 %v1144, %v1144
      %v1161 = vmul.f32 %v1145, %v1145
      %v1162 = vmul.f32 %v1146, %v1146
      %v1163 = vmul.f32 %v1147, %v1147
      %v1164 = vmul.f32 %v1148, %v1148
      %v1165 = vmul.f32 %v1149, %v1149
      %v1166 = vmul.f32 %v1150, %v1150
      %v1167 = vmul.f32 %v1151, %v1151
      %v1168 = vmul.f32 %v1152, %v1152
      %v1169 = vmul.f32 %v1153, %v1153
      %v1170 = vmul.f32 %v1154, %v1154
      %v1171 = vmul.f32 %v1155, %v1155
      %v1172 = vsel %vm210, %v1156, 0.0
      %1173 = vadd.xlane.f32.xlu0 %v1172
      %v1174 = vpop.xlane.xlu0 %1173
      %v1175 = vsel %vm210, %v1157, 0.0
      %1176 = vadd.xlane.f32.xlu0 %v1175
      %v1177 = vpop.xlane.xlu0 %1176
      %v1178 = vsel %vm210, %v1158, 0.0
      %1179 = vadd.xlane.f32.xlu0 %v1178
      %v1180 = vpop.xlane.xlu0 %1179
      %v1181 = vsel %vm210, %v1159, 0.0
      %1182 = vadd.xlane.f32.xlu0 %v1181
      %v1183 = vpop.xlane.xlu0 %1182
      %v1184 = vsel %vm210, %v1160, 0.0
      %1185 = vadd.xlane.f32.xlu0 %v1184
      %v1186 = vpop.xlane.xlu0 %1185
      %v1187 = vsel %vm210, %v1161, 0.0
      %1188 = vadd.xlane.f32.xlu0 %v1187
      %v1189 = vpop.xlane.xlu0 %1188
      %v1190 = vsel %vm210, %v1162, 0.0
      %1191 = vadd.xlane.f32.xlu0 %v1190
      %v1192 = vpop.xlane.xlu0 %1191
      %v1193 = vsel %vm210, %v1163, 0.0
      %1194 = vadd.xlane.f32.xlu0 %v1193
      %v1195 = vpop.xlane.xlu0 %1194
      %v1196 = vsel %vm210, %v1164, 0.0
      %1197 = vadd.xlane.f32.xlu0 %v1196
      %v1198 = vpop.xlane.xlu0 %1197
      %v1199 = vsel %vm210, %v1165, 0.0
      %1200 = vadd.xlane.f32.xlu0 %v1199
      %v1201 = vpop.xlane.xlu0 %1200
      %v1202 = vsel %vm210, %v1166, 0.0
      %1203 = vadd.xlane.f32.xlu0 %v1202
      %v1204 = vpop.xlane.xlu0 %1203
      %v1205 = vsel %vm210, %v1167, 0.0
      %1206 = vadd.xlane.f32.xlu0 %v1205
      %v1207 = vpop.xlane.xlu0 %1206
      %v1208 = vsel %vm210, %v1168, 0.0
      %1209 = vadd.xlane.f32.xlu0 %v1208
      %v1210 = vpop.xlane.xlu0 %1209
      %v1211 = vsel %vm210, %v1169, 0.0
      %1212 = vadd.xlane.f32.xlu0 %v1211
      %v1213 = vpop.xlane.xlu0 %1212
      %v1214 = vsel %vm210, %v1170, 0.0
      %1215 = vadd.xlane.f32.xlu0 %v1214
      %v1216 = vpop.xlane.xlu0 %1215
      %v1217 = vsel %vm210, %v1171, 0.0
      %1218 = vadd.xlane.f32.xlu0 %v1217
      %v1219 = vpop.xlane.xlu0 %1218
      %v1220 = vrsqrt.pop %v1174
      %v1221 = vmul.f32 %v1174, %v1220
      %vm1222 = vcmp.eq.f32.partialorder %v1174, inf
      %v1223 = vsel %vm1222, %v1174, %v1221
      %vm1224 = vcmp.eq.f32.partialorder %v1174, 0.0
      %v1225 = vand.u32 %v1174, 2147483648
      %v1226 = vsel %vm1224, %v1225, %v1223
      %v1227 = vrsqrt.pop %v1177
      %v1228 = vmul.f32 %v1177, %v1227
      %vm1229 = vcmp.eq.f32.partialorder %v1177, inf
      %v1230 = vsel %vm1229, %v1177, %v1228
      %vm1231 = vcmp.eq.f32.partialorder %v1177, 0.0
      %v1232 = vand.u32 %v1177, 2147483648
      %v1233 = vsel %vm1231, %v1232, %v1230
      %v1234 = vrsqrt.pop %v1180
      %v1235 = vmul.f32 %v1180, %v1234
      %vm1236 = vcmp.eq.f32.partialorder %v1180, inf
      %v1237 = vsel %vm1236, %v1180, %v1235
      %vm1238 = vcmp.eq.f32.partialorder %v1180, 0.0
      %v1239 = vand.u32 %v1180, 2147483648
      %v1240 = vsel %vm1238, %v1239, %v1237
      %v1241 = vrsqrt.pop %v1183
      %v1242 = vmul.f32 %v1183, %v1241
      %vm1243 = vcmp.eq.f32.partialorder %v1183, inf
      %v1244 = vsel %vm1243, %v1183, %v1242
      %vm1245 = vcmp.eq.f32.partialorder %v1183, 0.0
      %v1246 = vand.u32 %v1183, 2147483648
      %v1247 = vsel %vm1245, %v1246, %v1244
      %v1248 = vrsqrt.pop %v1186
      %v1249 = vmul.f32 %v1186, %v1248
      %vm1250 = vcmp.eq.f32.partialorder %v1186, inf
      %v1251 = vsel %vm1250, %v1186, %v1249
      %vm1252 = vcmp.eq.f32.partialorder %v1186, 0.0
      %v1253 = vand.u32 %v1186, 2147483648
      %v1254 = vsel %vm1252, %v1253, %v1251
      %v1255 = vrsqrt.pop %v1189
      %v1256 = vmul.f32 %v1189, %v1255
      %vm1257 = vcmp.eq.f32.partialorder %v1189, inf
      %v1258 = vsel %vm1257, %v1189, %v1256
      %vm1259 = vcmp.eq.f32.partialorder %v1189, 0.0
      %v1260 = vand.u32 %v1189, 2147483648
      %v1261 = vsel %vm1259, %v1260, %v1258
      %v1262 = vrsqrt.pop %v1192
      %v1263 = vmul.f32 %v1192, %v1262
      %vm1264 = vcmp.eq.f32.partialorder %v1192, inf
      %v1265 = vsel %vm1264, %v1192, %v1263
      %vm1266 = vcmp.eq.f32.partialorder %v1192, 0.0
      %v1267 = vand.u32 %v1192, 2147483648
      %v1268 = vsel %vm1266, %v1267, %v1265
      %v1269 = vrsqrt.pop %v1195
      %v1270 = vmul.f32 %v1195, %v1269
      %vm1271 = vcmp.eq.f32.partialorder %v1195, inf
      %v1272 = vsel %vm1271, %v1195, %v1270
      %vm1273 = vcmp.eq.f32.partialorder %v1195, 0.0
      %v1274 = vand.u32 %v1195, 2147483648
      %v1275 = vsel %vm1273, %v1274, %v1272
      %v1276 = vrsqrt.pop %v1198
      %v1277 = vmul.f32 %v1198, %v1276
      %vm1278 = vcmp.eq.f32.partialorder %v1198, inf
      %v1279 = vsel %vm1278, %v1198, %v1277
      %vm1280 = vcmp.eq.f32.partialorder %v1198, 0.0
      %v1281 = vand.u32 %v1198, 2147483648
      %v1282 = vsel %vm1280, %v1281, %v1279
      %v1283 = vrsqrt.pop %v1201
      %v1284 = vmul.f32 %v1201, %v1283
      %vm1285 = vcmp.eq.f32.partialorder %v1201, inf
      %v1286 = vsel %vm1285, %v1201, %v1284
      %vm1287 = vcmp.eq.f32.partialorder %v1201, 0.0
      %v1288 = vand.u32 %v1201, 2147483648
      %v1289 = vsel %vm1287, %v1288, %v1286
      %v1290 = vrsqrt.pop %v1204
      %v1291 = vmul.f32 %v1204, %v1290
      %vm1292 = vcmp.eq.f32.partialorder %v1204, inf
      %v1293 = vsel %vm1292, %v1204, %v1291
      %vm1294 = vcmp.eq.f32.partialorder %v1204, 0.0
      %v1295 = vand.u32 %v1204, 2147483648
      %v1296 = vsel %vm1294, %v1295, %v1293
      %v1297 = vrsqrt.pop %v1207
      %v1298 = vmul.f32 %v1207, %v1297
      %vm1299 = vcmp.eq.f32.partialorder %v1207, inf
      %v1300 = vsel %vm1299, %v1207, %v1298
      %vm1301 = vcmp.eq.f32.partialorder %v1207, 0.0
      %v1302 = vand.u32 %v1207, 2147483648
      %v1303 = vsel %vm1301, %v1302, %v1300
      %v1304 = vrsqrt.pop %v1210
      %v1305 = vmul.f32 %v1210, %v1304
      %vm1306 = vcmp.eq.f32.partialorder %v1210, inf
      %v1307 = vsel %vm1306, %v1210, %v1305
      %vm1308 = vcmp.eq.f32.partialorder %v1210, 0.0
      %v1309 = vand.u32 %v1210, 2147483648
      %v1310 = vsel %vm1308, %v1309, %v1307
      %v1311 = vrsqrt.pop %v1213
      %v1312 = vmul.f32 %v1213, %v1311
      %vm1313 = vcmp.eq.f32.partialorder %v1213, inf
      %v1314 = vsel %vm1313, %v1213, %v1312
      %vm1315 = vcmp.eq.f32.partialorder %v1213, 0.0
      %v1316 = vand.u32 %v1213, 2147483648
      %v1317 = vsel %vm1315, %v1316, %v1314
      %v1318 = vrsqrt.pop %v1216
      %v1319 = vmul.f32 %v1216, %v1318
      %vm1320 = vcmp.eq.f32.partialorder %v1216, inf
      %v1321 = vsel %vm1320, %v1216, %v1319
      %vm1322 = vcmp.eq.f32.partialorder %v1216, 0.0
      %v1323 = vand.u32 %v1216, 2147483648
      %v1324 = vsel %vm1322, %v1323, %v1321
      %v1325 = vrsqrt.pop %v1219
      %v1326 = vmul.f32 %v1219, %v1325
      %vm1327 = vcmp.eq.f32.partialorder %v1219, inf
      %v1328 = vsel %vm1327, %v1219, %v1326
      %vm1329 = vcmp.eq.f32.partialorder %v1219, 0.0
      %v1330 = vand.u32 %v1219, 2147483648
      %v1331 = vsel %vm1329, %v1330, %v1328
      %v1332 = vmax.f32 %v1226, 1e-15
      %v1333 = vmax.f32 %v1233, 1e-15
      %v1334 = vmax.f32 %v1240, 1e-15
      %v1335 = vmax.f32 %v1247, 1e-15
      %v1336 = vmax.f32 %v1254, 1e-15
      %v1337 = vmax.f32 %v1261, 1e-15
      %v1338 = vmax.f32 %v1268, 1e-15
      %v1339 = vmax.f32 %v1275, 1e-15
      %v1340 = vmax.f32 %v1282, 1e-15
      %v1341 = vmax.f32 %v1289, 1e-15
      %v1342 = vmax.f32 %v1296, 1e-15
      %v1343 = vmax.f32 %v1303, 1e-15
      %v1344 = vmax.f32 %v1310, 1e-15
      %v1345 = vmax.f32 %v1317, 1e-15
      %v1346 = vmax.f32 %v1324, 1e-15
      %v1347 = vmax.f32 %v1331, 1e-15
      %vm1348 = vcmp.gt.f32.partialorder %v1332, 0.996
      %vm1349 = vcmp.gt.f32.partialorder %v1333, 0.996
      %vm1350 = vcmp.gt.f32.partialorder %v1334, 0.996
      %vm1351 = vcmp.gt.f32.partialorder %v1335, 0.996
      %vm1352 = vcmp.gt.f32.partialorder %v1336, 0.996
      %vm1353 = vcmp.gt.f32.partialorder %v1337, 0.996
      %vm1354 = vcmp.gt.f32.partialorder %v1338, 0.996
      %vm1355 = vcmp.gt.f32.partialorder %v1339, 0.996
      %vm1356 = vcmp.gt.f32.partialorder %v1340, 0.996
      %vm1357 = vcmp.gt.f32.partialorder %v1341, 0.996
      %vm1358 = vcmp.gt.f32.partialorder %v1342, 0.996
      %vm1359 = vcmp.gt.f32.partialorder %v1343, 0.996
      %vm1360 = vcmp.gt.f32.partialorder %v1344, 0.996
      %vm1361 = vcmp.gt.f32.partialorder %v1345, 0.996
      %vm1362 = vcmp.gt.f32.partialorder %v1346, 0.996
      %vm1363 = vcmp.gt.f32.partialorder %v1347, 0.996
      %v1364 = vrcp.pop %v1332
      %v1365 = vmul.f32 0.996, %v1364
      %v1366 = vrcp.pop %v1333
      %v1367 = vmul.f32 0.996, %v1366
      %v1368 = vrcp.pop %v1334
      %v1369 = vmul.f32 0.996, %v1368
      %v1370 = vrcp.pop %v1335
      %v1371 = vmul.f32 0.996, %v1370
      %v1372 = vrcp.pop %v1336
      %v1373 = vmul.f32 0.996, %v1372
      %v1374 = vrcp.pop %v1337
      %v1375 = vmul.f32 0.996, %v1374
      %v1376 = vrcp.pop %v1338
      %v1377 = vmul.f32 0.996, %v1376
      %v1378 = vrcp.pop %v1339
      %v1379 = vmul.f32 0.996, %v1378
      %v1380 = vrcp.pop %v1340
      %v1381 = vmul.f32 0.996, %v1380
      %v1382 = vrcp.pop %v1341
      %v1383 = vmul.f32 0.996, %v1382
      %v1384 = vrcp.pop %v1342
      %v1385 = vmul.f32 0.996, %v1384
      %v1386 = vrcp.pop %v1343
      %v1387 = vmul.f32 0.996, %v1386
      %v1388 = vrcp.pop %v1344
      %v1389 = vmul.f32 0.996, %v1388
      %v1390 = vrcp.pop %v1345
      %v1391 = vmul.f32 0.996, %v1390
      %v1392 = vrcp.pop %v1346
      %v1393 = vmul.f32 0.996, %v1392
      %v1394 = vrcp.pop %v1347
      %v1395 = vmul.f32 0.996, %v1394
      %v1396 = vmul.f32 %v1140, %v1365
      %v1397 = vmul.f32 %v1141, %v1367
      %v1398 = vmul.f32 %v1142, %v1369
      %v1399 = vmul.f32 %v1143, %v1371
      %v1400 = vmul.f32 %v1144, %v1373
      %v1401 = vmul.f32 %v1145, %v1375
      %v1402 = vmul.f32 %v1146, %v1377
      %v1403 = vmul.f32 %v1147, %v1379
      %v1404 = vmul.f32 %v1148, %v1381
      %v1405 = vmul.f32 %v1149, %v1383
      %v1406 = vmul.f32 %v1150, %v1385
      %v1407 = vmul.f32 %v1151, %v1387
      %v1408 = vmul.f32 %v1152, %v1389
      %v1409 = vmul.f32 %v1153, %v1391
      %v1410 = vmul.f32 %v1154, %v1393
      %v1411 = vmul.f32 %v1155, %v1395
      %v1412 = vsel %vm1348, 1, 0
      %v1413 = vsel %vm1349, 1, 0
      %v1414 = vsel %vm1350, 1, 0
      %v1415 = vsel %vm1351, 1, 0
      %v1416 = vsel %vm1352, 1, 0
      %v1417 = vsel %vm1353, 1, 0
      %v1418 = vsel %vm1354, 1, 0
      %v1419 = vsel %vm1355, 1, 0
      %v1420 = vsel %vm1356, 1, 0
      %v1421 = vsel %vm1357, 1, 0
      %v1422 = vsel %vm1358, 1, 0
      %v1423 = vsel %vm1359, 1, 0
      %v1424 = vsel %vm1360, 1, 0
      %v1425 = vsel %vm1361, 1, 0
      %v1426 = vsel %vm1362, 1, 0
      %v1427 = vsel %vm1363, 1, 0
      %vm1428 = vcmp.eq.s32.totalorder %v1412, 1
      %vm1429 = vcmp.eq.s32.totalorder %v1413, 1
      %vm1430 = vcmp.eq.s32.totalorder %v1414, 1
      %vm1431 = vcmp.eq.s32.totalorder %v1415, 1
      %vm1432 = vcmp.eq.s32.totalorder %v1416, 1
      %vm1433 = vcmp.eq.s32.totalorder %v1417, 1
      %vm1434 = vcmp.eq.s32.totalorder %v1418, 1
      %vm1435 = vcmp.eq.s32.totalorder %v1419, 1
      %vm1436 = vcmp.eq.s32.totalorder %v1420, 1
      %vm1437 = vcmp.eq.s32.totalorder %v1421, 1
      %vm1438 = vcmp.eq.s32.totalorder %v1422, 1
      %vm1439 = vcmp.eq.s32.totalorder %v1423, 1
      %vm1440 = vcmp.eq.s32.totalorder %v1424, 1
      %vm1441 = vcmp.eq.s32.totalorder %v1425, 1
      %vm1442 = vcmp.eq.s32.totalorder %v1426, 1
      %vm1443 = vcmp.eq.s32.totalorder %v1427, 1
      %v1444 = vsel %vm1428, %v1396, %v1140
      %v1445 = vsel %vm1429, %v1397, %v1141
      %v1446 = vsel %vm1430, %v1398, %v1142
      %v1447 = vsel %vm1431, %v1399, %v1143
      %v1448 = vsel %vm1432, %v1400, %v1144
      %v1449 = vsel %vm1433, %v1401, %v1145
      %v1450 = vsel %vm1434, %v1402, %v1146
      %v1451 = vsel %vm1435, %v1403, %v1147
      %v1452 = vsel %vm1436, %v1404, %v1148
      %v1453 = vsel %vm1437, %v1405, %v1149
      %v1454 = vsel %vm1438, %v1406, %v1150
      %v1455 = vsel %vm1439, %v1407, %v1151
      %v1456 = vsel %vm1440, %v1408, %v1152
      %v1457 = vsel %vm1441, %v1409, %v1153
      %v1458 = vsel %vm1442, %v1410, %v1154
      %v1459 = vsel %vm1443, %v1411, %v1155
      %v1460 = vld [vmem:[%s2] sm:$0x1]
      %v1461 = vmul.f32 %v1444, %v1444
      %v1462 = vmul.f32 %v1445, %v1445
      %v1463 = vmul.f32 %v1446, %v1446
      %v1464 = vmul.f32 %v1447, %v1447
      %v1465 = vmul.f32 %v1448, %v1448
      %v1466 = vmul.f32 %v1449, %v1449
      %v1467 = vmul.f32 %v1450, %v1450
      %v1468 = vmul.f32 %v1451, %v1451
      %v1469 = vmul.f32 %v1452, %v1452
      %v1470 = vmul.f32 %v1453, %v1453
      %v1471 = vmul.f32 %v1454, %v1454
      %v1472 = vmul.f32 %v1455, %v1455
      %v1473 = vmul.f32 %v1456, %v1456
      %v1474 = vmul.f32 %v1457, %v1457
      %v1475 = vmul.f32 %v1458, %v1458
      %v1476 = vmul.f32 %v1459, %v1459
      %v1477 = vsel %vm210, %v1461, 0.0
      %1478 = vadd.xlane.f32.xlu0 %v1477
      %v1479 = vpop.xlane.xlu0 %1478
      %v1480 = vsel %vm210, %v1462, 0.0
      %1481 = vadd.xlane.f32.xlu0 %v1480
      %v1482 = vpop.xlane.xlu0 %1481
      %v1483 = vsel %vm210, %v1463, 0.0
      %1484 = vadd.xlane.f32.xlu0 %v1483
      %v1485 = vpop.xlane.xlu0 %1484
      %v1486 = vsel %vm210, %v1464, 0.0
      %1487 = vadd.xlane.f32.xlu0 %v1486
      %v1488 = vpop.xlane.xlu0 %1487
      %v1489 = vsel %vm210, %v1465, 0.0
      %1490 = vadd.xlane.f32.xlu0 %v1489
      %v1491 = vpop.xlane.xlu0 %1490
      %v1492 = vsel %vm210, %v1466, 0.0
      %1493 = vadd.xlane.f32.xlu0 %v1492
      %v1494 = vpop.xlane.xlu0 %1493
      %v1495 = vsel %vm210, %v1467, 0.0
      %1496 = vadd.xlane.f32.xlu0 %v1495
      %v1497 = vpop.xlane.xlu0 %1496
      %v1498 = vsel %vm210, %v1468, 0.0
      %1499 = vadd.xlane.f32.xlu0 %v1498
      %v1500 = vpop.xlane.xlu0 %1499
      %v1501 = vsel %vm210, %v1469, 0.0
      %1502 = vadd.xlane.f32.xlu0 %v1501
      %v1503 = vpop.xlane.xlu0 %1502
      %v1504 = vsel %vm210, %v1470, 0.0
      %1505 = vadd.xlane.f32.xlu0 %v1504
      %v1506 = vpop.xlane.xlu0 %1505
      %v1507 = vsel %vm210, %v1471, 0.0
      %1508 = vadd.xlane.f32.xlu0 %v1507
      %v1509 = vpop.xlane.xlu0 %1508
      %v1510 = vsel %vm210, %v1472, 0.0
      %1511 = vadd.xlane.f32.xlu0 %v1510
      %v1512 = vpop.xlane.xlu0 %1511
      %v1513 = vsel %vm210, %v1473, 0.0
      %1514 = vadd.xlane.f32.xlu0 %v1513
      %v1515 = vpop.xlane.xlu0 %1514
      %v1516 = vsel %vm210, %v1474, 0.0
      %1517 = vadd.xlane.f32.xlu0 %v1516
      %v1518 = vpop.xlane.xlu0 %1517
      %v1519 = vsel %vm210, %v1475, 0.0
      %1520 = vadd.xlane.f32.xlu0 %v1519
      %v1521 = vpop.xlane.xlu0 %1520
      %v1522 = vsel %vm210, %v1476, 0.0
      %1523 = vadd.xlane.f32.xlu0 %v1522
      %v1524 = vpop.xlane.xlu0 %1523
      %v1525 = vmul.f32 %v1460, %v1460
      %vm1526 = vcmask 253952
      %v1527 = vsel %vm1526, %v1525, 0.0
      %1528 = vadd.xlane.f32.xlu0 %v1527
      %v1529 = vpop.xlane.xlu0 %1528
      %v1531 = vlaneseq
      %v1532 = vshrl.u32 %v1531, 7
      %v1533 = vsub.s32 0, %v1532
      %v1534 = vrot.slane %v1460, %v1533
      %v1536 = vmul.f32 %v1444, %v1534
      %v1537 = vmul.f32 %v1445, %v1534
      %v1538 = vmul.f32 %v1446, %v1534
      %v1539 = vmul.f32 %v1447, %v1534
      %v1540 = vmul.f32 %v1448, %v1534
      %v1541 = vmul.f32 %v1449, %v1534
      %v1542 = vmul.f32 %v1450, %v1534
      %v1543 = vmul.f32 %v1451, %v1534
      %v1544 = vmul.f32 %v1452, %v1534
      %v1545 = vmul.f32 %v1453, %v1534
      %v1546 = vmul.f32 %v1454, %v1534
      %v1547 = vmul.f32 %v1455, %v1534
      %v1548 = vmul.f32 %v1456, %v1534
      %v1549 = vmul.f32 %v1457, %v1534
      %v1550 = vmul.f32 %v1458, %v1534
      %v1551 = vmul.f32 %v1459, %v1534
      %v1552 = vsel %vm210, %v1536, 0.0
      %1553 = vadd.xlane.f32.xlu0 %v1552
      %v1554 = vpop.xlane.xlu0 %1553
      %v1555 = vsel %vm210, %v1537, 0.0
      %1556 = vadd.xlane.f32.xlu0 %v1555
      %v1557 = vpop.xlane.xlu0 %1556
      %v1558 = vsel %vm210, %v1538, 0.0
      %1559 = vadd.xlane.f32.xlu0 %v1558
      %v1560 = vpop.xlane.xlu0 %1559
      %v1561 = vsel %vm210, %v1539, 0.0
      %1562 = vadd.xlane.f32.xlu0 %v1561
      %v1563 = vpop.xlane.xlu0 %1562
      %v1564 = vsel %vm210, %v1540, 0.0
      %1565 = vadd.xlane.f32.xlu0 %v1564
      %v1566 = vpop.xlane.xlu0 %1565
      %v1567 = vsel %vm210, %v1541, 0.0
      %1568 = vadd.xlane.f32.xlu0 %v1567
      %v1569 = vpop.xlane.xlu0 %1568
      %v1570 = vsel %vm210, %v1542, 0.0
      %1571 = vadd.xlane.f32.xlu0 %v1570
      %v1572 = vpop.xlane.xlu0 %1571
      %v1573 = vsel %vm210, %v1543, 0.0
      %1574 = vadd.xlane.f32.xlu0 %v1573
      %v1575 = vpop.xlane.xlu0 %1574
      %v1576 = vsel %vm210, %v1544, 0.0
      %1577 = vadd.xlane.f32.xlu0 %v1576
      %v1578 = vpop.xlane.xlu0 %1577
      %v1579 = vsel %vm210, %v1545, 0.0
      %1580 = vadd.xlane.f32.xlu0 %v1579
      %v1581 = vpop.xlane.xlu0 %1580
      %v1582 = vsel %vm210, %v1546, 0.0
      %1583 = vadd.xlane.f32.xlu0 %v1582
      %v1584 = vpop.xlane.xlu0 %1583
      %v1585 = vsel %vm210, %v1547, 0.0
      %1586 = vadd.xlane.f32.xlu0 %v1585
      %v1587 = vpop.xlane.xlu0 %1586
      %v1588 = vsel %vm210, %v1548, 0.0
      %1589 = vadd.xlane.f32.xlu0 %v1588
      %v1590 = vpop.xlane.xlu0 %1589
      %v1591 = vsel %vm210, %v1549, 0.0
      %1592 = vadd.xlane.f32.xlu0 %v1591
      %v1593 = vpop.xlane.xlu0 %1592
      %v1594 = vsel %vm210, %v1550, 0.0
      %1595 = vadd.xlane.f32.xlu0 %v1594
      %v1596 = vpop.xlane.xlu0 %1595
      %v1597 = vsel %vm210, %v1551, 0.0
      %1598 = vadd.xlane.f32.xlu0 %v1597
      %v1599 = vpop.xlane.xlu0 %1598
      %v1600 = vmul.f32 %v1554, 2.0
      %v1601 = vmul.f32 %v1557, 2.0
      %v1602 = vmul.f32 %v1560, 2.0
      %v1603 = vmul.f32 %v1563, 2.0
      %v1604 = vmul.f32 %v1566, 2.0
      %v1605 = vmul.f32 %v1569, 2.0
      %v1606 = vmul.f32 %v1572, 2.0
      %v1607 = vmul.f32 %v1575, 2.0
      %v1608 = vmul.f32 %v1578, 2.0
      %v1609 = vmul.f32 %v1581, 2.0
      %v1610 = vmul.f32 %v1584, 2.0
      %v1611 = vmul.f32 %v1587, 2.0
      %v1612 = vmul.f32 %v1590, 2.0
      %v1613 = vmul.f32 %v1593, 2.0
      %v1614 = vmul.f32 %v1596, 2.0
      %v1615 = vmul.f32 %v1599, 2.0
      %v1616 = vadd.f32 %v1600, 1.0
      %v1617 = vadd.f32 %v1601, 1.0
      %v1618 = vadd.f32 %v1602, 1.0
      %v1619 = vadd.f32 %v1603, 1.0
      %v1620 = vadd.f32 %v1604, 1.0
      %v1621 = vadd.f32 %v1605, 1.0
      %v1622 = vadd.f32 %v1606, 1.0
      %v1623 = vadd.f32 %v1607, 1.0
      %v1624 = vadd.f32 %v1608, 1.0
      %v1625 = vadd.f32 %v1609, 1.0
      %v1626 = vadd.f32 %v1610, 1.0
      %v1627 = vadd.f32 %v1611, 1.0
      %v1628 = vadd.f32 %v1612, 1.0
      %v1629 = vadd.f32 %v1613, 1.0
      %v1630 = vadd.f32 %v1614, 1.0
      %v1631 = vadd.f32 %v1615, 1.0
      %v1632 = vlaneseq
      %v1633 = vshrl.u32 %v1632, 7
      %v1634 = vsub.s32 0, %v1633
      %v1635 = vrot.slane %v1529, %v1634
      %v1636 = vadd.f32 %v1616, %v1635
      %v1637 = vadd.f32 %v1617, %v1635
      %v1638 = vadd.f32 %v1618, %v1635
      %v1639 = vadd.f32 %v1619, %v1635
      %v1640 = vadd.f32 %v1620, %v1635
      %v1641 = vadd.f32 %v1621, %v1635
      %v1642 = vadd.f32 %v1622, %v1635
      %v1643 = vadd.f32 %v1623, %v1635
      %v1644 = vadd.f32 %v1624, %v1635
      %v1645 = vadd.f32 %v1625, %v1635
      %v1646 = vadd.f32 %v1626, %v1635
      %v1647 = vadd.f32 %v1627, %v1635
      %v1648 = vadd.f32 %v1628, %v1635
      %v1649 = vadd.f32 %v1629, %v1635
      %v1650 = vadd.f32 %v1630, %v1635
      %v1651 = vadd.f32 %v1631, %v1635
      %v1652 = vmul.f32 %v1636, %v1444
      %v1653 = vmul.f32 %v1637, %v1445
      %v1654 = vmul.f32 %v1638, %v1446
      %v1655 = vmul.f32 %v1639, %v1447
      %v1656 = vmul.f32 %v1640, %v1448
      %v1657 = vmul.f32 %v1641, %v1449
      %v1658 = vmul.f32 %v1642, %v1450
      %v1659 = vmul.f32 %v1643, %v1451
      %v1660 = vmul.f32 %v1644, %v1452
      %v1661 = vmul.f32 %v1645, %v1453
      %v1662 = vmul.f32 %v1646, %v1454
      %v1663 = vmul.f32 %v1647, %v1455
      %v1664 = vmul.f32 %v1648, %v1456
      %v1665 = vmul.f32 %v1649, %v1457
      %v1666 = vmul.f32 %v1650, %v1458
      %v1667 = vmul.f32 %v1651, %v1459
      %v1668 = vsub.f32 1.0, %v1479
      %v1669 = vsub.f32 1.0, %v1482
      %v1670 = vsub.f32 1.0, %v1485
      %v1671 = vsub.f32 1.0, %v1488
      %v1672 = vsub.f32 1.0, %v1491
      %v1673 = vsub.f32 1.0, %v1494
      %v1674 = vsub.f32 1.0, %v1497
      %v1675 = vsub.f32 1.0, %v1500
      %v1676 = vsub.f32 1.0, %v1503
      %v1677 = vsub.f32 1.0, %v1506
      %v1678 = vsub.f32 1.0, %v1509
      %v1679 = vsub.f32 1.0, %v1512
      %v1680 = vsub.f32 1.0, %v1515
      %v1681 = vsub.f32 1.0, %v1518
      %v1682 = vsub.f32 1.0, %v1521
      %v1683 = vsub.f32 1.0, %v1524
      %v1684 = vmul.f32 %v1668, %v1534
      %v1685 = vmul.f32 %v1669, %v1534
      %v1686 = vmul.f32 %v1670, %v1534
      %v1687 = vmul.f32 %v1671, %v1534
      %v1688 = vmul.f32 %v1672, %v1534
      %v1689 = vmul.f32 %v1673, %v1534
      %v1690 = vmul.f32 %v1674, %v1534
      %v1691 = vmul.f32 %v1675, %v1534
      %v1692 = vmul.f32 %v1676, %v1534
      %v1693 = vmul.f32 %v1677, %v1534
      %v1694 = vmul.f32 %v1678, %v1534
      %v1695 = vmul.f32 %v1679, %v1534
      %v1696 = vmul.f32 %v1680, %v1534
      %v1697 = vmul.f32 %v1681, %v1534
      %v1698 = vmul.f32 %v1682, %v1534
      %v1699 = vmul.f32 %v1683, %v1534
      %v1700 = vadd.f32 %v1652, %v1684
      %v1701 = vadd.f32 %v1653, %v1685
      %v1702 = vadd.f32 %v1654, %v1686
      %v1703 = vadd.f32 %v1655, %v1687
      %v1704 = vadd.f32 %v1656, %v1688
      %v1705 = vadd.f32 %v1657, %v1689
      %v1706 = vadd.f32 %v1658, %v1690
      %v1707 = vadd.f32 %v1659, %v1691
      %v1708 = vadd.f32 %v1660, %v1692
      %v1709 = vadd.f32 %v1661, %v1693
      %v1710 = vadd.f32 %v1662, %v1694
      %v1711 = vadd.f32 %v1663, %v1695
      %v1712 = vadd.f32 %v1664, %v1696
      %v1713 = vadd.f32 %v1665, %v1697
      %v1714 = vadd.f32 %v1666, %v1698
      %v1715 = vadd.f32 %v1667, %v1699
      %v1716 = vmul.f32 %v1479, %v1635
      %v1717 = vmul.f32 %v1482, %v1635
      %v1718 = vmul.f32 %v1485, %v1635
      %v1719 = vmul.f32 %v1488, %v1635
      %v1720 = vmul.f32 %v1491, %v1635
      %v1721 = vmul.f32 %v1494, %v1635
      %v1722 = vmul.f32 %v1497, %v1635
      %v1723 = vmul.f32 %v1500, %v1635
      %v1724 = vmul.f32 %v1503, %v1635
      %v1725 = vmul.f32 %v1506, %v1635
      %v1726 = vmul.f32 %v1509, %v1635
      %v1727 = vmul.f32 %v1512, %v1635
      %v1728 = vmul.f32 %v1515, %v1635
      %v1729 = vmul.f32 %v1518, %v1635
      %v1730 = vmul.f32 %v1521, %v1635
      %v1731 = vmul.f32 %v1524, %v1635
      %v1732 = vadd.f32 %v1616, %v1716
      %v1733 = vadd.f32 %v1617, %v1717
      %v1734 = vadd.f32 %v1618, %v1718
      %v1735 = vadd.f32 %v1619, %v1719
      %v1736 = vadd.f32 %v1620, %v1720
      %v1737 = vadd.f32 %v1621, %v1721
      %v1738 = vadd.f32 %v1622, %v1722
      %v1739 = vadd.f32 %v1623, %v1723
      %v1740 = vadd.f32 %v1624, %v1724
      %v1741 = vadd.f32 %v1625, %v1725
      %v1742 = vadd.f32 %v1626, %v1726
      %v1743 = vadd.f32 %v1627, %v1727
      %v1744 = vadd.f32 %v1628, %v1728
      %v1745 = vadd.f32 %v1629, %v1729
      %v1746 = vadd.f32 %v1630, %v1730
      %v1747 = vadd.f32 %v1631, %v1731
      %v1748 = vmax.f32 %v1732, 1e-15
      %v1749 = vmax.f32 %v1733, 1e-15
      %v1750 = vmax.f32 %v1734, 1e-15
      %v1751 = vmax.f32 %v1735, 1e-15
      %v1752 = vmax.f32 %v1736, 1e-15
      %v1753 = vmax.f32 %v1737, 1e-15
      %v1754 = vmax.f32 %v1738, 1e-15
      %v1755 = vmax.f32 %v1739, 1e-15
      %v1756 = vmax.f32 %v1740, 1e-15
      %v1757 = vmax.f32 %v1741, 1e-15
      %v1758 = vmax.f32 %v1742, 1e-15
      %v1759 = vmax.f32 %v1743, 1e-15
      %v1760 = vmax.f32 %v1744, 1e-15
      %v1761 = vmax.f32 %v1745, 1e-15
      %v1762 = vmax.f32 %v1746, 1e-15
      %v1763 = vmax.f32 %v1747, 1e-15
      %v1764 = vrcp.pop %v1748
      %v1765 = vmul.f32 %v1700, %v1764
      %v1766 = vrcp.pop %v1749
      %v1767 = vmul.f32 %v1701, %v1766
      %v1768 = vrcp.pop %v1750
      %v1769 = vmul.f32 %v1702, %v1768
      %v1770 = vrcp.pop %v1751
      %v1771 = vmul.f32 %v1703, %v1770
      %v1772 = vrcp.pop %v1752
      %v1773 = vmul.f32 %v1704, %v1772
      %v1774 = vrcp.pop %v1753
      %v1775 = vmul.f32 %v1705, %v1774
      %v1776 = vrcp.pop %v1754
      %v1777 = vmul.f32 %v1706, %v1776
      %v1778 = vrcp.pop %v1755
      %v1779 = vmul.f32 %v1707, %v1778
      %v1780 = vrcp.pop %v1756
      %v1781 = vmul.f32 %v1708, %v1780
      %v1782 = vrcp.pop %v1757
      %v1783 = vmul.f32 %v1709, %v1782
      %v1784 = vrcp.pop %v1758
      %v1785 = vmul.f32 %v1710, %v1784
      %v1786 = vrcp.pop %v1759
      %v1787 = vmul.f32 %v1711, %v1786
      %v1788 = vrcp.pop %v1760
      %v1789 = vmul.f32 %v1712, %v1788
      %v1790 = vrcp.pop %v1761
      %v1791 = vmul.f32 %v1713, %v1790
      %v1792 = vrcp.pop %v1762
      %v1793 = vmul.f32 %v1714, %v1792
      %v1794 = vrcp.pop %v1763
      %v1795 = vmul.f32 %v1715, %v1794
      %v1796 = vmul.f32 %v1765, %v1765
      %v1797 = vmul.f32 %v1767, %v1767
      %v1798 = vmul.f32 %v1769, %v1769
      %v1799 = vmul.f32 %v1771, %v1771
      %v1800 = vmul.f32 %v1773, %v1773
      %v1801 = vmul.f32 %v1775, %v1775
      %v1802 = vmul.f32 %v1777, %v1777
      %v1803 = vmul.f32 %v1779, %v1779
      %v1804 = vmul.f32 %v1781, %v1781
      %v1805 = vmul.f32 %v1783, %v1783
      %v1806 = vmul.f32 %v1785, %v1785
      %v1807 = vmul.f32 %v1787, %v1787
      %v1808 = vmul.f32 %v1789, %v1789
      %v1809 = vmul.f32 %v1791, %v1791
      %v1810 = vmul.f32 %v1793, %v1793
      %v1811 = vmul.f32 %v1795, %v1795
      %v1812 = vsel %vm210, %v1796, 0.0
      %1813 = vadd.xlane.f32.xlu0 %v1812
      %v1814 = vpop.xlane.xlu0 %1813
      %v1815 = vsel %vm210, %v1797, 0.0
      %1816 = vadd.xlane.f32.xlu0 %v1815
      %v1817 = vpop.xlane.xlu0 %1816
      %v1818 = vsel %vm210, %v1798, 0.0
      %1819 = vadd.xlane.f32.xlu0 %v1818
      %v1820 = vpop.xlane.xlu0 %1819
      %v1821 = vsel %vm210, %v1799, 0.0
      %1822 = vadd.xlane.f32.xlu0 %v1821
      %v1823 = vpop.xlane.xlu0 %1822
      %v1824 = vsel %vm210, %v1800, 0.0
      %1825 = vadd.xlane.f32.xlu0 %v1824
      %v1826 = vpop.xlane.xlu0 %1825
      %v1827 = vsel %vm210, %v1801, 0.0
      %1828 = vadd.xlane.f32.xlu0 %v1827
      %v1829 = vpop.xlane.xlu0 %1828
      %v1830 = vsel %vm210, %v1802, 0.0
      %1831 = vadd.xlane.f32.xlu0 %v1830
      %v1832 = vpop.xlane.xlu0 %1831
      %v1833 = vsel %vm210, %v1803, 0.0
      %1834 = vadd.xlane.f32.xlu0 %v1833
      %v1835 = vpop.xlane.xlu0 %1834
      %v1836 = vsel %vm210, %v1804, 0.0
      %1837 = vadd.xlane.f32.xlu0 %v1836
      %v1838 = vpop.xlane.xlu0 %1837
      %v1839 = vsel %vm210, %v1805, 0.0
      %1840 = vadd.xlane.f32.xlu0 %v1839
      %v1841 = vpop.xlane.xlu0 %1840
      %v1842 = vsel %vm210, %v1806, 0.0
      %1843 = vadd.xlane.f32.xlu0 %v1842
      %v1844 = vpop.xlane.xlu0 %1843
      %v1845 = vsel %vm210, %v1807, 0.0
      %1846 = vadd.xlane.f32.xlu0 %v1845
      %v1847 = vpop.xlane.xlu0 %1846
      %v1848 = vsel %vm210, %v1808, 0.0
      %1849 = vadd.xlane.f32.xlu0 %v1848
      %v1850 = vpop.xlane.xlu0 %1849
      %v1851 = vsel %vm210, %v1809, 0.0
      %1852 = vadd.xlane.f32.xlu0 %v1851
      %v1853 = vpop.xlane.xlu0 %1852
      %v1854 = vsel %vm210, %v1810, 0.0
      %1855 = vadd.xlane.f32.xlu0 %v1854
      %v1856 = vpop.xlane.xlu0 %1855
      %v1857 = vsel %vm210, %v1811, 0.0
      %1858 = vadd.xlane.f32.xlu0 %v1857
      %v1859 = vpop.xlane.xlu0 %1858
      %v1860 = vrsqrt.pop %v1814
      %v1861 = vmul.f32 %v1814, %v1860
      %vm1862 = vcmp.eq.f32.partialorder %v1814, inf
      %v1863 = vsel %vm1862, %v1814, %v1861
      %vm1864 = vcmp.eq.f32.partialorder %v1814, 0.0
      %v1865 = vand.u32 %v1814, 2147483648
      %v1866 = vsel %vm1864, %v1865, %v1863
      %v1867 = vrsqrt.pop %v1817
      %v1868 = vmul.f32 %v1817, %v1867
      %vm1869 = vcmp.eq.f32.partialorder %v1817, inf
      %v1870 = vsel %vm1869, %v1817, %v1868
      %vm1871 = vcmp.eq.f32.partialorder %v1817, 0.0
      %v1872 = vand.u32 %v1817, 2147483648
      %v1873 = vsel %vm1871, %v1872, %v1870
      %v1874 = vrsqrt.pop %v1820
      %v1875 = vmul.f32 %v1820, %v1874
      %vm1876 = vcmp.eq.f32.partialorder %v1820, inf
      %v1877 = vsel %vm1876, %v1820, %v1875
      %vm1878 = vcmp.eq.f32.partialorder %v1820, 0.0
      %v1879 = vand.u32 %v1820, 2147483648
      %v1880 = vsel %vm1878, %v1879, %v1877
      %v1881 = vrsqrt.pop %v1823
      %v1882 = vmul.f32 %v1823, %v1881
      %vm1883 = vcmp.eq.f32.partialorder %v1823, inf
      %v1884 = vsel %vm1883, %v1823, %v1882
      %vm1885 = vcmp.eq.f32.partialorder %v1823, 0.0
      %v1886 = vand.u32 %v1823, 2147483648
      %v1887 = vsel %vm1885, %v1886, %v1884
      %v1888 = vrsqrt.pop %v1826
      %v1889 = vmul.f32 %v1826, %v1888
      %vm1890 = vcmp.eq.f32.partialorder %v1826, inf
      %v1891 = vsel %vm1890, %v1826, %v1889
      %vm1892 = vcmp.eq.f32.partialorder %v1826, 0.0
      %v1893 = vand.u32 %v1826, 2147483648
      %v1894 = vsel %vm1892, %v1893, %v1891
      %v1895 = vrsqrt.pop %v1829
      %v1896 = vmul.f32 %v1829, %v1895
      %vm1897 = vcmp.eq.f32.partialorder %v1829, inf
      %v1898 = vsel %vm1897, %v1829, %v1896
      %vm1899 = vcmp.eq.f32.partialorder %v1829, 0.0
      %v1900 = vand.u32 %v1829, 2147483648
      %v1901 = vsel %vm1899, %v1900, %v1898
      %v1902 = vrsqrt.pop %v1832
      %v1903 = vmul.f32 %v1832, %v1902
      %vm1904 = vcmp.eq.f32.partialorder %v1832, inf
      %v1905 = vsel %vm1904, %v1832, %v1903
      %vm1906 = vcmp.eq.f32.partialorder %v1832, 0.0
      %v1907 = vand.u32 %v1832, 2147483648
      %v1908 = vsel %vm1906, %v1907, %v1905
      %v1909 = vrsqrt.pop %v1835
      %v1910 = vmul.f32 %v1835, %v1909
      %vm1911 = vcmp.eq.f32.partialorder %v1835, inf
      %v1912 = vsel %vm1911, %v1835, %v1910
      %vm1913 = vcmp.eq.f32.partialorder %v1835, 0.0
      %v1914 = vand.u32 %v1835, 2147483648
      %v1915 = vsel %vm1913, %v1914, %v1912
      %v1916 = vrsqrt.pop %v1838
      %v1917 = vmul.f32 %v1838, %v1916
      %vm1918 = vcmp.eq.f32.partialorder %v1838, inf
      %v1919 = vsel %vm1918, %v1838, %v1917
      %vm1920 = vcmp.eq.f32.partialorder %v1838, 0.0
      %v1921 = vand.u32 %v1838, 2147483648
      %v1922 = vsel %vm1920, %v1921, %v1919
      %v1923 = vrsqrt.pop %v1841
      %v1924 = vmul.f32 %v1841, %v1923
      %vm1925 = vcmp.eq.f32.partialorder %v1841, inf
      %v1926 = vsel %vm1925, %v1841, %v1924
      %vm1927 = vcmp.eq.f32.partialorder %v1841, 0.0
      %v1928 = vand.u32 %v1841, 2147483648
      %v1929 = vsel %vm1927, %v1928, %v1926
      %v1930 = vrsqrt.pop %v1844
      %v1931 = vmul.f32 %v1844, %v1930
      %vm1932 = vcmp.eq.f32.partialorder %v1844, inf
      %v1933 = vsel %vm1932, %v1844, %v1931
      %vm1934 = vcmp.eq.f32.partialorder %v1844, 0.0
      %v1935 = vand.u32 %v1844, 2147483648
      %v1936 = vsel %vm1934, %v1935, %v1933
      %v1937 = vrsqrt.pop %v1847
      %v1938 = vmul.f32 %v1847, %v1937
      %vm1939 = vcmp.eq.f32.partialorder %v1847, inf
      %v1940 = vsel %vm1939, %v1847, %v1938
      %vm1941 = vcmp.eq.f32.partialorder %v1847, 0.0
      %v1942 = vand.u32 %v1847, 2147483648
      %v1943 = vsel %vm1941, %v1942, %v1940
      %v1944 = vrsqrt.pop %v1850
      %v1945 = vmul.f32 %v1850, %v1944
      %vm1946 = vcmp.eq.f32.partialorder %v1850, inf
      %v1947 = vsel %vm1946, %v1850, %v1945
      %vm1948 = vcmp.eq.f32.partialorder %v1850, 0.0
      %v1949 = vand.u32 %v1850, 2147483648
      %v1950 = vsel %vm1948, %v1949, %v1947
      %v1951 = vrsqrt.pop %v1853
      %v1952 = vmul.f32 %v1853, %v1951
      %vm1953 = vcmp.eq.f32.partialorder %v1853, inf
      %v1954 = vsel %vm1953, %v1853, %v1952
      %vm1955 = vcmp.eq.f32.partialorder %v1853, 0.0
      %v1956 = vand.u32 %v1853, 2147483648
      %v1957 = vsel %vm1955, %v1956, %v1954
      %v1958 = vrsqrt.pop %v1856
      %v1959 = vmul.f32 %v1856, %v1958
      %vm1960 = vcmp.eq.f32.partialorder %v1856, inf
      %v1961 = vsel %vm1960, %v1856, %v1959
      %vm1962 = vcmp.eq.f32.partialorder %v1856, 0.0
      %v1963 = vand.u32 %v1856, 2147483648
      %v1964 = vsel %vm1962, %v1963, %v1961
      %v1965 = vrsqrt.pop %v1859
      %v1966 = vmul.f32 %v1859, %v1965
      %vm1967 = vcmp.eq.f32.partialorder %v1859, inf
      %v1968 = vsel %vm1967, %v1859, %v1966
      %vm1969 = vcmp.eq.f32.partialorder %v1859, 0.0
      %v1970 = vand.u32 %v1859, 2147483648
      %v1971 = vsel %vm1969, %v1970, %v1968
      %v1972 = vmax.f32 %v1866, 1e-15
      %v1973 = vmax.f32 %v1873, 1e-15
      %v1974 = vmax.f32 %v1880, 1e-15
      %v1975 = vmax.f32 %v1887, 1e-15
      %v1976 = vmax.f32 %v1894, 1e-15
      %v1977 = vmax.f32 %v1901, 1e-15
      %v1978 = vmax.f32 %v1908, 1e-15
      %v1979 = vmax.f32 %v1915, 1e-15
      %v1980 = vmax.f32 %v1922, 1e-15
      %v1981 = vmax.f32 %v1929, 1e-15
      %v1982 = vmax.f32 %v1936, 1e-15
      %v1983 = vmax.f32 %v1943, 1e-15
      %v1984 = vmax.f32 %v1950, 1e-15
      %v1985 = vmax.f32 %v1957, 1e-15
      %v1986 = vmax.f32 %v1964, 1e-15
      %v1987 = vmax.f32 %v1971, 1e-15
      %vm1988 = vcmp.gt.f32.partialorder %v1972, 0.996
      %vm1989 = vcmp.gt.f32.partialorder %v1973, 0.996
      %vm1990 = vcmp.gt.f32.partialorder %v1974, 0.996
      %vm1991 = vcmp.gt.f32.partialorder %v1975, 0.996
      %vm1992 = vcmp.gt.f32.partialorder %v1976, 0.996
      %vm1993 = vcmp.gt.f32.partialorder %v1977, 0.996
      %vm1994 = vcmp.gt.f32.partialorder %v1978, 0.996
      %vm1995 = vcmp.gt.f32.partialorder %v1979, 0.996
      %vm1996 = vcmp.gt.f32.partialorder %v1980, 0.996
      %vm1997 = vcmp.gt.f32.partialorder %v1981, 0.996
      %vm1998 = vcmp.gt.f32.partialorder %v1982, 0.996
      %vm1999 = vcmp.gt.f32.partialorder %v1983, 0.996
      %vm2000 = vcmp.gt.f32.partialorder %v1984, 0.996
      %vm2001 = vcmp.gt.f32.partialorder %v1985, 0.996
      %vm2002 = vcmp.gt.f32.partialorder %v1986, 0.996
      %vm2003 = vcmp.gt.f32.partialorder %v1987, 0.996
      %v2004 = vrcp.pop %v1972
      %v2005 = vmul.f32 0.996, %v2004
      %v2006 = vrcp.pop %v1973
      %v2007 = vmul.f32 0.996, %v2006
      %v2008 = vrcp.pop %v1974
      %v2009 = vmul.f32 0.996, %v2008
      %v2010 = vrcp.pop %v1975
      %v2011 = vmul.f32 0.996, %v2010
      %v2012 = vrcp.pop %v1976
      %v2013 = vmul.f32 0.996, %v2012
      %v2014 = vrcp.pop %v1977
      %v2015 = vmul.f32 0.996, %v2014
      %v2016 = vrcp.pop %v1978
      %v2017 = vmul.f32 0.996, %v2016
      %v2018 = vrcp.pop %v1979
      %v2019 = vmul.f32 0.996, %v2018
      %v2020 = vrcp.pop %v1980
      %v2021 = vmul.f32 0.996, %v2020
      %v2022 = vrcp.pop %v1981
      %v2023 = vmul.f32 0.996, %v2022
      %v2024 = vrcp.pop %v1982
      %v2025 = vmul.f32 0.996, %v2024
      %v2026 = vrcp.pop %v1983
      %v2027 = vmul.f32 0.996, %v2026
      %v2028 = vrcp.pop %v1984
      %v2029 = vmul.f32 0.996, %v2028
      %v2030 = vrcp.pop %v1985
      %v2031 = vmul.f32 0.996, %v2030
      %v2032 = vrcp.pop %v1986
      %v2033 = vmul.f32 0.996, %v2032
      %v2034 = vrcp.pop %v1987
      %v2035 = vmul.f32 0.996, %v2034
      %v2036 = vmul.f32 %v1765, %v2005
      %v2037 = vmul.f32 %v1767, %v2007
      %v2038 = vmul.f32 %v1769, %v2009
      %v2039 = vmul.f32 %v1771, %v2011
      %v2040 = vmul.f32 %v1773, %v2013
      %v2041 = vmul.f32 %v1775, %v2015
      %v2042 = vmul.f32 %v1777, %v2017
      %v2043 = vmul.f32 %v1779, %v2019
      %v2044 = vmul.f32 %v1781, %v2021
      %v2045 = vmul.f32 %v1783, %v2023
      %v2046 = vmul.f32 %v1785, %v2025
      %v2047 = vmul.f32 %v1787, %v2027
      %v2048 = vmul.f32 %v1789, %v2029
      %v2049 = vmul.f32 %v1791, %v2031
      %v2050 = vmul.f32 %v1793, %v2033
      %v2051 = vmul.f32 %v1795, %v2035
      %v2052 = vsel %vm1988, 1, 0
      %v2053 = vsel %vm1989, 1, 0
      %v2054 = vsel %vm1990, 1, 0
      %v2055 = vsel %vm1991, 1, 0
      %v2056 = vsel %vm1992, 1, 0
      %v2057 = vsel %vm1993, 1, 0
      %v2058 = vsel %vm1994, 1, 0
      %v2059 = vsel %vm1995, 1, 0
      %v2060 = vsel %vm1996, 1, 0
      %v2061 = vsel %vm1997, 1, 0
      %v2062 = vsel %vm1998, 1, 0
      %v2063 = vsel %vm1999, 1, 0
      %v2064 = vsel %vm2000, 1, 0
      %v2065 = vsel %vm2001, 1, 0
      %v2066 = vsel %vm2002, 1, 0
      %v2067 = vsel %vm2003, 1, 0
      %vm2068 = vcmp.eq.s32.totalorder %v2052, 1
      %vm2069 = vcmp.eq.s32.totalorder %v2053, 1
      %vm2070 = vcmp.eq.s32.totalorder %v2054, 1
      %vm2071 = vcmp.eq.s32.totalorder %v2055, 1
      %vm2072 = vcmp.eq.s32.totalorder %v2056, 1
      %vm2073 = vcmp.eq.s32.totalorder %v2057, 1
      %vm2074 = vcmp.eq.s32.totalorder %v2058, 1
      %vm2075 = vcmp.eq.s32.totalorder %v2059, 1
      %vm2076 = vcmp.eq.s32.totalorder %v2060, 1
      %vm2077 = vcmp.eq.s32.totalorder %v2061, 1
      %vm2078 = vcmp.eq.s32.totalorder %v2062, 1
      %vm2079 = vcmp.eq.s32.totalorder %v2063, 1
      %vm2080 = vcmp.eq.s32.totalorder %v2064, 1
      %vm2081 = vcmp.eq.s32.totalorder %v2065, 1
      %vm2082 = vcmp.eq.s32.totalorder %v2066, 1
      %vm2083 = vcmp.eq.s32.totalorder %v2067, 1
      %v2084 = vsel %vm2068, %v2036, %v1765
      %v2085 = vsel %vm2069, %v2037, %v1767
      %v2086 = vsel %vm2070, %v2038, %v1769
      %v2087 = vsel %vm2071, %v2039, %v1771
      %v2088 = vsel %vm2072, %v2040, %v1773
      %v2089 = vsel %vm2073, %v2041, %v1775
      %v2090 = vsel %vm2074, %v2042, %v1777
      %v2091 = vsel %vm2075, %v2043, %v1779
      %v2092 = vsel %vm2076, %v2044, %v1781
      %v2093 = vsel %vm2077, %v2045, %v1783
      %v2094 = vsel %vm2078, %v2046, %v1785
      %v2095 = vsel %vm2079, %v2047, %v1787
      %v2096 = vsel %vm2080, %v2048, %v1789
      %v2097 = vsel %vm2081, %v2049, %v1791
      %v2098 = vsel %vm2082, %v2050, %v1793
      %v2099 = vsel %vm2083, %v2051, %v1795
      %v2100 = vmul.f32 %v2084, %v2084
      %v2101 = vmul.f32 %v2085, %v2085
      %v2102 = vmul.f32 %v2086, %v2086
      %v2103 = vmul.f32 %v2087, %v2087
      %v2104 = vmul.f32 %v2088, %v2088
      %v2105 = vmul.f32 %v2089, %v2089
      %v2106 = vmul.f32 %v2090, %v2090
      %v2107 = vmul.f32 %v2091, %v2091
      %v2108 = vmul.f32 %v2092, %v2092
      %v2109 = vmul.f32 %v2093, %v2093
      %v2110 = vmul.f32 %v2094, %v2094
      %v2111 = vmul.f32 %v2095, %v2095
      %v2112 = vmul.f32 %v2096, %v2096
      %v2113 = vmul.f32 %v2097, %v2097
      %v2114 = vmul.f32 %v2098, %v2098
      %v2115 = vmul.f32 %v2099, %v2099
      %v2116 = vsel %vm210, %v2100, 0.0
      %2117 = vadd.xlane.f32.xlu0 %v2116
      %v2118 = vpop.xlane.xlu0 %2117
      %v2119 = vsel %vm210, %v2101, 0.0
      %2120 = vadd.xlane.f32.xlu0 %v2119
      %v2121 = vpop.xlane.xlu0 %2120
      %v2122 = vsel %vm210, %v2102, 0.0
      %2123 = vadd.xlane.f32.xlu0 %v2122
      %v2124 = vpop.xlane.xlu0 %2123
      %v2125 = vsel %vm210, %v2103, 0.0
      %2126 = vadd.xlane.f32.xlu0 %v2125
      %v2127 = vpop.xlane.xlu0 %2126
      %v2128 = vsel %vm210, %v2104, 0.0
      %2129 = vadd.xlane.f32.xlu0 %v2128
      %v2130 = vpop.xlane.xlu0 %2129
      %v2131 = vsel %vm210, %v2105, 0.0
      %2132 = vadd.xlane.f32.xlu0 %v2131
      %v2133 = vpop.xlane.xlu0 %2132
      %v2134 = vsel %vm210, %v2106, 0.0
      %2135 = vadd.xlane.f32.xlu0 %v2134
      %v2136 = vpop.xlane.xlu0 %2135
      %v2137 = vsel %vm210, %v2107, 0.0
      %2138 = vadd.xlane.f32.xlu0 %v2137
      %v2139 = vpop.xlane.xlu0 %2138
      %v2140 = vsel %vm210, %v2108, 0.0
      %2141 = vadd.xlane.f32.xlu0 %v2140
      %v2142 = vpop.xlane.xlu0 %2141
      %v2143 = vsel %vm210, %v2109, 0.0
      %2144 = vadd.xlane.f32.xlu0 %v2143
      %v2145 = vpop.xlane.xlu0 %2144
      %v2146 = vsel %vm210, %v2110, 0.0
      %2147 = vadd.xlane.f32.xlu0 %v2146
      %v2148 = vpop.xlane.xlu0 %2147
      %v2149 = vsel %vm210, %v2111, 0.0
      %2150 = vadd.xlane.f32.xlu0 %v2149
      %v2151 = vpop.xlane.xlu0 %2150
      %v2152 = vsel %vm210, %v2112, 0.0
      %2153 = vadd.xlane.f32.xlu0 %v2152
      %v2154 = vpop.xlane.xlu0 %2153
      %v2155 = vsel %vm210, %v2113, 0.0
      %2156 = vadd.xlane.f32.xlu0 %v2155
      %v2157 = vpop.xlane.xlu0 %2156
      %v2158 = vsel %vm210, %v2114, 0.0
      %2159 = vadd.xlane.f32.xlu0 %v2158
      %v2160 = vpop.xlane.xlu0 %2159
      %v2161 = vsel %vm210, %v2115, 0.0
      %2162 = vadd.xlane.f32.xlu0 %v2161
      %v2163 = vpop.xlane.xlu0 %2162
      %v2164 = vrsqrt.pop %v2118
      %v2165 = vmul.f32 %v2118, %v2164
      %vm2166 = vcmp.eq.f32.partialorder %v2118, inf
      %v2167 = vsel %vm2166, %v2118, %v2165
      %vm2168 = vcmp.eq.f32.partialorder %v2118, 0.0
      %v2169 = vand.u32 %v2118, 2147483648
      %v2170 = vsel %vm2168, %v2169, %v2167
      %v2171 = vrsqrt.pop %v2121
      %v2172 = vmul.f32 %v2121, %v2171
      %vm2173 = vcmp.eq.f32.partialorder %v2121, inf
      %v2174 = vsel %vm2173, %v2121, %v2172
      %vm2175 = vcmp.eq.f32.partialorder %v2121, 0.0
      %v2176 = vand.u32 %v2121, 2147483648
      %v2177 = vsel %vm2175, %v2176, %v2174
      %v2178 = vrsqrt.pop %v2124
      %v2179 = vmul.f32 %v2124, %v2178
      %vm2180 = vcmp.eq.f32.partialorder %v2124, inf
      %v2181 = vsel %vm2180, %v2124, %v2179
      %vm2182 = vcmp.eq.f32.partialorder %v2124, 0.0
      %v2183 = vand.u32 %v2124, 2147483648
      %v2184 = vsel %vm2182, %v2183, %v2181
      %v2185 = vrsqrt.pop %v2127
      %v2186 = vmul.f32 %v2127, %v2185
      %vm2187 = vcmp.eq.f32.partialorder %v2127, inf
      %v2188 = vsel %vm2187, %v2127, %v2186
      %vm2189 = vcmp.eq.f32.partialorder %v2127, 0.0
      %v2190 = vand.u32 %v2127, 2147483648
      %v2191 = vsel %vm2189, %v2190, %v2188
      %v2192 = vrsqrt.pop %v2130
      %v2193 = vmul.f32 %v2130, %v2192
      %vm2194 = vcmp.eq.f32.partialorder %v2130, inf
      %v2195 = vsel %vm2194, %v2130, %v2193
      %vm2196 = vcmp.eq.f32.partialorder %v2130, 0.0
      %v2197 = vand.u32 %v2130, 2147483648
      %v2198 = vsel %vm2196, %v2197, %v2195
      %v2199 = vrsqrt.pop %v2133
      %v2200 = vmul.f32 %v2133, %v2199
      %vm2201 = vcmp.eq.f32.partialorder %v2133, inf
      %v2202 = vsel %vm2201, %v2133, %v2200
      %vm2203 = vcmp.eq.f32.partialorder %v2133, 0.0
      %v2204 = vand.u32 %v2133, 2147483648
      %v2205 = vsel %vm2203, %v2204, %v2202
      %v2206 = vrsqrt.pop %v2136
      %v2207 = vmul.f32 %v2136, %v2206
      %vm2208 = vcmp.eq.f32.partialorder %v2136, inf
      %v2209 = vsel %vm2208, %v2136, %v2207
      %vm2210 = vcmp.eq.f32.partialorder %v2136, 0.0
      %v2211 = vand.u32 %v2136, 2147483648
      %v2212 = vsel %vm2210, %v2211, %v2209
      %v2213 = vrsqrt.pop %v2139
      %v2214 = vmul.f32 %v2139, %v2213
      %vm2215 = vcmp.eq.f32.partialorder %v2139, inf
      %v2216 = vsel %vm2215, %v2139, %v2214
      %vm2217 = vcmp.eq.f32.partialorder %v2139, 0.0
      %v2218 = vand.u32 %v2139, 2147483648
      %v2219 = vsel %vm2217, %v2218, %v2216
      %v2220 = vrsqrt.pop %v2142
      %v2221 = vmul.f32 %v2142, %v2220
      %vm2222 = vcmp.eq.f32.partialorder %v2142, inf
      %v2223 = vsel %vm2222, %v2142, %v2221
      %vm2224 = vcmp.eq.f32.partialorder %v2142, 0.0
      %v2225 = vand.u32 %v2142, 2147483648
      %v2226 = vsel %vm2224, %v2225, %v2223
      %v2227 = vrsqrt.pop %v2145
      %v2228 = vmul.f32 %v2145, %v2227
      %vm2229 = vcmp.eq.f32.partialorder %v2145, inf
      %v2230 = vsel %vm2229, %v2145, %v2228
      %vm2231 = vcmp.eq.f32.partialorder %v2145, 0.0
      %v2232 = vand.u32 %v2145, 2147483648
      %v2233 = vsel %vm2231, %v2232, %v2230
      %v2234 = vrsqrt.pop %v2148
      %v2235 = vmul.f32 %v2148, %v2234
      %vm2236 = vcmp.eq.f32.partialorder %v2148, inf
      %v2237 = vsel %vm2236, %v2148, %v2235
      %vm2238 = vcmp.eq.f32.partialorder %v2148, 0.0
      %v2239 = vand.u32 %v2148, 2147483648
      %v2240 = vsel %vm2238, %v2239, %v2237
      %v2241 = vrsqrt.pop %v2151
      %v2242 = vmul.f32 %v2151, %v2241
      %vm2243 = vcmp.eq.f32.partialorder %v2151, inf
      %v2244 = vsel %vm2243, %v2151, %v2242
      %vm2245 = vcmp.eq.f32.partialorder %v2151, 0.0
      %v2246 = vand.u32 %v2151, 2147483648
      %v2247 = vsel %vm2245, %v2246, %v2244
      %v2248 = vrsqrt.pop %v2154
      %v2249 = vmul.f32 %v2154, %v2248
      %vm2250 = vcmp.eq.f32.partialorder %v2154, inf
      %v2251 = vsel %vm2250, %v2154, %v2249
      %vm2252 = vcmp.eq.f32.partialorder %v2154, 0.0
      %v2253 = vand.u32 %v2154, 2147483648
      %v2254 = vsel %vm2252, %v2253, %v2251
      %v2255 = vrsqrt.pop %v2157
      %v2256 = vmul.f32 %v2157, %v2255
      %vm2257 = vcmp.eq.f32.partialorder %v2157, inf
      %v2258 = vsel %vm2257, %v2157, %v2256
      %vm2259 = vcmp.eq.f32.partialorder %v2157, 0.0
      %v2260 = vand.u32 %v2157, 2147483648
      %v2261 = vsel %vm2259, %v2260, %v2258
      %v2262 = vrsqrt.pop %v2160
      %v2263 = vmul.f32 %v2160, %v2262
      %vm2264 = vcmp.eq.f32.partialorder %v2160, inf
      %v2265 = vsel %vm2264, %v2160, %v2263
      %vm2266 = vcmp.eq.f32.partialorder %v2160, 0.0
      %v2267 = vand.u32 %v2160, 2147483648
      %v2268 = vsel %vm2266, %v2267, %v2265
      %v2269 = vrsqrt.pop %v2163
      %v2270 = vmul.f32 %v2163, %v2269
      %vm2271 = vcmp.eq.f32.partialorder %v2163, inf
      %v2272 = vsel %vm2271, %v2163, %v2270
      %vm2273 = vcmp.eq.f32.partialorder %v2163, 0.0
      %v2274 = vand.u32 %v2163, 2147483648
      %v2275 = vsel %vm2273, %v2274, %v2272
      %v2276 = vmax.f32 %v2170, 1e-15
      %v2277 = vmax.f32 %v2177, 1e-15
      %v2278 = vmax.f32 %v2184, 1e-15
      %v2279 = vmax.f32 %v2191, 1e-15
      %v2280 = vmax.f32 %v2198, 1e-15
      %v2281 = vmax.f32 %v2205, 1e-15
      %v2282 = vmax.f32 %v2212, 1e-15
      %v2283 = vmax.f32 %v2219, 1e-15
      %v2284 = vmax.f32 %v2226, 1e-15
      %v2285 = vmax.f32 %v2233, 1e-15
      %v2286 = vmax.f32 %v2240, 1e-15
      %v2287 = vmax.f32 %v2247, 1e-15
      %v2288 = vmax.f32 %v2254, 1e-15
      %v2289 = vmax.f32 %v2261, 1e-15
      %v2290 = vmax.f32 %v2268, 1e-15
      %v2291 = vmax.f32 %v2275, 1e-15
      %v2292 = vmax.f32 %v2276, -1.0
      %v2293 = vmax.f32 %v2277, -1.0
      %v2294 = vmax.f32 %v2278, -1.0
      %v2295 = vmax.f32 %v2279, -1.0
      %v2296 = vmax.f32 %v2280, -1.0
      %v2297 = vmax.f32 %v2281, -1.0
      %v2298 = vmax.f32 %v2282, -1.0
      %v2299 = vmax.f32 %v2283, -1.0
      %v2300 = vmax.f32 %v2284, -1.0
      %v2301 = vmax.f32 %v2285, -1.0
      %v2302 = vmax.f32 %v2286, -1.0
      %v2303 = vmax.f32 %v2287, -1.0
      %v2304 = vmax.f32 %v2288, -1.0
      %v2305 = vmax.f32 %v2289, -1.0
      %v2306 = vmax.f32 %v2290, -1.0
      %v2307 = vmax.f32 %v2291, -1.0
      %v2308 = vmin.f32 %v2292, 1.0
      %v2309 = vmin.f32 %v2293, 1.0
      %v2310 = vmin.f32 %v2294, 1.0
      %v2311 = vmin.f32 %v2295, 1.0
      %v2312 = vmin.f32 %v2296, 1.0
      %v2313 = vmin.f32 %v2297, 1.0
      %v2314 = vmin.f32 %v2298, 1.0
      %v2315 = vmin.f32 %v2299, 1.0
      %v2316 = vmin.f32 %v2300, 1.0
      %v2317 = vmin.f32 %v2301, 1.0
      %v2318 = vmin.f32 %v2302, 1.0
      %v2319 = vmin.f32 %v2303, 1.0
      %v2320 = vmin.f32 %v2304, 1.0
      %v2321 = vmin.f32 %v2305, 1.0
      %v2322 = vmin.f32 %v2306, 1.0
      %v2323 = vmin.f32 %v2307, 1.0
      %v2324 = vadd.f32 %v2308, 1.0
      %v2325 = vadd.f32 %v2309, 1.0
      %v2326 = vadd.f32 %v2310, 1.0
      %v2327 = vadd.f32 %v2311, 1.0
      %v2328 = vadd.f32 %v2312, 1.0
      %v2329 = vadd.f32 %v2313, 1.0
      %v2330 = vadd.f32 %v2314, 1.0
      %v2331 = vadd.f32 %v2315, 1.0
      %v2332 = vadd.f32 %v2316, 1.0
      %v2333 = vadd.f32 %v2317, 1.0
      %v2334 = vadd.f32 %v2318, 1.0
      %v2335 = vadd.f32 %v2319, 1.0
      %v2336 = vadd.f32 %v2320, 1.0
      %v2337 = vadd.f32 %v2321, 1.0
      %v2338 = vadd.f32 %v2322, 1.0
      %v2339 = vadd.f32 %v2323, 1.0
      %v2340 = vsub.f32 1.0, %v2308
      %v2341 = vsub.f32 1.0, %v2309
      %v2342 = vsub.f32 1.0, %v2310
      %v2343 = vsub.f32 1.0, %v2311
      %v2344 = vsub.f32 1.0, %v2312
      %v2345 = vsub.f32 1.0, %v2313
      %v2346 = vsub.f32 1.0, %v2314
      %v2347 = vsub.f32 1.0, %v2315
      %v2348 = vsub.f32 1.0, %v2316
      %v2349 = vsub.f32 1.0, %v2317
      %v2350 = vsub.f32 1.0, %v2318
      %v2351 = vsub.f32 1.0, %v2319
      %v2352 = vsub.f32 1.0, %v2320
      %v2353 = vsub.f32 1.0, %v2321
      %v2354 = vsub.f32 1.0, %v2322
      %v2355 = vsub.f32 1.0, %v2323
      %v2356 = vrcp.pop %v2340
      %v2357 = vmul.f32 %v2324, %v2356
      %v2358 = vrcp.pop %v2341
      %v2359 = vmul.f32 %v2325, %v2358
      %v2360 = vrcp.pop %v2342
      %v2361 = vmul.f32 %v2326, %v2360
      %v2362 = vrcp.pop %v2343
      %v2363 = vmul.f32 %v2327, %v2362
      %v2364 = vrcp.pop %v2344
      %v2365 = vmul.f32 %v2328, %v2364
      %v2366 = vrcp.pop %v2345
      %v2367 = vmul.f32 %v2329, %v2366
      %v2368 = vrcp.pop %v2346
      %v2369 = vmul.f32 %v2330, %v2368
      %v2370 = vrcp.pop %v2347
      %v2371 = vmul.f32 %v2331, %v2370
      %v2372 = vrcp.pop %v2348
      %v2373 = vmul.f32 %v2332, %v2372
      %v2374 = vrcp.pop %v2349
      %v2375 = vmul.f32 %v2333, %v2374
      %v2376 = vrcp.pop %v2350
      %v2377 = vmul.f32 %v2334, %v2376
      %v2378 = vrcp.pop %v2351
      %v2379 = vmul.f32 %v2335, %v2378
      %v2380 = vrcp.pop %v2352
      %v2381 = vmul.f32 %v2336, %v2380
      %v2382 = vrcp.pop %v2353
      %v2383 = vmul.f32 %v2337, %v2382
      %v2384 = vrcp.pop %v2354
      %v2385 = vmul.f32 %v2338, %v2384
      %v2386 = vrcp.pop %v2355
      %v2387 = vmul.f32 %v2339, %v2386
      %v2388 = vlog2.pop %v2357
      %v2389 = vmul.f32 %v2388, 0.6931472
      %v2390 = vlog2.pop %v2359
      %v2391 = vmul.f32 %v2390, 0.6931472
      %v2392 = vlog2.pop %v2361
      %v2393 = vmul.f32 %v2392, 0.6931472
      %v2394 = vlog2.pop %v2363
      %v2395 = vmul.f32 %v2394, 0.6931472
      %v2396 = vlog2.pop %v2365
      %v2397 = vmul.f32 %v2396, 0.6931472
      %v2398 = vlog2.pop %v2367
      %v2399 = vmul.f32 %v2398, 0.6931472
      %v2400 = vlog2.pop %v2369
      %v2401 = vmul.f32 %v2400, 0.6931472
      %v2402 = vlog2.pop %v2371
      %v2403 = vmul.f32 %v2402, 0.6931472
      %v2404 = vlog2.pop %v2373
      %v2405 = vmul.f32 %v2404, 0.6931472
      %v2406 = vlog2.pop %v2375
      %v2407 = vmul.f32 %v2406, 0.6931472
      %v2408 = vlog2.pop %v2377
      %v2409 = vmul.f32 %v2408, 0.6931472
      %v2410 = vlog2.pop %v2379
      %v2411 = vmul.f32 %v2410, 0.6931472
      %v2412 = vlog2.pop %v2381
      %v2413 = vmul.f32 %v2412, 0.6931472
      %v2414 = vlog2.pop %v2383
      %v2415 = vmul.f32 %v2414, 0.6931472
      %v2416 = vlog2.pop %v2385
      %v2417 = vmul.f32 %v2416, 0.6931472
      %v2418 = vlog2.pop %v2387
      %v2419 = vmul.f32 %v2418, 0.6931472
      %v2420 = vmul.f32 %v2389, 0.5
      %v2421 = vmul.f32 %v2391, 0.5
      %v2422 = vmul.f32 %v2393, 0.5
      %v2423 = vmul.f32 %v2395, 0.5
      %v2424 = vmul.f32 %v2397, 0.5
      %v2425 = vmul.f32 %v2399, 0.5
      %v2426 = vmul.f32 %v2401, 0.5
      %v2427 = vmul.f32 %v2403, 0.5
      %v2428 = vmul.f32 %v2405, 0.5
      %v2429 = vmul.f32 %v2407, 0.5
      %v2430 = vmul.f32 %v2409, 0.5
      %v2431 = vmul.f32 %v2411, 0.5
      %v2432 = vmul.f32 %v2413, 0.5
      %v2433 = vmul.f32 %v2415, 0.5
      %v2434 = vmul.f32 %v2417, 0.5
      %v2435 = vmul.f32 %v2419, 0.5
      %v2436 = vrcp.pop %v2276
      %v2437 = vmul.f32 %v2420, %v2436
      %v2438 = vrcp.pop %v2277
      %v2439 = vmul.f32 %v2421, %v2438
      %v2440 = vrcp.pop %v2278
      %v2441 = vmul.f32 %v2422, %v2440
      %v2442 = vrcp.pop %v2279
      %v2443 = vmul.f32 %v2423, %v2442
      %v2444 = vrcp.pop %v2280
      %v2445 = vmul.f32 %v2424, %v2444
      %v2446 = vrcp.pop %v2281
      %v2447 = vmul.f32 %v2425, %v2446
      %v2448 = vrcp.pop %v2282
      %v2449 = vmul.f32 %v2426, %v2448
      %v2450 = vrcp.pop %v2283
      %v2451 = vmul.f32 %v2427, %v2450
      %v2452 = vrcp.pop %v2284
      %v2453 = vmul.f32 %v2428, %v2452
      %v2454 = vrcp.pop %v2285
      %v2455 = vmul.f32 %v2429, %v2454
      %v2456 = vrcp.pop %v2286
      %v2457 = vmul.f32 %v2430, %v2456
      %v2458 = vrcp.pop %v2287
      %v2459 = vmul.f32 %v2431, %v2458
      %v2460 = vrcp.pop %v2288
      %v2461 = vmul.f32 %v2432, %v2460
      %v2462 = vrcp.pop %v2289
      %v2463 = vmul.f32 %v2433, %v2462
      %v2464 = vrcp.pop %v2290
      %v2465 = vmul.f32 %v2434, %v2464
      %v2466 = vrcp.pop %v2291
      %v2467 = vmul.f32 %v2435, %v2466
      %v2468 = vmul.f32 %v2437, %v2084
      %v2469 = vmul.f32 %v2439, %v2085
      %v2470 = vmul.f32 %v2441, %v2086
      %v2471 = vmul.f32 %v2443, %v2087
      %v2472 = vmul.f32 %v2445, %v2088
      %v2473 = vmul.f32 %v2447, %v2089
      %v2474 = vmul.f32 %v2449, %v2090
      %v2475 = vmul.f32 %v2451, %v2091
      %v2476 = vmul.f32 %v2453, %v2092
      %v2477 = vmul.f32 %v2455, %v2093
      %v2478 = vmul.f32 %v2457, %v2094
      %v2479 = vmul.f32 %v2459, %v2095
      %v2480 = vmul.f32 %v2461, %v2096
      %v2481 = vmul.f32 %v2463, %v2097
      %v2482 = vmul.f32 %v2465, %v2098
      %v2483 = vmul.f32 %v2467, %v2099
      %v2484 = vmax.f32 %v2468, 0.0
      %v2485 = vmax.f32 %v2469, 0.0
      %v2486 = vmax.f32 %v2470, 0.0
      %v2487 = vmax.f32 %v2471, 0.0
      %v2488 = vmax.f32 %v2472, 0.0
      %v2489 = vmax.f32 %v2473, 0.0
      %v2490 = vmax.f32 %v2474, 0.0
      %v2491 = vmax.f32 %v2475, 0.0
      %v2492 = vmax.f32 %v2476, 0.0
      %v2493 = vmax.f32 %v2477, 0.0
      %v2494 = vmax.f32 %v2478, 0.0
      %v2495 = vmax.f32 %v2479, 0.0
      %v2496 = vmax.f32 %v2480, 0.0
      %v2497 = vmax.f32 %v2481, 0.0
      %v2498 = vmax.f32 %v2482, 0.0
      %v2499 = vmax.f32 %v2483, 0.0
      %v2500 = vmul.f32 %v2484, %v2484
      %v2501 = vmul.f32 %v2485, %v2485
      %v2502 = vmul.f32 %v2486, %v2486
      %v2503 = vmul.f32 %v2487, %v2487
      %v2504 = vmul.f32 %v2488, %v2488
      %v2505 = vmul.f32 %v2489, %v2489
      %v2506 = vmul.f32 %v2490, %v2490
      %v2507 = vmul.f32 %v2491, %v2491
      %v2508 = vmul.f32 %v2492, %v2492
      %v2509 = vmul.f32 %v2493, %v2493
      %v2510 = vmul.f32 %v2494, %v2494
      %v2511 = vmul.f32 %v2495, %v2495
      %v2512 = vmul.f32 %v2496, %v2496
      %v2513 = vmul.f32 %v2497, %v2497
      %v2514 = vmul.f32 %v2498, %v2498
      %v2515 = vmul.f32 %v2499, %v2499
      %v2516 = vsel %vm210, %v2500, 0.0
      %2517 = vadd.xlane.f32.xlu0 %v2516
      %v2518 = vpop.xlane.xlu0 %2517
      %v2519 = vsel %vm210, %v2501, 0.0
      %2520 = vadd.xlane.f32.xlu0 %v2519
      %v2521 = vpop.xlane.xlu0 %2520
      %v2522 = vsel %vm210, %v2502, 0.0
      %2523 = vadd.xlane.f32.xlu0 %v2522
      %v2524 = vpop.xlane.xlu0 %2523
      %v2525 = vsel %vm210, %v2503, 0.0
      %2526 = vadd.xlane.f32.xlu0 %v2525
      %v2527 = vpop.xlane.xlu0 %2526
      %v2528 = vsel %vm210, %v2504, 0.0
      %2529 = vadd.xlane.f32.xlu0 %v2528
      %v2530 = vpop.xlane.xlu0 %2529
      %v2531 = vsel %vm210, %v2505, 0.0
      %2532 = vadd.xlane.f32.xlu0 %v2531
      %v2533 = vpop.xlane.xlu0 %2532
      %v2534 = vsel %vm210, %v2506, 0.0
      %2535 = vadd.xlane.f32.xlu0 %v2534
      %v2536 = vpop.xlane.xlu0 %2535
      %v2537 = vsel %vm210, %v2507, 0.0
      %2538 = vadd.xlane.f32.xlu0 %v2537
      %v2539 = vpop.xlane.xlu0 %2538
      %v2540 = vsel %vm210, %v2508, 0.0
      %2541 = vadd.xlane.f32.xlu0 %v2540
      %v2542 = vpop.xlane.xlu0 %2541
      %v2543 = vsel %vm210, %v2509, 0.0
      %2544 = vadd.xlane.f32.xlu0 %v2543
      %v2545 = vpop.xlane.xlu0 %2544
      %v2546 = vsel %vm210, %v2510, 0.0
      %2547 = vadd.xlane.f32.xlu0 %v2546
      %v2548 = vpop.xlane.xlu0 %2547
      %v2549 = vsel %vm210, %v2511, 0.0
      %2550 = vadd.xlane.f32.xlu0 %v2549
      %v2551 = vpop.xlane.xlu0 %2550
      %v2552 = vsel %vm210, %v2512, 0.0
      %2553 = vadd.xlane.f32.xlu0 %v2552
      %v2554 = vpop.xlane.xlu0 %2553
      %v2555 = vsel %vm210, %v2513, 0.0
      %2556 = vadd.xlane.f32.xlu0 %v2555
      %v2557 = vpop.xlane.xlu0 %2556
      %v2558 = vsel %vm210, %v2514, 0.0
      %2559 = vadd.xlane.f32.xlu0 %v2558
      %v2560 = vpop.xlane.xlu0 %2559
      %v2561 = vsel %vm210, %v2515, 0.0
      %2562 = vadd.xlane.f32.xlu0 %v2561
      %v2563 = vpop.xlane.xlu0 %2562
      %v2564 = vrsqrt.pop %v2518
      %v2565 = vmul.f32 %v2518, %v2564
      %vm2566 = vcmp.eq.f32.partialorder %v2518, inf
      %v2567 = vsel %vm2566, %v2518, %v2565
      %vm2568 = vcmp.eq.f32.partialorder %v2518, 0.0
      %v2569 = vand.u32 %v2518, 2147483648
      %v2570 = vsel %vm2568, %v2569, %v2567
      %v2571 = vrsqrt.pop %v2521
      %v2572 = vmul.f32 %v2521, %v2571
      %vm2573 = vcmp.eq.f32.partialorder %v2521, inf
      %v2574 = vsel %vm2573, %v2521, %v2572
      %vm2575 = vcmp.eq.f32.partialorder %v2521, 0.0
      %v2576 = vand.u32 %v2521, 2147483648
      %v2577 = vsel %vm2575, %v2576, %v2574
      %v2578 = vrsqrt.pop %v2524
      %v2579 = vmul.f32 %v2524, %v2578
      %vm2580 = vcmp.eq.f32.partialorder %v2524, inf
      %v2581 = vsel %vm2580, %v2524, %v2579
      %vm2582 = vcmp.eq.f32.partialorder %v2524, 0.0
      %v2583 = vand.u32 %v2524, 2147483648
      %v2584 = vsel %vm2582, %v2583, %v2581
      %v2585 = vrsqrt.pop %v2527
      %v2586 = vmul.f32 %v2527, %v2585
      %vm2587 = vcmp.eq.f32.partialorder %v2527, inf
      %v2588 = vsel %vm2587, %v2527, %v2586
      %vm2589 = vcmp.eq.f32.partialorder %v2527, 0.0
      %v2590 = vand.u32 %v2527, 2147483648
      %v2591 = vsel %vm2589, %v2590, %v2588
      %v2592 = vrsqrt.pop %v2530
      %v2593 = vmul.f32 %v2530, %v2592
      %vm2594 = vcmp.eq.f32.partialorder %v2530, inf
      %v2595 = vsel %vm2594, %v2530, %v2593
      %vm2596 = vcmp.eq.f32.partialorder %v2530, 0.0
      %v2597 = vand.u32 %v2530, 2147483648
      %v2598 = vsel %vm2596, %v2597, %v2595
      %v2599 = vrsqrt.pop %v2533
      %v2600 = vmul.f32 %v2533, %v2599
      %vm2601 = vcmp.eq.f32.partialorder %v2533, inf
      %v2602 = vsel %vm2601, %v2533, %v2600
      %vm2603 = vcmp.eq.f32.partialorder %v2533, 0.0
      %v2604 = vand.u32 %v2533, 2147483648
      %v2605 = vsel %vm2603, %v2604, %v2602
      %v2606 = vrsqrt.pop %v2536
      %v2607 = vmul.f32 %v2536, %v2606
      %vm2608 = vcmp.eq.f32.partialorder %v2536, inf
      %v2609 = vsel %vm2608, %v2536, %v2607
      %vm2610 = vcmp.eq.f32.partialorder %v2536, 0.0
      %v2611 = vand.u32 %v2536, 2147483648
      %v2612 = vsel %vm2610, %v2611, %v2609
      %v2613 = vrsqrt.pop %v2539
      %v2614 = vmul.f32 %v2539, %v2613
      %vm2615 = vcmp.eq.f32.partialorder %v2539, inf
      %v2616 = vsel %vm2615, %v2539, %v2614
      %vm2617 = vcmp.eq.f32.partialorder %v2539, 0.0
      %v2618 = vand.u32 %v2539, 2147483648
      %v2619 = vsel %vm2617, %v2618, %v2616
      %v2620 = vrsqrt.pop %v2542
      %v2621 = vmul.f32 %v2542, %v2620
      %vm2622 = vcmp.eq.f32.partialorder %v2542, inf
      %v2623 = vsel %vm2622, %v2542, %v2621
      %vm2624 = vcmp.eq.f32.partialorder %v2542, 0.0
      %v2625 = vand.u32 %v2542, 2147483648
      %v2626 = vsel %vm2624, %v2625, %v2623
      %v2627 = vrsqrt.pop %v2545
      %v2628 = vmul.f32 %v2545, %v2627
      %vm2629 = vcmp.eq.f32.partialorder %v2545, inf
      %v2630 = vsel %vm2629, %v2545, %v2628
      %vm2631 = vcmp.eq.f32.partialorder %v2545, 0.0
      %v2632 = vand.u32 %v2545, 2147483648
      %v2633 = vsel %vm2631, %v2632, %v2630
      %v2634 = vrsqrt.pop %v2548
      %v2635 = vmul.f32 %v2548, %v2634
      %vm2636 = vcmp.eq.f32.partialorder %v2548, inf
      %v2637 = vsel %vm2636, %v2548, %v2635
      %vm2638 = vcmp.eq.f32.partialorder %v2548, 0.0
      %v2639 = vand.u32 %v2548, 2147483648
      %v2640 = vsel %vm2638, %v2639, %v2637
      %v2641 = vrsqrt.pop %v2551
      %v2642 = vmul.f32 %v2551, %v2641
      %vm2643 = vcmp.eq.f32.partialorder %v2551, inf
      %v2644 = vsel %vm2643, %v2551, %v2642
      %vm2645 = vcmp.eq.f32.partialorder %v2551, 0.0
      %v2646 = vand.u32 %v2551, 2147483648
      %v2647 = vsel %vm2645, %v2646, %v2644
      %v2648 = vrsqrt.pop %v2554
      %v2649 = vmul.f32 %v2554, %v2648
      %vm2650 = vcmp.eq.f32.partialorder %v2554, inf
      %v2651 = vsel %vm2650, %v2554, %v2649
      %vm2652 = vcmp.eq.f32.partialorder %v2554, 0.0
      %v2653 = vand.u32 %v2554, 2147483648
      %v2654 = vsel %vm2652, %v2653, %v2651
      %v2655 = vrsqrt.pop %v2557
      %v2656 = vmul.f32 %v2557, %v2655
      %vm2657 = vcmp.eq.f32.partialorder %v2557, inf
      %v2658 = vsel %vm2657, %v2557, %v2656
      %vm2659 = vcmp.eq.f32.partialorder %v2557, 0.0
      %v2660 = vand.u32 %v2557, 2147483648
      %v2661 = vsel %vm2659, %v2660, %v2658
      %v2662 = vrsqrt.pop %v2560
      %v2663 = vmul.f32 %v2560, %v2662
      %vm2664 = vcmp.eq.f32.partialorder %v2560, inf
      %v2665 = vsel %vm2664, %v2560, %v2663
      %vm2666 = vcmp.eq.f32.partialorder %v2560, 0.0
      %v2667 = vand.u32 %v2560, 2147483648
      %v2668 = vsel %vm2666, %v2667, %v2665
      %v2669 = vrsqrt.pop %v2563
      %v2670 = vmul.f32 %v2563, %v2669
      %vm2671 = vcmp.eq.f32.partialorder %v2563, inf
      %v2672 = vsel %vm2671, %v2563, %v2670
      %vm2673 = vcmp.eq.f32.partialorder %v2563, 0.0
      %v2674 = vand.u32 %v2563, 2147483648
      %v2675 = vsel %vm2673, %v2674, %v2672
      %v2676 = vmax.f32 %v2570, 1e-15
      %v2677 = vmax.f32 %v2577, 1e-15
      %v2678 = vmax.f32 %v2584, 1e-15
      %v2679 = vmax.f32 %v2591, 1e-15
      %v2680 = vmax.f32 %v2598, 1e-15
      %v2681 = vmax.f32 %v2605, 1e-15
      %v2682 = vmax.f32 %v2612, 1e-15
      %v2683 = vmax.f32 %v2619, 1e-15
      %v2684 = vmax.f32 %v2626, 1e-15
      %v2685 = vmax.f32 %v2633, 1e-15
      %v2686 = vmax.f32 %v2640, 1e-15
      %v2687 = vmax.f32 %v2647, 1e-15
      %v2688 = vmax.f32 %v2654, 1e-15
      %v2689 = vmax.f32 %v2661, 1e-15
      %v2690 = vmax.f32 %v2668, 1e-15
      %v2691 = vmax.f32 %v2675, 1e-15
      %v2692 = vtanh.pop %v2676
      %v2693 = vtanh.pop %v2677
      %v2694 = vtanh.pop %v2678
      %v2695 = vtanh.pop %v2679
      %v2696 = vtanh.pop %v2680
      %v2697 = vtanh.pop %v2681
      %v2698 = vtanh.pop %v2682
      %v2699 = vtanh.pop %v2683
      %v2700 = vtanh.pop %v2684
      %v2701 = vtanh.pop %v2685
      %v2702 = vtanh.pop %v2686
      %v2703 = vtanh.pop %v2687
      %v2704 = vtanh.pop %v2688
      %v2705 = vtanh.pop %v2689
      %v2706 = vtanh.pop %v2690
      %v2707 = vtanh.pop %v2691
      %v2708 = vmul.f32 %v2692, %v2484
      %v2709 = vmul.f32 %v2693, %v2485
      %v2710 = vmul.f32 %v2694, %v2486
      %v2711 = vmul.f32 %v2695, %v2487
      %v2712 = vmul.f32 %v2696, %v2488
      %v2713 = vmul.f32 %v2697, %v2489
      %v2714 = vmul.f32 %v2698, %v2490
      %v2715 = vmul.f32 %v2699, %v2491
      %v2716 = vmul.f32 %v2700, %v2492
      %v2717 = vmul.f32 %v2701, %v2493
      %v2718 = vmul.f32 %v2702, %v2494
      %v2719 = vmul.f32 %v2703, %v2495
      %v2720 = vmul.f32 %v2704, %v2496
      %v2721 = vmul.f32 %v2705, %v2497
      %v2722 = vmul.f32 %v2706, %v2498
      %v2723 = vmul.f32 %v2707, %v2499
      %v2724 = vrcp.pop %v2676
      %v2725 = vmul.f32 %v2708, %v2724
      %v2726 = vrcp.pop %v2677
      %v2727 = vmul.f32 %v2709, %v2726
      %v2728 = vrcp.pop %v2678
      %v2729 = vmul.f32 %v2710, %v2728
      %v2730 = vrcp.pop %v2679
      %v2731 = vmul.f32 %v2711, %v2730
      %v2732 = vrcp.pop %v2680
      %v2733 = vmul.f32 %v2712, %v2732
      %v2734 = vrcp.pop %v2681
      %v2735 = vmul.f32 %v2713, %v2734
      %v2736 = vrcp.pop %v2682
      %v2737 = vmul.f32 %v2714, %v2736
      %v2738 = vrcp.pop %v2683
      %v2739 = vmul.f32 %v2715, %v2738
      %v2740 = vrcp.pop %v2684
      %v2741 = vmul.f32 %v2716, %v2740
      %v2742 = vrcp.pop %v2685
      %v2743 = vmul.f32 %v2717, %v2742
      %v2744 = vrcp.pop %v2686
      %v2745 = vmul.f32 %v2718, %v2744
      %v2746 = vrcp.pop %v2687
      %v2747 = vmul.f32 %v2719, %v2746
      %v2748 = vrcp.pop %v2688
      %v2749 = vmul.f32 %v2720, %v2748
      %v2750 = vrcp.pop %v2689
      %v2751 = vmul.f32 %v2721, %v2750
      %v2752 = vrcp.pop %v2690
      %v2753 = vmul.f32 %v2722, %v2752
      %v2754 = vrcp.pop %v2691
      %v2755 = vmul.f32 %v2723, %v2754
      %v2756 = vmul.f32 %v2725, %v2725
      %v2757 = vmul.f32 %v2727, %v2727
      %v2758 = vmul.f32 %v2729, %v2729
      %v2759 = vmul.f32 %v2731, %v2731
      %v2760 = vmul.f32 %v2733, %v2733
      %v2761 = vmul.f32 %v2735, %v2735
      %v2762 = vmul.f32 %v2737, %v2737
      %v2763 = vmul.f32 %v2739, %v2739
      %v2764 = vmul.f32 %v2741, %v2741
      %v2765 = vmul.f32 %v2743, %v2743
      %v2766 = vmul.f32 %v2745, %v2745
      %v2767 = vmul.f32 %v2747, %v2747
      %v2768 = vmul.f32 %v2749, %v2749
      %v2769 = vmul.f32 %v2751, %v2751
      %v2770 = vmul.f32 %v2753, %v2753
      %v2771 = vmul.f32 %v2755, %v2755
      %v2772 = vsel %vm210, %v2756, 0.0
      %2773 = vadd.xlane.f32.xlu0 %v2772
      %v2774 = vpop.xlane.xlu0 %2773
      %v2775 = vsel %vm210, %v2757, 0.0
      %2776 = vadd.xlane.f32.xlu0 %v2775
      %v2777 = vpop.xlane.xlu0 %2776
      %v2778 = vsel %vm210, %v2758, 0.0
      %2779 = vadd.xlane.f32.xlu0 %v2778
      %v2780 = vpop.xlane.xlu0 %2779
      %v2781 = vsel %vm210, %v2759, 0.0
      %2782 = vadd.xlane.f32.xlu0 %v2781
      %v2783 = vpop.xlane.xlu0 %2782
      %v2784 = vsel %vm210, %v2760, 0.0
      %2785 = vadd.xlane.f32.xlu0 %v2784
      %v2786 = vpop.xlane.xlu0 %2785
      %v2787 = vsel %vm210, %v2761, 0.0
      %2788 = vadd.xlane.f32.xlu0 %v2787
      %v2789 = vpop.xlane.xlu0 %2788
      %v2790 = vsel %vm210, %v2762, 0.0
      %2791 = vadd.xlane.f32.xlu0 %v2790
      %v2792 = vpop.xlane.xlu0 %2791
      %v2793 = vsel %vm210, %v2763, 0.0
      %2794 = vadd.xlane.f32.xlu0 %v2793
      %v2795 = vpop.xlane.xlu0 %2794
      %v2796 = vsel %vm210, %v2764, 0.0
      %2797 = vadd.xlane.f32.xlu0 %v2796
      %v2798 = vpop.xlane.xlu0 %2797
      %v2799 = vsel %vm210, %v2765, 0.0
      %2800 = vadd.xlane.f32.xlu0 %v2799
      %v2801 = vpop.xlane.xlu0 %2800
      %v2802 = vsel %vm210, %v2766, 0.0
      %2803 = vadd.xlane.f32.xlu0 %v2802
      %v2804 = vpop.xlane.xlu0 %2803
      %v2805 = vsel %vm210, %v2767, 0.0
      %2806 = vadd.xlane.f32.xlu0 %v2805
      %v2807 = vpop.xlane.xlu0 %2806
      %v2808 = vsel %vm210, %v2768, 0.0
      %2809 = vadd.xlane.f32.xlu0 %v2808
      %v2810 = vpop.xlane.xlu0 %2809
      %v2811 = vsel %vm210, %v2769, 0.0
      %2812 = vadd.xlane.f32.xlu0 %v2811
      %v2813 = vpop.xlane.xlu0 %2812
      %v2814 = vsel %vm210, %v2770, 0.0
      %2815 = vadd.xlane.f32.xlu0 %v2814
      %v2816 = vpop.xlane.xlu0 %2815
      %v2817 = vsel %vm210, %v2771, 0.0
      %2818 = vadd.xlane.f32.xlu0 %v2817
      %v2819 = vpop.xlane.xlu0 %2818
      %v2820 = vrsqrt.pop %v2774
      %v2821 = vmul.f32 %v2774, %v2820
      %vm2822 = vcmp.eq.f32.partialorder %v2774, inf
      %v2823 = vsel %vm2822, %v2774, %v2821
      %vm2824 = vcmp.eq.f32.partialorder %v2774, 0.0
      %v2825 = vand.u32 %v2774, 2147483648
      %v2826 = vsel %vm2824, %v2825, %v2823
      %v2827 = vrsqrt.pop %v2777
      %v2828 = vmul.f32 %v2777, %v2827
      %vm2829 = vcmp.eq.f32.partialorder %v2777, inf
      %v2830 = vsel %vm2829, %v2777, %v2828
      %vm2831 = vcmp.eq.f32.partialorder %v2777, 0.0
      %v2832 = vand.u32 %v2777, 2147483648
      %v2833 = vsel %vm2831, %v2832, %v2830
      %v2834 = vrsqrt.pop %v2780
      %v2835 = vmul.f32 %v2780, %v2834
      %vm2836 = vcmp.eq.f32.partialorder %v2780, inf
      %v2837 = vsel %vm2836, %v2780, %v2835
      %vm2838 = vcmp.eq.f32.partialorder %v2780, 0.0
      %v2839 = vand.u32 %v2780, 2147483648
      %v2840 = vsel %vm2838, %v2839, %v2837
      %v2841 = vrsqrt.pop %v2783
      %v2842 = vmul.f32 %v2783, %v2841
      %vm2843 = vcmp.eq.f32.partialorder %v2783, inf
      %v2844 = vsel %vm2843, %v2783, %v2842
      %vm2845 = vcmp.eq.f32.partialorder %v2783, 0.0
      %v2846 = vand.u32 %v2783, 2147483648
      %v2847 = vsel %vm2845, %v2846, %v2844
      %v2848 = vrsqrt.pop %v2786
      %v2849 = vmul.f32 %v2786, %v2848
      %vm2850 = vcmp.eq.f32.partialorder %v2786, inf
      %v2851 = vsel %vm2850, %v2786, %v2849
      %vm2852 = vcmp.eq.f32.partialorder %v2786, 0.0
      %v2853 = vand.u32 %v2786, 2147483648
      %v2854 = vsel %vm2852, %v2853, %v2851
      %v2855 = vrsqrt.pop %v2789
      %v2856 = vmul.f32 %v2789, %v2855
      %vm2857 = vcmp.eq.f32.partialorder %v2789, inf
      %v2858 = vsel %vm2857, %v2789, %v2856
      %vm2859 = vcmp.eq.f32.partialorder %v2789, 0.0
      %v2860 = vand.u32 %v2789, 2147483648
      %v2861 = vsel %vm2859, %v2860, %v2858
      %v2862 = vrsqrt.pop %v2792
      %v2863 = vmul.f32 %v2792, %v2862
      %vm2864 = vcmp.eq.f32.partialorder %v2792, inf
      %v2865 = vsel %vm2864, %v2792, %v2863
      %vm2866 = vcmp.eq.f32.partialorder %v2792, 0.0
      %v2867 = vand.u32 %v2792, 2147483648
      %v2868 = vsel %vm2866, %v2867, %v2865
      %v2869 = vrsqrt.pop %v2795
      %v2870 = vmul.f32 %v2795, %v2869
      %vm2871 = vcmp.eq.f32.partialorder %v2795, inf
      %v2872 = vsel %vm2871, %v2795, %v2870
      %vm2873 = vcmp.eq.f32.partialorder %v2795, 0.0
      %v2874 = vand.u32 %v2795, 2147483648
      %v2875 = vsel %vm2873, %v2874, %v2872
      %v2876 = vrsqrt.pop %v2798
      %v2877 = vmul.f32 %v2798, %v2876
      %vm2878 = vcmp.eq.f32.partialorder %v2798, inf
      %v2879 = vsel %vm2878, %v2798, %v2877
      %vm2880 = vcmp.eq.f32.partialorder %v2798, 0.0
      %v2881 = vand.u32 %v2798, 2147483648
      %v2882 = vsel %vm2880, %v2881, %v2879
      %v2883 = vrsqrt.pop %v2801
      %v2884 = vmul.f32 %v2801, %v2883
      %vm2885 = vcmp.eq.f32.partialorder %v2801, inf
      %v2886 = vsel %vm2885, %v2801, %v2884
      %vm2887 = vcmp.eq.f32.partialorder %v2801, 0.0
      %v2888 = vand.u32 %v2801, 2147483648
      %v2889 = vsel %vm2887, %v2888, %v2886
      %v2890 = vrsqrt.pop %v2804
      %v2891 = vmul.f32 %v2804, %v2890
      %vm2892 = vcmp.eq.f32.partialorder %v2804, inf
      %v2893 = vsel %vm2892, %v2804, %v2891
      %vm2894 = vcmp.eq.f32.partialorder %v2804, 0.0
      %v2895 = vand.u32 %v2804, 2147483648
      %v2896 = vsel %vm2894, %v2895, %v2893
      %v2897 = vrsqrt.pop %v2807
      %v2898 = vmul.f32 %v2807, %v2897
      %vm2899 = vcmp.eq.f32.partialorder %v2807, inf
      %v2900 = vsel %vm2899, %v2807, %v2898
      %vm2901 = vcmp.eq.f32.partialorder %v2807, 0.0
      %v2902 = vand.u32 %v2807, 2147483648
      %v2903 = vsel %vm2901, %v2902, %v2900
      %v2904 = vrsqrt.pop %v2810
      %v2905 = vmul.f32 %v2810, %v2904
      %vm2906 = vcmp.eq.f32.partialorder %v2810, inf
      %v2907 = vsel %vm2906, %v2810, %v2905
      %vm2908 = vcmp.eq.f32.partialorder %v2810, 0.0
      %v2909 = vand.u32 %v2810, 2147483648
      %v2910 = vsel %vm2908, %v2909, %v2907
      %v2911 = vrsqrt.pop %v2813
      %v2912 = vmul.f32 %v2813, %v2911
      %vm2913 = vcmp.eq.f32.partialorder %v2813, inf
      %v2914 = vsel %vm2913, %v2813, %v2912
      %vm2915 = vcmp.eq.f32.partialorder %v2813, 0.0
      %v2916 = vand.u32 %v2813, 2147483648
      %v2917 = vsel %vm2915, %v2916, %v2914
      %v2918 = vrsqrt.pop %v2816
      %v2919 = vmul.f32 %v2816, %v2918
      %vm2920 = vcmp.eq.f32.partialorder %v2816, inf
      %v2921 = vsel %vm2920, %v2816, %v2919
      %vm2922 = vcmp.eq.f32.partialorder %v2816, 0.0
      %v2923 = vand.u32 %v2816, 2147483648
      %v2924 = vsel %vm2922, %v2923, %v2921
      %v2925 = vrsqrt.pop %v2819
      %v2926 = vmul.f32 %v2819, %v2925
      %vm2927 = vcmp.eq.f32.partialorder %v2819, inf
      %v2928 = vsel %vm2927, %v2819, %v2926
      %vm2929 = vcmp.eq.f32.partialorder %v2819, 0.0
      %v2930 = vand.u32 %v2819, 2147483648
      %v2931 = vsel %vm2929, %v2930, %v2928
      %v2932 = vmax.f32 %v2826, 1e-15
      %v2933 = vmax.f32 %v2833, 1e-15
      %v2934 = vmax.f32 %v2840, 1e-15
      %v2935 = vmax.f32 %v2847, 1e-15
      %v2936 = vmax.f32 %v2854, 1e-15
      %v2937 = vmax.f32 %v2861, 1e-15
      %v2938 = vmax.f32 %v2868, 1e-15
      %v2939 = vmax.f32 %v2875, 1e-15
      %v2940 = vmax.f32 %v2882, 1e-15
      %v2941 = vmax.f32 %v2889, 1e-15
      %v2942 = vmax.f32 %v2896, 1e-15
      %v2943 = vmax.f32 %v2903, 1e-15
      %v2944 = vmax.f32 %v2910, 1e-15
      %v2945 = vmax.f32 %v2917, 1e-15
      %v2946 = vmax.f32 %v2924, 1e-15
      %v2947 = vmax.f32 %v2931, 1e-15
      %vm2948 = vcmp.gt.f32.partialorder %v2932, 0.996
      %vm2949 = vcmp.gt.f32.partialorder %v2933, 0.996
      %vm2950 = vcmp.gt.f32.partialorder %v2934, 0.996
      %vm2951 = vcmp.gt.f32.partialorder %v2935, 0.996
      %vm2952 = vcmp.gt.f32.partialorder %v2936, 0.996
      %vm2953 = vcmp.gt.f32.partialorder %v2937, 0.996
      %vm2954 = vcmp.gt.f32.partialorder %v2938, 0.996
      %vm2955 = vcmp.gt.f32.partialorder %v2939, 0.996
      %vm2956 = vcmp.gt.f32.partialorder %v2940, 0.996
      %vm2957 = vcmp.gt.f32.partialorder %v2941, 0.996
      %vm2958 = vcmp.gt.f32.partialorder %v2942, 0.996
      %vm2959 = vcmp.gt.f32.partialorder %v2943, 0.996
      %vm2960 = vcmp.gt.f32.partialorder %v2944, 0.996
      %vm2961 = vcmp.gt.f32.partialorder %v2945, 0.996
      %vm2962 = vcmp.gt.f32.partialorder %v2946, 0.996
      %vm2963 = vcmp.gt.f32.partialorder %v2947, 0.996
      %v2964 = vrcp.pop %v2932
      %v2965 = vmul.f32 0.996, %v2964
      %v2966 = vrcp.pop %v2933
      %v2967 = vmul.f32 0.996, %v2966
      %v2968 = vrcp.pop %v2934
      %v2969 = vmul.f32 0.996, %v2968
      %v2970 = vrcp.pop %v2935
      %v2971 = vmul.f32 0.996, %v2970
      %v2972 = vrcp.pop %v2936
      %v2973 = vmul.f32 0.996, %v2972
      %v2974 = vrcp.pop %v2937
      %v2975 = vmul.f32 0.996, %v2974
      %v2976 = vrcp.pop %v2938
      %v2977 = vmul.f32 0.996, %v2976
      %v2978 = vrcp.pop %v2939
      %v2979 = vmul.f32 0.996, %v2978
      %v2980 = vrcp.pop %v2940
      %v2981 = vmul.f32 0.996, %v2980
      %v2982 = vrcp.pop %v2941
      %v2983 = vmul.f32 0.996, %v2982
      %v2984 = vrcp.pop %v2942
      %v2985 = vmul.f32 0.996, %v2984
      %v2986 = vrcp.pop %v2943
      %v2987 = vmul.f32 0.996, %v2986
      %v2988 = vrcp.pop %v2944
      %v2989 = vmul.f32 0.996, %v2988
      %v2990 = vrcp.pop %v2945
      %v2991 = vmul.f32 0.996, %v2990
      %v2992 = vrcp.pop %v2946
      %v2993 = vmul.f32 0.996, %v2992
      %v2994 = vrcp.pop %v2947
      %v2995 = vmul.f32 0.996, %v2994
      %v2996 = vmul.f32 %v2725, %v2965
      %v2997 = vmul.f32 %v2727, %v2967
      %v2998 = vmul.f32 %v2729, %v2969
      %v2999 = vmul.f32 %v2731, %v2971
      %v3000 = vmul.f32 %v2733, %v2973
      %v3001 = vmul.f32 %v2735, %v2975
      %v3002 = vmul.f32 %v2737, %v2977
      %v3003 = vmul.f32 %v2739, %v2979
      %v3004 = vmul.f32 %v2741, %v2981
      %v3005 = vmul.f32 %v2743, %v2983
      %v3006 = vmul.f32 %v2745, %v2985
      %v3007 = vmul.f32 %v2747, %v2987
      %v3008 = vmul.f32 %v2749, %v2989
      %v3009 = vmul.f32 %v2751, %v2991
      %v3010 = vmul.f32 %v2753, %v2993
      %v3011 = vmul.f32 %v2755, %v2995
      %v3012 = vsel %vm2948, 1, 0
      %v3013 = vsel %vm2949, 1, 0
      %v3014 = vsel %vm2950, 1, 0
      %v3015 = vsel %vm2951, 1, 0
      %v3016 = vsel %vm2952, 1, 0
      %v3017 = vsel %vm2953, 1, 0
      %v3018 = vsel %vm2954, 1, 0
      %v3019 = vsel %vm2955, 1, 0
      %v3020 = vsel %vm2956, 1, 0
      %v3021 = vsel %vm2957, 1, 0
      %v3022 = vsel %vm2958, 1, 0
      %v3023 = vsel %vm2959, 1, 0
      %v3024 = vsel %vm2960, 1, 0
      %v3025 = vsel %vm2961, 1, 0
      %v3026 = vsel %vm2962, 1, 0
      %v3027 = vsel %vm2963, 1, 0
      %vm3028 = vcmp.eq.s32.totalorder %v3012, 1
      %vm3029 = vcmp.eq.s32.totalorder %v3013, 1
      %vm3030 = vcmp.eq.s32.totalorder %v3014, 1
      %vm3031 = vcmp.eq.s32.totalorder %v3015, 1
      %vm3032 = vcmp.eq.s32.totalorder %v3016, 1
      %vm3033 = vcmp.eq.s32.totalorder %v3017, 1
      %vm3034 = vcmp.eq.s32.totalorder %v3018, 1
      %vm3035 = vcmp.eq.s32.totalorder %v3019, 1
      %vm3036 = vcmp.eq.s32.totalorder %v3020, 1
      %vm3037 = vcmp.eq.s32.totalorder %v3021, 1
      %vm3038 = vcmp.eq.s32.totalorder %v3022, 1
      %vm3039 = vcmp.eq.s32.totalorder %v3023, 1
      %vm3040 = vcmp.eq.s32.totalorder %v3024, 1
      %vm3041 = vcmp.eq.s32.totalorder %v3025, 1
      %vm3042 = vcmp.eq.s32.totalorder %v3026, 1
      %vm3043 = vcmp.eq.s32.totalorder %v3027, 1
      %v3044 = vsel %vm3028, %v2996, %v2725
      %v3045 = vsel %vm3029, %v2997, %v2727
      %v3046 = vsel %vm3030, %v2998, %v2729
      %v3047 = vsel %vm3031, %v2999, %v2731
      %v3048 = vsel %vm3032, %v3000, %v2733
      %v3049 = vsel %vm3033, %v3001, %v2735
      %v3050 = vsel %vm3034, %v3002, %v2737
      %v3051 = vsel %vm3035, %v3003, %v2739
      %v3052 = vsel %vm3036, %v3004, %v2741
      %v3053 = vsel %vm3037, %v3005, %v2743
      %v3054 = vsel %vm3038, %v3006, %v2745
      %v3055 = vsel %vm3039, %v3007, %v2747
      %v3056 = vsel %vm3040, %v3008, %v2749
      %v3057 = vsel %vm3041, %v3009, %v2751
      %v3058 = vsel %vm3042, %v3010, %v2753
      %v3059 = vsel %vm3043, %v3011, %v2755
      %3060 = vst.msk [vmem:[%s172] sm:$0xff] %vm210, %v3044
      %3061 = vst.msk [vmem:[%s172 + $0x8] sm:$0xff] %vm210, %v3045
      %3062 = vst.msk [vmem:[%s172 + $0x10] sm:$0xff] %vm210, %v3046
      %3063 = vst.msk [vmem:[%s172 + $0x18] sm:$0xff] %vm210, %v3047
      %3064 = vst.msk [vmem:[%s172 + $0x20] sm:$0xff] %vm210, %v3048
      %3065 = vst.msk [vmem:[%s172 + $0x28] sm:$0xff] %vm210, %v3049
      %3066 = vst.msk [vmem:[%s172 + $0x30] sm:$0xff] %vm210, %v3050
      %3067 = vst.msk [vmem:[%s172 + $0x38] sm:$0xff] %vm210, %v3051
      %3068 = vst.msk [vmem:[%s172 + $0x40] sm:$0xff] %vm210, %v3052
      %3069 = vst.msk [vmem:[%s172 + $0x48] sm:$0xff] %vm210, %v3053
      %3070 = vst.msk [vmem:[%s172 + $0x50] sm:$0xff] %vm210, %v3054
      %3071 = vst.msk [vmem:[%s172 + $0x58] sm:$0xff] %vm210, %v3055
      %3072 = vst.msk [vmem:[%s172 + $0x60] sm:$0xff] %vm210, %v3056
      %3073 = vst.msk [vmem:[%s172 + $0x68] sm:$0xff] %vm210, %v3057
      %3074 = vst.msk [vmem:[%s172 + $0x70] sm:$0xff] %vm210, %v3058
      %3075 = vst.msk [vmem:[%s172 + $0x78] sm:$0xff] %vm210, %v3059
      %s3076 = smul.u32 16, %s14
      %p3077 = scmp.lt.s32.totalorder %s3076, 31
      %s3078 = scalar_select %p3077, %s3076, 31
      %s3079 = smul.addr %s3078, 8
      %s3080 = scalar_lea.vmem %s3, %s3079
      // Predicated region
      $region33: #{tpu_custom_call.1} parent=31 // pred_check
        %p3081 = pneg %p100
      $region34: #{tpu_custom_call.1} parent=31 // pred_check_branch
        %3083 = sbr.rel (%p3081) target = $region36
      $region35: #{tpu_custom_call.1} parent=31 // pred_region
        %s3084 = smul.u32 16, %s14
      $region36: #{tpu_custom_call.1} parent=31 // pred_fallthru
        _
    $region32: #{tpu_custom_call.1} parent=5 // pred_fallthru
      _
    %p3085 = scmp.le.s32.totalorder 2, %s9
    // Predicated region
    $region37: #{tpu_custom_call.1} parent=5 // pred_check
      %p3086 = pneg %p3085
    $region38: #{tpu_custom_call.1} parent=5 // pred_check_branch
      %3088 = sbr.rel (%p3086) target = $region40
    $region39: #{tpu_custom_call.1} parent=5 // pred_region
      %s3089 = ssub.s32 %s9, 2
      // Predicated region
      $region41: #{tpu_custom_call.1} parent=39 // pred_check
        %p3090 = pneg %p106
      $region42: #{tpu_custom_call.1} parent=39 // pred_check_branch
        %3092 = sbr.rel (%p3090) target = $region44
      $region43: #{tpu_custom_call.1} parent=39 // pred_region
        %s3093 = smul.u32 16, %s15
        %p3094 = scmp.lt.s32.totalorder %s3093, 31
        %s3095 = scalar_select %p3094, %s3093, 31
        %s3096 = smul.addr %s3095, 8
        %s3097 = scalar_lea.vmem %s3, %s3096
      $region44: #{tpu_custom_call.1} parent=39 // pred_fallthru
        _
    $region40: #{tpu_custom_call.1} parent=5 // pred_fallthru
      _
  $region6: #{tpu_custom_call.1} parent=0 // loop_footer
    %s13 = sadd.s32 1, %s9
  $region7: #{tpu_custom_call.1} parent=0 // loop_footer_branch
    %8 = sbr.rel target = $region3
  $region8: #{tpu_custom_call.1} parent=0 // loop_exit
    _

</llo_original>
